<compile_context>
chip_gen: v7x
topology: tpu7x:2x2x1
jax: 0.10.0
libtpu: 0.0.40
codegen_flags: <defaults>
</compile_context>

<pallas_src>
import numpy as np

import jax
import jax.numpy as jnp
from jax.experimental import pallas as pl
from jax.experimental.pallas import tpu as pltpu

N_EMB = 256
HIDDEN = 4 * N_EMB            # 1024
DROPOUT_P = 0.35
# keep an element iff its uint32 random bits >= p * 2^32  ->  P(keep) = 1 - p
# (numpy scalars so they lower as jaxpr literals, not captured device consts)
_DROP_THRESHOLD = np.uint32(int(round(DROPOUT_P * (2 ** 32))))
_KEEP_SCALE = np.float32(1.0 / (1.0 - DROPOUT_P))


def _round_up(x, m):
    return ((x + m - 1) // m) * m


def _ffwd_body(x_ref, w1_ref, b1_ref, w2_ref, b2_ref):
    """fc1 + ReLU + fc2, bf16 MXU operands, f32 accumulation."""
    h = jnp.dot(x_ref[...], w1_ref[...], preferred_element_type=jnp.float32)
    h = jnp.maximum(h + b1_ref[...], 0.0)
    y = jnp.dot(h.astype(jnp.bfloat16), w2_ref[...],
                preferred_element_type=jnp.float32)
    return y + b2_ref[...]


def _apply_dropout(y, bits):
    """Inverted dropout from raw 32-bit random bits."""
    if bits.dtype != jnp.uint32:
        bits = pltpu.bitcast(bits, jnp.uint32)
    keep = bits >= _DROP_THRESHOLD
    return jnp.where(keep, y, 0.0) * _KEEP_SCALE


def _ffwd_kernel_eval(x_ref, w1_ref, b1_ref, w2_ref, b2_ref, o_ref):
    o_ref[...] = _ffwd_body(x_ref, w1_ref, b1_ref, w2_ref, b2_ref).astype(
        o_ref.dtype)


def _ffwd_kernel_train_prng(seed_ref, x_ref, w1_ref, b1_ref, w2_ref, b2_ref,
                            o_ref):
    # Independent stream per row tile: seed with (global seed, tile index).
    pltpu.prng_seed(seed_ref[0], pl.program_id(0))
    y = _ffwd_body(x_ref, w1_ref, b1_ref, w2_ref, b2_ref)
    bits = pltpu.prng_random_bits(y.shape)
    o_ref[...] = _apply_dropout(y, bits).astype(o_ref.dtype)


def _ffwd_kernel_train_bits(bits_ref, x_ref, w1_ref, b1_ref, w2_ref, b2_ref,
                            o_ref):
    y = _ffwd_body(x_ref, w1_ref, b1_ref, w2_ref, b2_ref)
    o_ref[...] = _apply_dropout(y, bits_ref[...]).astype(o_ref.dtype)


def feed_forward(x, w1, b1, w2, b2, *, key=None, training=True, tile_m=2048,
                 use_kernel_prng=None):
    """x: (B, T, N_EMB) float32 -> (B, T, N_EMB) float32.

    w1: (N_EMB, HIDDEN), b1: (HIDDEN,), w2: (HIDDEN, N_EMB), b2: (N_EMB,)
    (weights stored transposed w.r.t. PyTorch, i.e. (in_features, out_features)).
    """
    B, T, C = x.shape
    assert C == N_EMB
    M = B * T
    # bf16 activations into the kernel: the MXU consumes bf16 anyway, so
    # streaming f32 x would be wasted HBM bandwidth.
    x2d = x.reshape(M, C).astype(jnp.bfloat16)

    # Row tile: multiple of 16 (bf16 sublane packing), capped by problem size.
    tile_m = max(16, min(tile_m, _round_up(M, 16)))
    tile_m = _round_up(tile_m, 16)
    num_tiles = pl.cdiv(M, tile_m)
    # v7x has 2 TensorCores; the "parallel" grid axis only shards if there are
    # at least 2 steps, so split a single mega-tile when there is enough work.
    if num_tiles == 1 and M >= 1024:
        tile_m = _round_up(pl.cdiv(M, 2), 16)
        num_tiles = pl.cdiv(M, tile_m)

    # Weights resident in VMEM (constant index_map), stored bf16 to halve DMA.
    w1_b = w1.astype(jnp.bfloat16)
    w2_b = w2.astype(jnp.bfloat16)
    b1_2d = b1.reshape(1, HIDDEN).astype(jnp.float32)
    b2_2d = b2.reshape(1, N_EMB).astype(jnp.float32)

    x_spec = pl.BlockSpec((tile_m, N_EMB), lambda i: (i, 0))
    w1_spec = pl.BlockSpec((N_EMB, HIDDEN), lambda i: (0, 0))
    b1_spec = pl.BlockSpec((1, HIDDEN), lambda i: (0, 0))
    w2_spec = pl.BlockSpec((HIDDEN, N_EMB), lambda i: (0, 0))
    b2_spec = pl.BlockSpec((1, N_EMB), lambda i: (0, 0))
    out_spec = pl.BlockSpec((tile_m, N_EMB), lambda i: (i, 0))

    extra_bytes = 0
    if training:
        if key is None:
            key = jax.random.PRNGKey(0)
        if use_kernel_prng is None:
            # Hardware PRNG path on real TPUs; streamed bits otherwise.
            use_kernel_prng = jax.devices()[0].platform == "tpu"
        if use_kernel_prng:
            seed = jax.random.randint(key, (1,), 0, 2 ** 31 - 1,
                                      dtype=jnp.int32)
            kernel = _ffwd_kernel_train_prng
            in_specs = [pl.BlockSpec(memory_space=pltpu.SMEM),  # scalar seed
                        x_spec, w1_spec, b1_spec, w2_spec, b2_spec]
            args = (seed, x2d, w1_b, b1_2d, w2_b, b2_2d)
        else:
            # Fallback: stream per-element random bits (interpret-mode safe).
            rand_bits = jax.random.bits(key, (M, N_EMB), jnp.uint32)
            bits_spec = pl.BlockSpec((tile_m, N_EMB), lambda i: (i, 0))
            kernel = _ffwd_kernel_train_bits
            in_specs = [bits_spec, x_spec, w1_spec, b1_spec, w2_spec, b2_spec]
            args = (rand_bits, x2d, w1_b, b1_2d, w2_b, b2_2d)
            extra_bytes = M * N_EMB * 4
    else:
        kernel = _ffwd_kernel_eval
        in_specs = [x_spec, w1_spec, b1_spec, w2_spec, b2_spec]
        args = (x2d, w1_b, b1_2d, w2_b, b2_2d)

    flops = 4 * M * N_EMB * HIDDEN                         # two matmuls
    bytes_accessed = (M * N_EMB * 2                        # x (bf16)
                      + M * N_EMB * 4                      # out (f32)
                      + (N_EMB * HIDDEN + HIDDEN * N_EMB) * 2   # bf16 weights
                      + (HIDDEN + N_EMB) * 4               # biases
                      + extra_bytes)

    out2d = pl.pallas_call(
        kernel,
        out_shape=jax.ShapeDtypeStruct((M, N_EMB), jnp.float32),
        grid=(num_tiles,),
        in_specs=in_specs,
        out_specs=out_spec,
        compiler_params=pltpu.CompilerParams(
            dimension_semantics=("parallel",),   # row tiles are independent
            vmem_limit_bytes=48 * 1024 * 1024,
        ),
        cost_estimate=pl.CostEstimate(
            flops=flops, transcendentals=0, bytes_accessed=bytes_accessed),
    )(*args)

    return out2d.reshape(B, T, N_EMB)


def init_params(key):
    """Deterministic init mimicking torch.nn.Linear (U(-1/sqrt(in), 1/sqrt(in))).
    Weights stored as (in_features, out_features)."""
    k1, k2, k3, k4 = jax.random.split(key, 4)
    bound1 = 1.0 / jnp.sqrt(N_EMB)
    bound2 = 1.0 / jnp.sqrt(HIDDEN)
    w1 = jax.random.uniform(k1, (N_EMB, HIDDEN), jnp.float32, -bound1, bound1)
    b1 = jax.random.uniform(k2, (HIDDEN,), jnp.float32, -bound1, bound1)
    w2 = jax.random.uniform(k3, (HIDDEN, N_EMB), jnp.float32, -bound2, bound2)
    b2 = jax.random.uniform(k4, (N_EMB,), jnp.float32, -bound2, bound2)
    return w1, b1, w2, b2


if __name__ == "__main__":
    key = jax.random.PRNGKey(0)
    kx, kp, kd = jax.random.split(key, 3)

    B, T = 2, 8                                    # small batch / seq
    x = jax.random.normal(kx, (B, T, N_EMB), jnp.float32)
    w1, b1, w2, b2 = init_params(kp)

    # Training pass (dropout active).  If the in-kernel TPU PRNG primitive is
    # unavailable in this execution environment, retry with streamed bits.
    try:
        out = jax.block_until_ready(
            feed_forward(x, w1, b1, w2, b2, key=kd, training=True))
    except Exception:
        out = jax.block_until_ready(
            feed_forward(x, w1, b1, w2, b2, key=kd, training=True,
                         use_kernel_prng=False))
    assert out.shape == (B, T, N_EMB)

    # Eval pass (deterministic) vs. a pure-JAX reference using the same
    # bf16-operand / f32-accumulate recipe.
    out_eval = jax.block_until_ready(
        feed_forward(x, w1, b1, w2, b2, training=False))
    x2d = x.reshape(-1, N_EMB).astype(jnp.bfloat16)
    h_ref = jnp.dot(x2d, w1.astype(jnp.bfloat16),
                    preferred_element_type=jnp.float32) + b1
    h_ref = jnp.maximum(h_ref, 0.0)
    ref = jnp.dot(h_ref.astype(jnp.bfloat16), w2.astype(jnp.bfloat16),
                  preferred_element_type=jnp.float32) + b2
    assert jnp.allclose(out_eval.reshape(-1, N_EMB), ref, atol=1e-2, rtol=1e-2)

    # Dropout sanity: kept entries equal eval output scaled by 1/(1-p), the
    # rest are zero; drop fraction is roughly p.
    out_flat = out.reshape(-1)
    eval_flat = out_eval.reshape(-1)
    kept = out_flat != 0.0
    expected = jnp.where(kept, eval_flat * (1.0 / (1.0 - DROPOUT_P)), 0.0)
    assert jnp.allclose(out_flat, expected, atol=1e-4, rtol=1e-4)
    drop_frac = 1.0 - jnp.mean(kept.astype(jnp.float32))
    assert 0.15 < float(drop_frac) < 0.55

    print("KERNEL_OK")
</pallas_src>

<mosaic_0001>
module attributes {stable_mosaic.version = 11 : i64} {
  func.func @_ffwd_kernel_train_bits(%arg0: i32, %arg1: memref<16x256xi32, #tpu.memory_space<vmem>>, %arg2: memref<16x256xbf16, #tpu.memory_space<vmem>>, %arg3: memref<256x1024xbf16, #tpu.memory_space<vmem>>, %arg4: memref<1x1024xf32, #tpu.memory_space<vmem>>, %arg5: memref<1024x256xbf16, #tpu.memory_space<vmem>>, %arg6: memref<1x256xf32, #tpu.memory_space<vmem>>, %arg7: memref<16x256xf32, #tpu.memory_space<vmem>>) attributes {dimension_semantics = [#tpu.dimension_semantics<parallel>], iteration_bounds = array<i64: 1>, scalar_prefetch = 0 : i64, scratch_operands = 0 : i64, tpu.core_type = #tpu.core_type<tc>, window_params = [{transform_indices = @transform_0, window_bounds = array<i64: 16, 256>}, {transform_indices = @transform_1, window_bounds = array<i64: 16, 256>}, {pipeline_mode = #tpu.pipeline_mode<synchronous>, transform_indices = @transform_2, window_bounds = array<i64: 256, 1024>}, {pipeline_mode = #tpu.pipeline_mode<synchronous>, transform_indices = @transform_3, window_bounds = array<i64: 1, 1024>}, {pipeline_mode = #tpu.pipeline_mode<synchronous>, transform_indices = @transform_4, window_bounds = array<i64: 1024, 256>}, {pipeline_mode = #tpu.pipeline_mode<synchronous>, transform_indices = @transform_5, window_bounds = array<i64: 1, 256>}, {transform_indices = @transform_6, window_bounds = array<i64: 16, 256>}]} {
    %c0 = arith.constant 0 : index
    %c0_0 = arith.constant 0 : index
    %0 = vector.load %arg2[%c0, %c0_0] : memref<16x256xbf16, #tpu.memory_space<vmem>>, vector<16x256xbf16>
    %c0_1 = arith.constant 0 : index
    %c0_2 = arith.constant 0 : index
    %1 = vector.load %arg3[%c0_1, %c0_2] : memref<256x1024xbf16, #tpu.memory_space<vmem>>, vector<256x1024xbf16>
    %cst = arith.constant dense<0.000000e+00> : vector<16x1024xf32>
    %2 = tpu.matmul %0, %1, %cst {dimension_numbers = #tpu.dot_dimension_numbers<[1], [0], [0], [1], [0, 0, 1, 1], [], []>} : vector<16x256xbf16>, vector<256x1024xbf16>, vector<16x1024xf32> -> vector<16x1024xf32>
    %c0_3 = arith.constant 0 : index
    %c0_4 = arith.constant 0 : index
    %3 = vector.load %arg4[%c0_3, %c0_4] : memref<1x1024xf32, #tpu.memory_space<vmem>>, vector<1x1024xf32>
    %4 = vector.broadcast %3 : vector<1x1024xf32> to vector<16x1024xf32>
    %5 = arith.addf %2, %4 : vector<16x1024xf32>
    %cst_5 = arith.constant 0.000000e+00 : f32
    %6 = vector.broadcast %cst_5 : f32 to vector<16x1024xf32>
    %7 = arith.maximumf %5, %6 : vector<16x1024xf32>
    %8 = arith.truncf %7 : vector<16x1024xf32> to vector<16x1024xbf16>
    %c0_6 = arith.constant 0 : index
    %c0_7 = arith.constant 0 : index
    %9 = vector.load %arg5[%c0_6, %c0_7] : memref<1024x256xbf16, #tpu.memory_space<vmem>>, vector<1024x256xbf16>
    %cst_8 = arith.constant dense<0.000000e+00> : vector<16x256xf32>
    %10 = tpu.matmul %8, %9, %cst_8 {dimension_numbers = #tpu.dot_dimension_numbers<[1], [0], [0], [1], [0, 0, 1, 1], [], []>} : vector<16x1024xbf16>, vector<1024x256xbf16>, vector<16x256xf32> -> vector<16x256xf32>
    %c0_9 = arith.constant 0 : index
    %c0_10 = arith.constant 0 : index
    %11 = vector.load %arg6[%c0_9, %c0_10] : memref<1x256xf32, #tpu.memory_space<vmem>>, vector<1x256xf32>
    %12 = vector.broadcast %11 : vector<1x256xf32> to vector<16x256xf32>
    %13 = arith.addf %10, %12 : vector<16x256xf32>
    %c0_11 = arith.constant 0 : index
    %c0_12 = arith.constant 0 : index
    %14 = vector.load %arg1[%c0_11, %c0_12] : memref<16x256xi32, #tpu.memory_space<vmem>>, vector<16x256xi32>
    %c1503238554_i32 = arith.constant 1503238554 : i32
    %15 = vector.broadcast %c1503238554_i32 : i32 to vector<16x256xi32>
    %16 = arith.cmpi uge, %14, %15 : vector<16x256xi32>
    %cst_13 = arith.constant 0.000000e+00 : f32
    %17 = vector.broadcast %cst_13 : f32 to vector<16x256xf32>
    %18 = arith.select %16, %13, %17 : vector<16x256xi1>, vector<16x256xf32>
    %cst_14 = arith.constant 1.53846157 : f32
    %19 = vector.broadcast %cst_14 : f32 to vector<16x256xf32>
    %20 = arith.mulf %18, %19 : vector<16x256xf32>
    %c0_15 = arith.constant 0 : index
    %c0_16 = arith.constant 0 : index
    %21 = vector.load %arg7[%c0_15, %c0_16] : memref<16x256xf32, #tpu.memory_space<vmem>>, vector<16x256xf32>
    tpu.vector_store %arg7[%c0_15, %c0_16], %20 {strides = array<i32>} : memref<16x256xf32, #tpu.memory_space<vmem>>, vector<16x256xf32>,
    return
  }
  func.func @transform_0(%arg0: i32) -> (i32, i32) {
    %c0_i32 = arith.constant 0 : i32
    %c0_i32_0 = arith.constant 0 : i32
    return %arg0, %c0_i32 : i32, i32
  }
  func.func @transform_1(%arg0: i32) -> (i32, i32) {
    %c0_i32 = arith.constant 0 : i32
    %c0_i32_0 = arith.constant 0 : i32
    return %arg0, %c0_i32 : i32, i32
  }
  func.func @transform_2(%arg0: i32) -> (i32, i32) {
    %c0_i32 = arith.constant 0 : i32
    %c0_i32_0 = arith.constant 0 : i32
    %c0_i32_1 = arith.constant 0 : i32
    return %c0_i32, %c0_i32_0 : i32, i32
  }
  func.func @transform_3(%arg0: i32) -> (i32, i32) {
    %c0_i32 = arith.constant 0 : i32
    %c0_i32_0 = arith.constant 0 : i32
    %c0_i32_1 = arith.constant 0 : i32
    return %c0_i32, %c0_i32_0 : i32, i32
  }
  func.func @transform_4(%arg0: i32) -> (i32, i32) {
    %c0_i32 = arith.constant 0 : i32
    %c0_i32_0 = arith.constant 0 : i32
    %c0_i32_1 = arith.constant 0 : i32
    return %c0_i32, %c0_i32_0 : i32, i32
  }
  func.func @transform_5(%arg0: i32) -> (i32, i32) {
    %c0_i32 = arith.constant 0 : i32
    %c0_i32_0 = arith.constant 0 : i32
    %c0_i32_1 = arith.constant 0 : i32
    return %c0_i32, %c0_i32_0 : i32, i32
  }
  func.func @transform_6(%arg0: i32) -> (i32, i32) {
    %c0_i32 = arith.constant 0 : i32
    %c0_i32_0 = arith.constant 0 : i32
    return %arg0, %c0_i32 : i32, i32
  }
}

module attributes {stable_mosaic.version = 11 : i64} {
  func.func @_ffwd_kernel_train_bits(%arg0: i32, %arg1: memref<16x256xi32, #tpu.memory_space<vmem>>, %arg2: memref<16x256xbf16, #tpu.memory_space<vmem>>, %arg3: memref<256x1024xbf16, #tpu.memory_space<vmem>>, %arg4: memref<1x1024xf32, #tpu.memory_space<vmem>>, %arg5: memref<1024x256xbf16, #tpu.memory_space<vmem>>, %arg6: memref<1x256xf32, #tpu.memory_space<vmem>>, %arg7: memref<16x256xf32, #tpu.memory_space<vmem>>) attributes {dimension_semantics = [#tpu.dimension_semantics<parallel>], iteration_bounds = array<i64: 1>, scalar_prefetch = 0 : i64, scratch_operands = 0 : i64, tpu.core_type = #tpu.core_type<tc>, window_params = [{transform_indices = @transform_0, window_bounds = array<i64: 16, 256>}, {transform_indices = @transform_1, window_bounds = array<i64: 16, 256>}, {pipeline_mode = #tpu.pipeline_mode<synchronous>, transform_indices = @transform_2, window_bounds = array<i64: 256, 1024>}, {pipeline_mode = #tpu.pipeline_mode<synchronous>, transform_indices = @transform_3, window_bounds = array<i64: 1, 1024>}, {pipeline_mode = #tpu.pipeline_mode<synchronous>, transform_indices = @transform_4, window_bounds = array<i64: 1024, 256>}, {pipeline_mode = #tpu.pipeline_mode<synchronous>, transform_indices = @transform_5, window_bounds = array<i64: 1, 256>}, {transform_indices = @transform_6, window_bounds = array<i64: 16, 256>}]} {
    %c0 = arith.constant 0 : index
    %c0_0 = arith.constant 0 : index
    %0 = vector.load %arg2[%c0, %c0_0] : memref<16x256xbf16, #tpu.memory_space<vmem>>, vector<16x256xbf16>
    %c0_1 = arith.constant 0 : index
    %c0_2 = arith.constant 0 : index
    %1 = vector.load %arg3[%c0_1, %c0_2] : memref<256x1024xbf16, #tpu.memory_space<vmem>>, vector<256x1024xbf16>
    %cst = arith.constant dense<0.000000e+00> : vector<16x1024xf32>
    %2 = tpu.matmul %0, %1, %cst {dimension_numbers = #tpu.dot_dimension_numbers<[1], [0], [0], [1], [0, 0, 1, 1], [], []>} : vector<16x256xbf16>, vector<256x1024xbf16>, vector<16x1024xf32> -> vector<16x1024xf32>
    %c0_3 = arith.constant 0 : index
    %c0_4 = arith.constant 0 : index
    %3 = vector.load %arg4[%c0_3, %c0_4] : memref<1x1024xf32, #tpu.memory_space<vmem>>, vector<1x1024xf32>
    %4 = vector.broadcast %3 : vector<1x1024xf32> to vector<16x1024xf32>
    %5 = arith.addf %2, %4 : vector<16x1024xf32>
    %cst_5 = arith.constant 0.000000e+00 : f32
    %6 = vector.broadcast %cst_5 : f32 to vector<16x1024xf32>
    %7 = arith.maximumf %5, %6 : vector<16x1024xf32>
    %8 = arith.truncf %7 : vector<16x1024xf32> to vector<16x1024xbf16>
    %c0_6 = arith.constant 0 : index
    %c0_7 = arith.constant 0 : index
    %9 = vector.load %arg5[%c0_6, %c0_7] : memref<1024x256xbf16, #tpu.memory_space<vmem>>, vector<1024x256xbf16>
    %cst_8 = arith.constant dense<0.000000e+00> : vector<16x256xf32>
    %10 = tpu.matmul %8, %9, %cst_8 {dimension_numbers = #tpu.dot_dimension_numbers<[1], [0], [0], [1], [0, 0, 1, 1], [], []>} : vector<16x1024xbf16>, vector<1024x256xbf16>, vector<16x256xf32> -> vector<16x256xf32>
    %c0_9 = arith.constant 0 : index
    %c0_10 = arith.constant 0 : index
    %11 = vector.load %arg6[%c0_9, %c0_10] : memref<1x256xf32, #tpu.memory_space<vmem>>, vector<1x256xf32>
    %12 = vector.broadcast %11 : vector<1x256xf32> to vector<16x256xf32>
    %13 = arith.addf %10, %12 : vector<16x256xf32>
    %c0_11 = arith.constant 0 : index
    %c0_12 = arith.constant 0 : index
    %14 = vector.load %arg1[%c0_11, %c0_12] : memref<16x256xi32, #tpu.memory_space<vmem>>, vector<16x256xi32>
    %c1503238554_i32 = arith.constant 1503238554 : i32
    %15 = vector.broadcast %c1503238554_i32 : i32 to vector<16x256xi32>
    %16 = arith.cmpi uge, %14, %15 : vector<16x256xi32>
    %cst_13 = arith.constant 0.000000e+00 : f32
    %17 = vector.broadcast %cst_13 : f32 to vector<16x256xf32>
    %18 = arith.select %16, %13, %17 : vector<16x256xi1>, vector<16x256xf32>
    %cst_14 = arith.constant 1.53846157 : f32
    %19 = vector.broadcast %cst_14 : f32 to vector<16x256xf32>
    %20 = arith.mulf %18, %19 : vector<16x256xf32>
    %c0_15 = arith.constant 0 : index
    %c0_16 = arith.constant 0 : index
    %21 = vector.load %arg7[%c0_15, %c0_16] : memref<16x256xf32, #tpu.memory_space<vmem>>, vector<16x256xf32>
    tpu.vector_store %arg7[%c0_15, %c0_16], %20 {strides = array<i32>} : memref<16x256xf32, #tpu.memory_space<vmem>>, vector<16x256xf32>,
    return
  }
  func.func @transform_0(%arg0: i32) -> (i32, i32) {
    %c0_i32 = arith.constant 0 : i32
    %c0_i32_0 = arith.constant 0 : i32
    return %arg0, %c0_i32 : i32, i32
  }
  func.func @transform_1(%arg0: i32) -> (i32, i32) {
    %c0_i32 = arith.constant 0 : i32
    %c0_i32_0 = arith.constant 0 : i32
    return %arg0, %c0_i32 : i32, i32
  }
  func.func @transform_2(%arg0: i32) -> (i32, i32) {
    %c0_i32 = arith.constant 0 : i32
    %c0_i32_0 = arith.constant 0 : i32
    %c0_i32_1 = arith.constant 0 : i32
    return %c0_i32, %c0_i32_0 : i32, i32
  }
  func.func @transform_3(%arg0: i32) -> (i32, i32) {
    %c0_i32 = arith.constant 0 : i32
    %c0_i32_0 = arith.constant 0 : i32
    %c0_i32_1 = arith.constant 0 : i32
    return %c0_i32, %c0_i32_0 : i32, i32
  }
  func.func @transform_4(%arg0: i32) -> (i32, i32) {
    %c0_i32 = arith.constant 0 : i32
    %c0_i32_0 = arith.constant 0 : i32
    %c0_i32_1 = arith.constant 0 : i32
    return %c0_i32, %c0_i32_0 : i32, i32
  }
  func.func @transform_5(%arg0: i32) -> (i32, i32) {
    %c0_i32 = arith.constant 0 : i32
    %c0_i32_0 = arith.constant 0 : i32
    %c0_i32_1 = arith.constant 0 : i32
    return %c0_i32, %c0_i32_0 : i32, i32
  }
  func.func @transform_6(%arg0: i32) -> (i32, i32) {
    %c0_i32 = arith.constant 0 : i32
    %c0_i32_0 = arith.constant 0 : i32
    return %arg0, %c0_i32 : i32, i32
  }
}

</mosaic_0001>

<llo_original>
// kernel: tpu_custom_call.1
$region0: #{tpu_custom_call.1}
  #allocation0 [shape = 'u32[]', space=smem, size = 0x4, offset = 0x4, fixed_abs, tag = 'smem constant byte address 0x4 - core index']
  #allocation1 [shape = 'u32[144,128]{1,0:T(1,128)}', space=vmem, size = 0x12000, scoped, tag = 'internal scratch']
  %s0 = inlined_call_operand.hbm [shape: u32[16,256], index: 0, kind: input, shape index: {}]
  %s1 = inlined_call_operand.hbm [shape: bf16[16,256], index: 1, kind: input, shape index: {}]
  %s2 = inlined_call_operand.hbm [shape: bf16[256,1024], index: 2, kind: input, shape index: {}]
  %s3 = inlined_call_operand.vmem [shape: f32[1,1024], index: 3, kind: input, shape index: {}]
  %s4 = inlined_call_operand.hbm [shape: bf16[1024,256], index: 4, kind: input, shape index: {}]
  %s5 = inlined_call_operand.vmem [shape: f32[1,256], index: 5, kind: input, shape index: {}]
  %s6 = inlined_call_operand.hbm [shape: f32[16,256], index: 6, kind: output, shape index: {}]
  %s7 = sld [smem:[#allocation0]]
  $region50: #{tpu_custom_call.1} parent=0
    _
  %s9 = ssub.s32 1, %s7
  %s10 = scalar_select 0, %s9, %s7
  $region1: #{tpu_custom_call.1} parent=0
    #allocation2 [shape = 'u8[16384]{0}', space=vmem, size = 0x4000, scoped, tag = 'input window, operand 0, single buffered']
    #allocation3 [shape = 's32[1]{0}', space=sflag, size = 0x4, scoped, tag = 'scoped memory for tpu_custom_call.1']
    #allocation4 [shape = 's32[1]{0}', space=sflag, size = 0x4, scoped, tag = 'scoped memory for tpu_custom_call.1']
    #allocation5 [shape = 'u8[8192]{0}', space=vmem, size = 0x2000, scoped, tag = 'input window, operand 1, single buffered']
    #allocation6 [shape = 's32[1]{0}', space=sflag, size = 0x4, scoped, tag = 'scoped memory for tpu_custom_call.1']
    #allocation7 [shape = 'u8[524288]{0}', space=vmem, size = 0x80000, scoped, tag = 'input window, operand 2, single buffered']
    #allocation8 [shape = 'u8[524288]{0}', space=vmem, size = 0x80000, scoped, tag = 'input window, operand 4, single buffered']
    #allocation9 [shape = 's32[1]{0}', space=sflag, size = 0x4, scoped, tag = 'scoped memory for tpu_custom_call.1']
    #allocation10 [shape = 'u8[16384]{0}', space=vmem, size = 0x4000, scoped, tag = 'output window, operand 0, single buffered']
    %11 = vsyncpa [#allocation3], 0
    %12 = vsyncpa [#allocation6], 0
    %13 = vsyncpa [#allocation9], 0
    %14 = vsyncpa [#allocation4], 0
    // Predicated region
    $region2: #{tpu_custom_call.1} parent=1 // pred_check
      _
    $region3: #{tpu_custom_call.1} parent=1 // pred_check_branch
      %16 = sbr.rel (0) target = $region5
    $region4: #{tpu_custom_call.1} parent=1 // pred_region
      %s18 = ssub.s32 512, 512
      %19 = vsyncadd [#allocation3], %s18
      %s20 = sshll.u32 [#allocation2], 4
      %s21 = int_to_ptr.vmem [resolvable:$true] %s20
      %26 = dma.hbm_to_vmem [thread:$0]  %s0, 512, %s21, [#allocation3], 256, 256, 16
    $region5: #{tpu_custom_call.1} parent=1 // pred_fallthru
      _
    // Predicated region
    $region6: #{tpu_custom_call.1} parent=1 // pred_check
      _
    $region7: #{tpu_custom_call.1} parent=1 // pred_check_branch
      %28 = sbr.rel (0) target = $region9
    $region8: #{tpu_custom_call.1} parent=1 // pred_region
      %s30 = ssub.s32 256, 256
      %31 = vsyncadd [#allocation6], %s30
      %s32 = sshll.u32 [#allocation5], 4
      %s33 = int_to_ptr.vmem [resolvable:$true] %s32
      %38 = dma.hbm_to_vmem [thread:$0]  %s1, 256, %s33, [#allocation6], 128, 128, 8
    $region9: #{tpu_custom_call.1} parent=1 // pred_fallthru
      _
    // Predicated region
    $region10: #{tpu_custom_call.1} parent=1 // pred_check
      _
    $region11: #{tpu_custom_call.1} parent=1 // pred_check_branch
      %40 = sbr.rel (0) target = $region13
    $region12: #{tpu_custom_call.1} parent=1 // pred_region
      %s42 = ssub.s32 16384, 16384
      %43 = vsyncadd [#allocation6], %s42
      %s44 = sshll.u32 [#allocation7], 4
      %s45 = int_to_ptr.vmem [resolvable:$true] %s44
      %50 = dma.hbm_to_vmem [thread:$0]  %s2, 16384, %s45, [#allocation6], 512, 512, 32
    $region13: #{tpu_custom_call.1} parent=1 // pred_fallthru
      _
    // Predicated region
    $region14: #{tpu_custom_call.1} parent=1 // pred_check
      _
    $region15: #{tpu_custom_call.1} parent=1 // pred_check_branch
      %52 = sbr.rel (0) target = $region17
    $region16: #{tpu_custom_call.1} parent=1 // pred_region
      _
    $region17: #{tpu_custom_call.1} parent=1 // pred_fallthru
      _
    // Predicated region
    $region18: #{tpu_custom_call.1} parent=1 // pred_check
      _
    $region19: #{tpu_custom_call.1} parent=1 // pred_check_branch
      %54 = sbr.rel (0) target = $region21
    $region20: #{tpu_custom_call.1} parent=1 // pred_region
      %s56 = ssub.s32 16384, 16384
      %57 = vsyncadd [#allocation9], %s56
      %s58 = sshll.u32 [#allocation8], 4
      %s59 = int_to_ptr.vmem [resolvable:$true] %s58
      %64 = dma.hbm_to_vmem [thread:$0]  %s4, 16384, %s59, [#allocation9], 128, 128, 8
    $region21: #{tpu_custom_call.1} parent=1 // pred_fallthru
      _
    // Predicated region
    $region22: #{tpu_custom_call.1} parent=1 // pred_check
      _
    $region23: #{tpu_custom_call.1} parent=1 // pred_check_branch
      %66 = sbr.rel (0) target = $region25
    $region24: #{tpu_custom_call.1} parent=1 // pred_region
      _
    $region25: #{tpu_custom_call.1} parent=1 // pred_fallthru
      _
    // Predicated region
    $region26: #{tpu_custom_call.1} parent=1 // pred_check
      _
    $region27: #{tpu_custom_call.1} parent=1 // pred_check_branch
      %68 = sbr.rel (0) target = $region29
    $region28: #{tpu_custom_call.1} parent=1 // pred_region
      %69 = dma.done [#allocation3], 512
    $region29: #{tpu_custom_call.1} parent=1 // pred_fallthru
      _
    // Predicated region
    $region30: #{tpu_custom_call.1} parent=1 // pred_check
      _
    $region31: #{tpu_custom_call.1} parent=1 // pred_check_branch
      %71 = sbr.rel (0) target = $region33
    $region32: #{tpu_custom_call.1} parent=1 // pred_region
      %72 = dma.done [#allocation6], 256
    $region33: #{tpu_custom_call.1} parent=1 // pred_fallthru
      _
    // Predicated region
    $region34: #{tpu_custom_call.1} parent=1 // pred_check
      _
    $region35: #{tpu_custom_call.1} parent=1 // pred_check_branch
      %74 = sbr.rel (0) target = $region37
    $region36: #{tpu_custom_call.1} parent=1 // pred_region
      %75 = dma.done [#allocation6], 16384
    $region37: #{tpu_custom_call.1} parent=1 // pred_fallthru
      _
    // Predicated region
    $region38: #{tpu_custom_call.1} parent=1 // pred_check
      _
    $region39: #{tpu_custom_call.1} parent=1 // pred_check_branch
      %77 = sbr.rel (0) target = $region41
    $region40: #{tpu_custom_call.1} parent=1 // pred_region
      %78 = dma.done [#allocation9], 16384
    $region41: #{tpu_custom_call.1} parent=1 // pred_fallthru
      _
    %v79 = vld [vmem:[#allocation5] sm:$0xff]
    %v80 = vld [vmem:[#allocation5 + $0x8] sm:$0xff]
    %v81 = vld [vmem:[#allocation7] sm:$0xff]
    %v82 = vld [vmem:[#allocation7 + $0x8] sm:$0xff]
    %v83 = vld [vmem:[#allocation7 + $0x10] sm:$0xff]
    %v84 = vld [vmem:[#allocation7 + $0x18] sm:$0xff]
    %v85 = vld [vmem:[#allocation7 + $0x20] sm:$0xff]
    %v86 = vld [vmem:[#allocation7 + $0x28] sm:$0xff]
    %v87 = vld [vmem:[#allocation7 + $0x30] sm:$0xff]
    %v88 = vld [vmem:[#allocation7 + $0x38] sm:$0xff]
    %v89 = vld [vmem:[#allocation7 + $0x40] sm:$0xff]
    %v90 = vld [vmem:[#allocation7 + $0x48] sm:$0xff]
    %v91 = vld [vmem:[#allocation7 + $0x50] sm:$0xff]
    %v92 = vld [vmem:[#allocation7 + $0x58] sm:$0xff]
    %v93 = vld [vmem:[#allocation7 + $0x60] sm:$0xff]
    %v94 = vld [vmem:[#allocation7 + $0x68] sm:$0xff]
    %v95 = vld [vmem:[#allocation7 + $0x70] sm:$0xff]
    %v96 = vld [vmem:[#allocation7 + $0x78] sm:$0xff]
    %v97 = vld [vmem:[#allocation7 + $0x80] sm:$0xff]
    %v98 = vld [vmem:[#allocation7 + $0x88] sm:$0xff]
    %v99 = vld [vmem:[#allocation7 + $0x90] sm:$0xff]
    %v100 = vld [vmem:[#allocation7 + $0x98] sm:$0xff]
    %v101 = vld [vmem:[#allocation7 + $0xa0] sm:$0xff]
    %v102 = vld [vmem:[#allocation7 + $0xa8] sm:$0xff]
    %v103 = vld [vmem:[#allocation7 + $0xb0] sm:$0xff]
    %v104 = vld [vmem:[#allocation7 + $0xb8] sm:$0xff]
    %v105 = vld [vmem:[#allocation7 + $0xc0] sm:$0xff]
    %v106 = vld [vmem:[#allocation7 + $0xc8] sm:$0xff]
    %v107 = vld [vmem:[#allocation7 + $0xd0] sm:$0xff]
    %v108 = vld [vmem:[#allocation7 + $0xd8] sm:$0xff]
    %v109 = vld [vmem:[#allocation7 + $0xe0] sm:$0xff]
    %v110 = vld [vmem:[#allocation7 + $0xe8] sm:$0xff]
    %v111 = vld [vmem:[#allocation7 + $0xf0] sm:$0xff]
    %v112 = vld [vmem:[#allocation7 + $0xf8] sm:$0xff]
    %v113 = vld [vmem:[#allocation7 + $0x100] sm:$0xff]
    %v114 = vld [vmem:[#allocation7 + $0x108] sm:$0xff]
    %v115 = vld [vmem:[#allocation7 + $0x110] sm:$0xff]
    %v116 = vld [vmem:[#allocation7 + $0x118] sm:$0xff]
    %v117 = vld [vmem:[#allocation7 + $0x120] sm:$0xff]
    %v118 = vld [vmem:[#allocation7 + $0x128] sm:$0xff]
    %v119 = vld [vmem:[#allocation7 + $0x130] sm:$0xff]
    %v120 = vld [vmem:[#allocation7 + $0x138] sm:$0xff]
    %v121 = vld [vmem:[#allocation7 + $0x140] sm:$0xff]
    %v122 = vld [vmem:[#allocation7 + $0x148] sm:$0xff]
    %v123 = vld [vmem:[#allocation7 + $0x150] sm:$0xff]
    %v124 = vld [vmem:[#allocation7 + $0x158] sm:$0xff]
    %v125 = vld [vmem:[#allocation7 + $0x160] sm:$0xff]
    %v126 = vld [vmem:[#allocation7 + $0x168] sm:$0xff]
    %v127 = vld [vmem:[#allocation7 + $0x170] sm:$0xff]
    %v128 = vld [vmem:[#allocation7 + $0x178] sm:$0xff]
    %v129 = vld [vmem:[#allocation7 + $0x180] sm:$0xff]
    %v130 = vld [vmem:[#allocation7 + $0x188] sm:$0xff]
    %v131 = vld [vmem:[#allocation7 + $0x190] sm:$0xff]
    %v132 = vld [vmem:[#allocation7 + $0x198] sm:$0xff]
    %v133 = vld [vmem:[#allocation7 + $0x1a0] sm:$0xff]
    %v134 = vld [vmem:[#allocation7 + $0x1a8] sm:$0xff]
    %v135 = vld [vmem:[#allocation7 + $0x1b0] sm:$0xff]
    %v136 = vld [vmem:[#allocation7 + $0x1b8] sm:$0xff]
    %v137 = vld [vmem:[#allocation7 + $0x1c0] sm:$0xff]
    %v138 = vld [vmem:[#allocation7 + $0x1c8] sm:$0xff]
    %v139 = vld [vmem:[#allocation7 + $0x1d0] sm:$0xff]
    %v140 = vld [vmem:[#allocation7 + $0x1d8] sm:$0xff]
    %v141 = vld [vmem:[#allocation7 + $0x1e0] sm:$0xff]
    %v142 = vld [vmem:[#allocation7 + $0x1e8] sm:$0xff]
    %v143 = vld [vmem:[#allocation7 + $0x1f0] sm:$0xff]
    %v144 = vld [vmem:[#allocation7 + $0x1f8] sm:$0xff]
    %v145 = vld [vmem:[#allocation7 + $0x200] sm:$0xff]
    %v146 = vld [vmem:[#allocation7 + $0x208] sm:$0xff]
    %v147 = vld [vmem:[#allocation7 + $0x210] sm:$0xff]
    %v148 = vld [vmem:[#allocation7 + $0x218] sm:$0xff]
    %v149 = vld [vmem:[#allocation7 + $0x220] sm:$0xff]
    %v150 = vld [vmem:[#allocation7 + $0x228] sm:$0xff]
    %v151 = vld [vmem:[#allocation7 + $0x230] sm:$0xff]
    %v152 = vld [vmem:[#allocation7 + $0x238] sm:$0xff]
    %v153 = vld [vmem:[#allocation7 + $0x240] sm:$0xff]
    %v154 = vld [vmem:[#allocation7 + $0x248] sm:$0xff]
    %v155 = vld [vmem:[#allocation7 + $0x250] sm:$0xff]
    %v156 = vld [vmem:[#allocation7 + $0x258] sm:$0xff]
    %v157 = vld [vmem:[#allocation7 + $0x260] sm:$0xff]
    %v158 = vld [vmem:[#allocation7 + $0x268] sm:$0xff]
    %v159 = vld [vmem:[#allocation7 + $0x270] sm:$0xff]
    %v160 = vld [vmem:[#allocation7 + $0x278] sm:$0xff]
    %v161 = vld [vmem:[#allocation7 + $0x280] sm:$0xff]
    %v162 = vld [vmem:[#allocation7 + $0x288] sm:$0xff]
    %v163 = vld [vmem:[#allocation7 + $0x290] sm:$0xff]
    %v164 = vld [vmem:[#allocation7 + $0x298] sm:$0xff]
    %v165 = vld [vmem:[#allocation7 + $0x2a0] sm:$0xff]
    %v166 = vld [vmem:[#allocation7 + $0x2a8] sm:$0xff]
    %v167 = vld [vmem:[#allocation7 + $0x2b0] sm:$0xff]
    %v168 = vld [vmem:[#allocation7 + $0x2b8] sm:$0xff]
    %v169 = vld [vmem:[#allocation7 + $0x2c0] sm:$0xff]
    %v170 = vld [vmem:[#allocation7 + $0x2c8] sm:$0xff]
    %v171 = vld [vmem:[#allocation7 + $0x2d0] sm:$0xff]
    %v172 = vld [vmem:[#allocation7 + $0x2d8] sm:$0xff]
    %v173 = vld [vmem:[#allocation7 + $0x2e0] sm:$0xff]
    %v174 = vld [vmem:[#allocation7 + $0x2e8] sm:$0xff]
    %v175 = vld [vmem:[#allocation7 + $0x2f0] sm:$0xff]
    %v176 = vld [vmem:[#allocation7 + $0x2f8] sm:$0xff]
    %v177 = vld [vmem:[#allocation7 + $0x300] sm:$0xff]
    %v178 = vld [vmem:[#allocation7 + $0x308] sm:$0xff]
    %v179 = vld [vmem:[#allocation7 + $0x310] sm:$0xff]
    %v180 = vld [vmem:[#allocation7 + $0x318] sm:$0xff]
    %v181 = vld [vmem:[#allocation7 + $0x320] sm:$0xff]
    %v182 = vld [vmem:[#allocation7 + $0x328] sm:$0xff]
    %v183 = vld [vmem:[#allocation7 + $0x330] sm:$0xff]
    %v184 = vld [vmem:[#allocation7 + $0x338] sm:$0xff]
    %v185 = vld [vmem:[#allocation7 + $0x340] sm:$0xff]
    %v186 = vld [vmem:[#allocation7 + $0x348] sm:$0xff]
    %v187 = vld [vmem:[#allocation7 + $0x350] sm:$0xff]
    %v188 = vld [vmem:[#allocation7 + $0x358] sm:$0xff]
    %v189 = vld [vmem:[#allocation7 + $0x360] sm:$0xff]
    %v190 = vld [vmem:[#allocation7 + $0x368] sm:$0xff]
    %v191 = vld [vmem:[#allocation7 + $0x370] sm:$0xff]
    %v192 = vld [vmem:[#allocation7 + $0x378] sm:$0xff]
    %v193 = vld [vmem:[#allocation7 + $0x380] sm:$0xff]
    %v194 = vld [vmem:[#allocation7 + $0x388] sm:$0xff]
    %v195 = vld [vmem:[#allocation7 + $0x390] sm:$0xff]
    %v196 = vld [vmem:[#allocation7 + $0x398] sm:$0xff]
    %v197 = vld [vmem:[#allocation7 + $0x3a0] sm:$0xff]
    %v198 = vld [vmem:[#allocation7 + $0x3a8] sm:$0xff]
    %v199 = vld [vmem:[#allocation7 + $0x3b0] sm:$0xff]
    %v200 = vld [vmem:[#allocation7 + $0x3b8] sm:$0xff]
    %v201 = vld [vmem:[#allocation7 + $0x3c0] sm:$0xff]
    %v202 = vld [vmem:[#allocation7 + $0x3c8] sm:$0xff]
    %v203 = vld [vmem:[#allocation7 + $0x3d0] sm:$0xff]
    %v204 = vld [vmem:[#allocation7 + $0x3d8] sm:$0xff]
    %v205 = vld [vmem:[#allocation7 + $0x3e0] sm:$0xff]
    %v206 = vld [vmem:[#allocation7 + $0x3e8] sm:$0xff]
    %v207 = vld [vmem:[#allocation7 + $0x3f0] sm:$0xff]
    %v208 = vld [vmem:[#allocation7 + $0x3f8] sm:$0xff]
    %v209 = vld [vmem:[%s3] sm:$0xff]
    %v211 = vlaneseq
    %v212 = vshrl.u32 %v211, 7
    %v213 = vsub.s32 0, %v212
    %v214 = vrot.slane %v209, %v213
    %v215 = vlaneseq
    %v216 = vshrl.u32 %v215, 7
    %v217 = vsub.s32 1, %v216
    %v218 = vrot.slane %v209, %v217
    %v219 = vlaneseq
    %v220 = vshrl.u32 %v219, 7
    %v221 = vsub.s32 2, %v220
    %v222 = vrot.slane %v209, %v221
    %v223 = vlaneseq
    %v224 = vshrl.u32 %v223, 7
    %v225 = vsub.s32 3, %v224
    %v226 = vrot.slane %v209, %v225
    %v227 = vlaneseq
    %v228 = vshrl.u32 %v227, 7
    %v229 = vsub.s32 4, %v228
    %v230 = vrot.slane %v209, %v229
    %v231 = vlaneseq
    %v232 = vshrl.u32 %v231, 7
    %v233 = vsub.s32 5, %v232
    %v234 = vrot.slane %v209, %v233
    %v235 = vlaneseq
    %v236 = vshrl.u32 %v235, 7
    %v237 = vsub.s32 6, %v236
    %v238 = vrot.slane %v209, %v237
    %v239 = vlaneseq
    %v240 = vshrl.u32 %v239, 7
    %v241 = vsub.s32 7, %v240
    %v242 = vrot.slane %v209, %v241
    %v253 = vunpack.c.l.b16 %v79
    %v254 = vunpack.c.h.b16 %v79
    %v255 = vunpack.c.l.b16 %v80
    %v256 = vunpack.c.h.b16 %v80
    %v257 = vpack.c.b16 %v255, %v253
    %v258 = vpack.c.b16 %v256, %v254
    %v389 = vunpack.c.l.b16 %v81
    %v390 = vunpack.c.h.b16 %v81
    %v391 = vunpack.c.l.b16 %v82
    %v392 = vunpack.c.h.b16 %v82
    %v393 = vunpack.c.l.b16 %v83
    %v394 = vunpack.c.h.b16 %v83
    %v395 = vunpack.c.l.b16 %v84
    %v396 = vunpack.c.h.b16 %v84
    %v397 = vunpack.c.l.b16 %v85
    %v398 = vunpack.c.h.b16 %v85
    %v399 = vunpack.c.l.b16 %v86
    %v400 = vunpack.c.h.b16 %v86
    %v401 = vunpack.c.l.b16 %v87
    %v402 = vunpack.c.h.b16 %v87
    %v403 = vunpack.c.l.b16 %v88
    %v404 = vunpack.c.h.b16 %v88
    %v405 = vunpack.c.l.b16 %v89
    %v406 = vunpack.c.h.b16 %v89
    %v407 = vunpack.c.l.b16 %v90
    %v408 = vunpack.c.h.b16 %v90
    %v409 = vunpack.c.l.b16 %v91
    %v410 = vunpack.c.h.b16 %v91
    %v411 = vunpack.c.l.b16 %v92
    %v412 = vunpack.c.h.b16 %v92
    %v413 = vunpack.c.l.b16 %v93
    %v414 = vunpack.c.h.b16 %v93
    %v415 = vunpack.c.l.b16 %v94
    %v416 = vunpack.c.h.b16 %v94
    %v417 = vunpack.c.l.b16 %v95
    %v418 = vunpack.c.h.b16 %v95
    %v419 = vunpack.c.l.b16 %v96
    %v420 = vunpack.c.h.b16 %v96
    %v421 = vunpack.c.l.b16 %v97
    %v422 = vunpack.c.h.b16 %v97
    %v423 = vunpack.c.l.b16 %v98
    %v424 = vunpack.c.h.b16 %v98
    %v425 = vunpack.c.l.b16 %v99
    %v426 = vunpack.c.h.b16 %v99
    %v427 = vunpack.c.l.b16 %v100
    %v428 = vunpack.c.h.b16 %v100
    %v429 = vunpack.c.l.b16 %v101
    %v430 = vunpack.c.h.b16 %v101
    %v431 = vunpack.c.l.b16 %v102
    %v432 = vunpack.c.h.b16 %v102
    %v433 = vunpack.c.l.b16 %v103
    %v434 = vunpack.c.h.b16 %v103
    %v435 = vunpack.c.l.b16 %v104
    %v436 = vunpack.c.h.b16 %v104
    %v437 = vunpack.c.l.b16 %v105
    %v438 = vunpack.c.h.b16 %v105
    %v439 = vunpack.c.l.b16 %v106
    %v440 = vunpack.c.h.b16 %v106
    %v441 = vunpack.c.l.b16 %v107
    %v442 = vunpack.c.h.b16 %v107
    %v443 = vunpack.c.l.b16 %v108
    %v444 = vunpack.c.h.b16 %v108
    %v445 = vunpack.c.l.b16 %v109
    %v446 = vunpack.c.h.b16 %v109
    %v447 = vunpack.c.l.b16 %v110
    %v448 = vunpack.c.h.b16 %v110
    %v449 = vunpack.c.l.b16 %v111
    %v450 = vunpack.c.h.b16 %v111
    %v451 = vunpack.c.l.b16 %v112
    %v452 = vunpack.c.h.b16 %v112
    %v453 = vunpack.c.l.b16 %v113
    %v454 = vunpack.c.h.b16 %v113
    %v455 = vunpack.c.l.b16 %v114
    %v456 = vunpack.c.h.b16 %v114
    %v457 = vunpack.c.l.b16 %v115
    %v458 = vunpack.c.h.b16 %v115
    %v459 = vunpack.c.l.b16 %v116
    %v460 = vunpack.c.h.b16 %v116
    %v461 = vunpack.c.l.b16 %v117
    %v462 = vunpack.c.h.b16 %v117
    %v463 = vunpack.c.l.b16 %v118
    %v464 = vunpack.c.h.b16 %v118
    %v465 = vunpack.c.l.b16 %v119
    %v466 = vunpack.c.h.b16 %v119
    %v467 = vunpack.c.l.b16 %v120
    %v468 = vunpack.c.h.b16 %v120
    %v469 = vunpack.c.l.b16 %v121
    %v470 = vunpack.c.h.b16 %v121
    %v471 = vunpack.c.l.b16 %v122
    %v472 = vunpack.c.h.b16 %v122
    %v473 = vunpack.c.l.b16 %v123
    %v474 = vunpack.c.h.b16 %v123
    %v475 = vunpack.c.l.b16 %v124
    %v476 = vunpack.c.h.b16 %v124
    %v477 = vunpack.c.l.b16 %v125
    %v478 = vunpack.c.h.b16 %v125
    %v479 = vunpack.c.l.b16 %v126
    %v480 = vunpack.c.h.b16 %v126
    %v481 = vunpack.c.l.b16 %v127
    %v482 = vunpack.c.h.b16 %v127
    %v483 = vunpack.c.l.b16 %v128
    %v484 = vunpack.c.h.b16 %v128
    %v485 = vunpack.c.l.b16 %v129
    %v486 = vunpack.c.h.b16 %v129
    %v487 = vunpack.c.l.b16 %v130
    %v488 = vunpack.c.h.b16 %v130
    %v489 = vunpack.c.l.b16 %v131
    %v490 = vunpack.c.h.b16 %v131
    %v491 = vunpack.c.l.b16 %v132
    %v492 = vunpack.c.h.b16 %v132
    %v493 = vunpack.c.l.b16 %v133
    %v494 = vunpack.c.h.b16 %v133
    %v495 = vunpack.c.l.b16 %v134
    %v496 = vunpack.c.h.b16 %v134
    %v497 = vunpack.c.l.b16 %v135
    %v498 = vunpack.c.h.b16 %v135
    %v499 = vunpack.c.l.b16 %v136
    %v500 = vunpack.c.h.b16 %v136
    %v501 = vunpack.c.l.b16 %v137
    %v502 = vunpack.c.h.b16 %v137
    %v503 = vunpack.c.l.b16 %v138
    %v504 = vunpack.c.h.b16 %v138
    %v505 = vunpack.c.l.b16 %v139
    %v506 = vunpack.c.h.b16 %v139
    %v507 = vunpack.c.l.b16 %v140
    %v508 = vunpack.c.h.b16 %v140
    %v509 = vunpack.c.l.b16 %v141
    %v510 = vunpack.c.h.b16 %v141
    %v511 = vunpack.c.l.b16 %v142
    %v512 = vunpack.c.h.b16 %v142
    %v513 = vunpack.c.l.b16 %v143
    %v514 = vunpack.c.h.b16 %v143
    %v515 = vunpack.c.l.b16 %v144
    %v516 = vunpack.c.h.b16 %v144
    %v517 = vunpack.c.l.b16 %v145
    %v518 = vunpack.c.h.b16 %v145
    %v519 = vunpack.c.l.b16 %v146
    %v520 = vunpack.c.h.b16 %v146
    %v521 = vunpack.c.l.b16 %v147
    %v522 = vunpack.c.h.b16 %v147
    %v523 = vunpack.c.l.b16 %v148
    %v524 = vunpack.c.h.b16 %v148
    %v525 = vunpack.c.l.b16 %v149
    %v526 = vunpack.c.h.b16 %v149
    %v527 = vunpack.c.l.b16 %v150
    %v528 = vunpack.c.h.b16 %v150
    %v529 = vunpack.c.l.b16 %v151
    %v530 = vunpack.c.h.b16 %v151
    %v531 = vunpack.c.l.b16 %v152
    %v532 = vunpack.c.h.b16 %v152
    %v533 = vunpack.c.l.b16 %v153
    %v534 = vunpack.c.h.b16 %v153
    %v535 = vunpack.c.l.b16 %v154
    %v536 = vunpack.c.h.b16 %v154
    %v537 = vunpack.c.l.b16 %v155
    %v538 = vunpack.c.h.b16 %v155
    %v539 = vunpack.c.l.b16 %v156
    %v540 = vunpack.c.h.b16 %v156
    %v541 = vunpack.c.l.b16 %v157
    %v542 = vunpack.c.h.b16 %v157
    %v543 = vunpack.c.l.b16 %v158
    %v544 = vunpack.c.h.b16 %v158
    %v545 = vunpack.c.l.b16 %v159
    %v546 = vunpack.c.h.b16 %v159
    %v547 = vunpack.c.l.b16 %v160
    %v548 = vunpack.c.h.b16 %v160
    %v549 = vunpack.c.l.b16 %v161
    %v550 = vunpack.c.h.b16 %v161
    %v551 = vunpack.c.l.b16 %v162
    %v552 = vunpack.c.h.b16 %v162
    %v553 = vunpack.c.l.b16 %v163
    %v554 = vunpack.c.h.b16 %v163
    %v555 = vunpack.c.l.b16 %v164
    %v556 = vunpack.c.h.b16 %v164
    %v557 = vunpack.c.l.b16 %v165
    %v558 = vunpack.c.h.b16 %v165
    %v559 = vunpack.c.l.b16 %v166
    %v560 = vunpack.c.h.b16 %v166
    %v561 = vunpack.c.l.b16 %v167
    %v562 = vunpack.c.h.b16 %v167
    %v563 = vunpack.c.l.b16 %v168
    %v564 = vunpack.c.h.b16 %v168
    %v565 = vunpack.c.l.b16 %v169
    %v566 = vunpack.c.h.b16 %v169
    %v567 = vunpack.c.l.b16 %v170
    %v568 = vunpack.c.h.b16 %v170
    %v569 = vunpack.c.l.b16 %v171
    %v570 = vunpack.c.h.b16 %v171
    %v571 = vunpack.c.l.b16 %v172
    %v572 = vunpack.c.h.b16 %v172
    %v573 = vunpack.c.l.b16 %v173
    %v574 = vunpack.c.h.b16 %v173
    %v575 = vunpack.c.l.b16 %v174
    %v576 = vunpack.c.h.b16 %v174
    %v577 = vunpack.c.l.b16 %v175
    %v578 = vunpack.c.h.b16 %v175
    %v579 = vunpack.c.l.b16 %v176
    %v580 = vunpack.c.h.b16 %v176
    %v581 = vunpack.c.l.b16 %v177
    %v582 = vunpack.c.h.b16 %v177
    %v583 = vunpack.c.l.b16 %v178
    %v584 = vunpack.c.h.b16 %v178
    %v585 = vunpack.c.l.b16 %v179
    %v586 = vunpack.c.h.b16 %v179
    %v587 = vunpack.c.l.b16 %v180
    %v588 = vunpack.c.h.b16 %v180
    %v589 = vunpack.c.l.b16 %v181
    %v590 = vunpack.c.h.b16 %v181
    %v591 = vunpack.c.l.b16 %v182
    %v592 = vunpack.c.h.b16 %v182
    %v593 = vunpack.c.l.b16 %v183
    %v594 = vunpack.c.h.b16 %v183
    %v595 = vunpack.c.l.b16 %v184
    %v596 = vunpack.c.h.b16 %v184
    %v597 = vunpack.c.l.b16 %v185
    %v598 = vunpack.c.h.b16 %v185
    %v599 = vunpack.c.l.b16 %v186
    %v600 = vunpack.c.h.b16 %v186
    %v601 = vunpack.c.l.b16 %v187
    %v602 = vunpack.c.h.b16 %v187
    %v603 = vunpack.c.l.b16 %v188
    %v604 = vunpack.c.h.b16 %v188
    %v605 = vunpack.c.l.b16 %v189
    %v606 = vunpack.c.h.b16 %v189
    %v607 = vunpack.c.l.b16 %v190
    %v608 = vunpack.c.h.b16 %v190
    %v609 = vunpack.c.l.b16 %v191
    %v610 = vunpack.c.h.b16 %v191
    %v611 = vunpack.c.l.b16 %v192
    %v612 = vunpack.c.h.b16 %v192
    %v613 = vunpack.c.l.b16 %v193
    %v614 = vunpack.c.h.b16 %v193
    %v615 = vunpack.c.l.b16 %v194
    %v616 = vunpack.c.h.b16 %v194
    %v617 = vunpack.c.l.b16 %v195
    %v618 = vunpack.c.h.b16 %v195
    %v619 = vunpack.c.l.b16 %v196
    %v620 = vunpack.c.h.b16 %v196
    %v621 = vunpack.c.l.b16 %v197
    %v622 = vunpack.c.h.b16 %v197
    %v623 = vunpack.c.l.b16 %v198
    %v624 = vunpack.c.h.b16 %v198
    %v625 = vunpack.c.l.b16 %v199
    %v626 = vunpack.c.h.b16 %v199
    %v627 = vunpack.c.l.b16 %v200
    %v628 = vunpack.c.h.b16 %v200
    %v629 = vunpack.c.l.b16 %v201
    %v630 = vunpack.c.h.b16 %v201
    %v631 = vunpack.c.l.b16 %v202
    %v632 = vunpack.c.h.b16 %v202
    %v633 = vunpack.c.l.b16 %v203
    %v634 = vunpack.c.h.b16 %v203
    %v635 = vunpack.c.l.b16 %v204
    %v636 = vunpack.c.h.b16 %v204
    %v637 = vunpack.c.l.b16 %v205
    %v638 = vunpack.c.h.b16 %v205
    %v639 = vunpack.c.l.b16 %v206
    %v640 = vunpack.c.h.b16 %v206
    %v641 = vunpack.c.l.b16 %v207
    %v642 = vunpack.c.h.b16 %v207
    %v643 = vunpack.c.l.b16 %v208
    %v644 = vunpack.c.h.b16 %v208
    %v645 = vpack.c.b16 %v397, %v389
    %v646 = vpack.c.b16 %v398, %v390
    %v647 = vpack.c.b16 %v399, %v391
    %v648 = vpack.c.b16 %v400, %v392
    %v649 = vpack.c.b16 %v401, %v393
    %v650 = vpack.c.b16 %v402, %v394
    %v651 = vpack.c.b16 %v403, %v395
    %v652 = vpack.c.b16 %v404, %v396
    %v653 = vpack.c.b16 %v413, %v405
    %v654 = vpack.c.b16 %v414, %v406
    %v655 = vpack.c.b16 %v415, %v407
    %v656 = vpack.c.b16 %v416, %v408
    %v657 = vpack.c.b16 %v417, %v409
    %v658 = vpack.c.b16 %v418, %v410
    %v659 = vpack.c.b16 %v419, %v411
    %v660 = vpack.c.b16 %v420, %v412
    %v661 = vpack.c.b16 %v429, %v421
    %v662 = vpack.c.b16 %v430, %v422
    %v663 = vpack.c.b16 %v431, %v423
    %v664 = vpack.c.b16 %v432, %v424
    %v665 = vpack.c.b16 %v433, %v425
    %v666 = vpack.c.b16 %v434, %v426
    %v667 = vpack.c.b16 %v435, %v427
    %v668 = vpack.c.b16 %v436, %v428
    %v669 = vpack.c.b16 %v445, %v437
    %v670 = vpack.c.b16 %v446, %v438
    %v671 = vpack.c.b16 %v447, %v439
    %v672 = vpack.c.b16 %v448, %v440
    %v673 = vpack.c.b16 %v449, %v441
    %v674 = vpack.c.b16 %v450, %v442
    %v675 = vpack.c.b16 %v451, %v443
    %v676 = vpack.c.b16 %v452, %v444
    %v677 = vpack.c.b16 %v461, %v453
    %v678 = vpack.c.b16 %v462, %v454
    %v679 = vpack.c.b16 %v463, %v455
    %v680 = vpack.c.b16 %v464, %v456
    %v681 = vpack.c.b16 %v465, %v457
    %v682 = vpack.c.b16 %v466, %v458
    %v683 = vpack.c.b16 %v467, %v459
    %v684 = vpack.c.b16 %v468, %v460
    %v685 = vpack.c.b16 %v477, %v469
    %v686 = vpack.c.b16 %v478, %v470
    %v687 = vpack.c.b16 %v479, %v471
    %v688 = vpack.c.b16 %v480, %v472
    %v689 = vpack.c.b16 %v481, %v473
    %v690 = vpack.c.b16 %v482, %v474
    %v691 = vpack.c.b16 %v483, %v475
    %v692 = vpack.c.b16 %v484, %v476
    %v693 = vpack.c.b16 %v493, %v485
    %v694 = vpack.c.b16 %v494, %v486
    %v695 = vpack.c.b16 %v495, %v487
    %v696 = vpack.c.b16 %v496, %v488
    %v697 = vpack.c.b16 %v497, %v489
    %v698 = vpack.c.b16 %v498, %v490
    %v699 = vpack.c.b16 %v499, %v491
    %v700 = vpack.c.b16 %v500, %v492
    %v701 = vpack.c.b16 %v509, %v501
    %v702 = vpack.c.b16 %v510, %v502
    %v703 = vpack.c.b16 %v511, %v503
    %v704 = vpack.c.b16 %v512, %v504
    %v705 = vpack.c.b16 %v513, %v505
    %v706 = vpack.c.b16 %v514, %v506
    %v707 = vpack.c.b16 %v515, %v507
    %v708 = vpack.c.b16 %v516, %v508
    %v709 = vpack.c.b16 %v525, %v517
    %v710 = vpack.c.b16 %v526, %v518
    %v711 = vpack.c.b16 %v527, %v519
    %v712 = vpack.c.b16 %v528, %v520
    %v713 = vpack.c.b16 %v529, %v521
    %v714 = vpack.c.b16 %v530, %v522
    %v715 = vpack.c.b16 %v531, %v523
    %v716 = vpack.c.b16 %v532, %v524
    %v717 = vpack.c.b16 %v541, %v533
    %v718 = vpack.c.b16 %v542, %v534
    %v719 = vpack.c.b16 %v543, %v535
    %v720 = vpack.c.b16 %v544, %v536
    %v721 = vpack.c.b16 %v545, %v537
    %v722 = vpack.c.b16 %v546, %v538
    %v723 = vpack.c.b16 %v547, %v539
    %v724 = vpack.c.b16 %v548, %v540
    %v725 = vpack.c.b16 %v557, %v549
    %v726 = vpack.c.b16 %v558, %v550
    %v727 = vpack.c.b16 %v559, %v551
    %v728 = vpack.c.b16 %v560, %v552
    %v729 = vpack.c.b16 %v561, %v553
    %v730 = vpack.c.b16 %v562, %v554
    %v731 = vpack.c.b16 %v563, %v555
    %v732 = vpack.c.b16 %v564, %v556
    %v733 = vpack.c.b16 %v573, %v565
    %v734 = vpack.c.b16 %v574, %v566
    %v735 = vpack.c.b16 %v575, %v567
    %v736 = vpack.c.b16 %v576, %v568
    %v737 = vpack.c.b16 %v577, %v569
    %v738 = vpack.c.b16 %v578, %v570
    %v739 = vpack.c.b16 %v579, %v571
    %v740 = vpack.c.b16 %v580, %v572
    %v741 = vpack.c.b16 %v589, %v581
    %v742 = vpack.c.b16 %v590, %v582
    %v743 = vpack.c.b16 %v591, %v583
    %v744 = vpack.c.b16 %v592, %v584
    %v745 = vpack.c.b16 %v593, %v585
    %v746 = vpack.c.b16 %v594, %v586
    %v747 = vpack.c.b16 %v595, %v587
    %v748 = vpack.c.b16 %v596, %v588
    %v749 = vpack.c.b16 %v605, %v597
    %v750 = vpack.c.b16 %v606, %v598
    %v751 = vpack.c.b16 %v607, %v599
    %v752 = vpack.c.b16 %v608, %v600
    %v753 = vpack.c.b16 %v609, %v601
    %v754 = vpack.c.b16 %v610, %v602
    %v755 = vpack.c.b16 %v611, %v603
    %v756 = vpack.c.b16 %v612, %v604
    %v757 = vpack.c.b16 %v621, %v613
    %v758 = vpack.c.b16 %v622, %v614
    %v759 = vpack.c.b16 %v623, %v615
    %v760 = vpack.c.b16 %v624, %v616
    %v761 = vpack.c.b16 %v625, %v617
    %v762 = vpack.c.b16 %v626, %v618
    %v763 = vpack.c.b16 %v627, %v619
    %v764 = vpack.c.b16 %v628, %v620
    %v765 = vpack.c.b16 %v637, %v629
    %v766 = vpack.c.b16 %v638, %v630
    %v767 = vpack.c.b16 %v639, %v631
    %v768 = vpack.c.b16 %v640, %v632
    %v769 = vpack.c.b16 %v641, %v633
    %v770 = vpack.c.b16 %v642, %v634
    %v771 = vpack.c.b16 %v643, %v635
    %v772 = vpack.c.b16 %v644, %v636
    %901 = vmatprep.subr.bf16.mxu0 %v646
    %902 = vmatpush1.bf16.msra.mxu0 %v645
    %903 = vmatprep.subr.bf16.mxu0 %v654
    %904 = vmatpush1.bf16.msra.mxu0 %v653
    %905 = vmatprep.subr.bf16.mxu0 %v662
    %906 = vmatpush1.bf16.msra.mxu0 %v661
    %907 = vmatprep.subr.bf16.mxu0 %v670
    %908 = vmatpush1.bf16.msra.mxu0 %v669
    %909 = vmatprep.subr.bf16.mxu0 %v678
    %910 = vmatpush1.bf16.msra.mxu0 %v677
    %911 = vmatprep.subr.bf16.mxu0 %v686
    %912 = vmatpush1.bf16.msra.mxu0 %v685
    %913 = vmatprep.subr.bf16.mxu0 %v694
    %914 = vmatpush1.bf16.msra.mxu0 %v693
    %915 = vmatprep.subr.bf16.mxu0 %v702
    %916 = vmatpush1.bf16.msra.mxu0 %v701
    %917 = vmatprep.subr.bf16.mxu0 %v710
    %918 = vmatpush1.bf16.msra.mxu0 %v709
    %919 = vmatprep.subr.bf16.mxu0 %v718
    %920 = vmatpush1.bf16.msra.mxu0 %v717
    %921 = vmatprep.subr.bf16.mxu0 %v726
    %922 = vmatpush1.bf16.msra.mxu0 %v725
    %923 = vmatprep.subr.bf16.mxu0 %v734
    %924 = vmatpush1.bf16.msra.mxu0 %v733
    %925 = vmatprep.subr.bf16.mxu0 %v742
    %926 = vmatpush1.bf16.msra.mxu0 %v741
    %927 = vmatprep.subr.bf16.mxu0 %v750
    %928 = vmatpush1.bf16.msra.mxu0 %v749
    %929 = vmatprep.subr.bf16.mxu0 %v758
    %930 = vmatpush1.bf16.msra.mxu0 %v757
    %931 = vmatprep.subr.bf16.mxu0 %v766
    %932 = vmatpush1.bf16.msra.mxu0 %v765
    %933 = vmatprep.mubr.bf16.mxu0 %v258
    %934 = vmatmul.mubr.bf16.gmra.mrb[0].mxu0 %v257
    %v935 = vpop.f32.mrb[0].mxu0
    %v936 = vadd.f32 %v214, %v935
    %v937 = vpop.f32.mrb[0].mxu0
    %v938 = vadd.f32 %v218, %v937
    %v939 = vpop.f32.mrb[0].mxu0
    %v940 = vadd.f32 %v214, %v939
    %v941 = vpop.f32.mrb[0].mxu0
    %v942 = vadd.f32 %v218, %v941
    %943 = vdwg.mxu0
    %944 = vmatprep.subr.bf16.mxu0 %v648
    %945 = vmatpush1.bf16.msra.mxu0 %v647
    %946 = vmatprep.subr.bf16.mxu0 %v656
    %947 = vmatpush1.bf16.msra.mxu0 %v655
    %948 = vmatprep.subr.bf16.mxu0 %v664
    %949 = vmatpush1.bf16.msra.mxu0 %v663
    %950 = vmatprep.subr.bf16.mxu0 %v672
    %951 = vmatpush1.bf16.msra.mxu0 %v671
    %952 = vmatprep.subr.bf16.mxu0 %v680
    %953 = vmatpush1.bf16.msra.mxu0 %v679
    %954 = vmatprep.subr.bf16.mxu0 %v688
    %955 = vmatpush1.bf16.msra.mxu0 %v687
    %956 = vmatprep.subr.bf16.mxu0 %v696
    %957 = vmatpush1.bf16.msra.mxu0 %v695
    %958 = vmatprep.subr.bf16.mxu0 %v704
    %959 = vmatpush1.bf16.msra.mxu0 %v703
    %960 = vmatprep.subr.bf16.mxu0 %v712
    %961 = vmatpush1.bf16.msra.mxu0 %v711
    %962 = vmatprep.subr.bf16.mxu0 %v720
    %963 = vmatpush1.bf16.msra.mxu0 %v719
    %964 = vmatprep.subr.bf16.mxu0 %v728
    %965 = vmatpush1.bf16.msra.mxu0 %v727
    %966 = vmatprep.subr.bf16.mxu0 %v736
    %967 = vmatpush1.bf16.msra.mxu0 %v735
    %968 = vmatprep.subr.bf16.mxu0 %v744
    %969 = vmatpush1.bf16.msra.mxu0 %v743
    %970 = vmatprep.subr.bf16.mxu0 %v752
    %971 = vmatpush1.bf16.msra.mxu0 %v751
    %972 = vmatprep.subr.bf16.mxu0 %v760
    %973 = vmatpush1.bf16.msra.mxu0 %v759
    %974 = vmatprep.subr.bf16.mxu0 %v768
    %975 = vmatpush1.bf16.msra.mxu0 %v767
    %976 = vmatprep.mubr.bf16.mxu0 %v258
    %977 = vmatmul.mubr.bf16.gmra.mrb[0].mxu0 %v257
    %v978 = vpop.f32.mrb[0].mxu0
    %v979 = vadd.f32 %v222, %v978
    %v980 = vpop.f32.mrb[0].mxu0
    %v981 = vadd.f32 %v226, %v980
    %v982 = vpop.f32.mrb[0].mxu0
    %v983 = vadd.f32 %v222, %v982
    %v984 = vpop.f32.mrb[0].mxu0
    %v985 = vadd.f32 %v226, %v984
    %986 = vdwg.mxu0
    %987 = vmatprep.subr.bf16.mxu0 %v650
    %988 = vmatpush1.bf16.msra.mxu0 %v649
    %989 = vmatprep.subr.bf16.mxu0 %v658
    %990 = vmatpush1.bf16.msra.mxu0 %v657
    %991 = vmatprep.subr.bf16.mxu0 %v666
    %992 = vmatpush1.bf16.msra.mxu0 %v665
    %993 = vmatprep.subr.bf16.mxu0 %v674
    %994 = vmatpush1.bf16.msra.mxu0 %v673
    %995 = vmatprep.subr.bf16.mxu0 %v682
    %996 = vmatpush1.bf16.msra.mxu0 %v681
    %997 = vmatprep.subr.bf16.mxu0 %v690
    %998 = vmatpush1.bf16.msra.mxu0 %v689
    %999 = vmatprep.subr.bf16.mxu0 %v698
    %1000 = vmatpush1.bf16.msra.mxu0 %v697
    %1001 = vmatprep.subr.bf16.mxu0 %v706
    %1002 = vmatpush1.bf16.msra.mxu0 %v705
    %1003 = vmatprep.subr.bf16.mxu0 %v714
    %1004 = vmatpush1.bf16.msra.mxu0 %v713
    %1005 = vmatprep.subr.bf16.mxu0 %v722
    %1006 = vmatpush1.bf16.msra.mxu0 %v721
    %1007 = vmatprep.subr.bf16.mxu0 %v730
    %1008 = vmatpush1.bf16.msra.mxu0 %v729
    %1009 = vmatprep.subr.bf16.mxu0 %v738
    %1010 = vmatpush1.bf16.msra.mxu0 %v737
    %1011 = vmatprep.subr.bf16.mxu0 %v746
    %1012 = vmatpush1.bf16.msra.mxu0 %v745
    %1013 = vmatprep.subr.bf16.mxu0 %v754
    %1014 = vmatpush1.bf16.msra.mxu0 %v753
    %1015 = vmatprep.subr.bf16.mxu0 %v762
    %1016 = vmatpush1.bf16.msra.mxu0 %v761
    %1017 = vmatprep.subr.bf16.mxu0 %v770
    %1018 = vmatpush1.bf16.msra.mxu0 %v769
    %1019 = vmatprep.mubr.bf16.mxu0 %v258
    %1020 = vmatmul.mubr.bf16.gmra.mrb[0].mxu0 %v257
    %v1021 = vpop.f32.mrb[0].mxu0
    %v1022 = vadd.f32 %v230, %v1021
    %v1023 = vpop.f32.mrb[0].mxu0
    %v1024 = vadd.f32 %v234, %v1023
    %v1025 = vpop.f32.mrb[0].mxu0
    %v1026 = vadd.f32 %v230, %v1025
    %v1027 = vpop.f32.mrb[0].mxu0
    %v1028 = vadd.f32 %v234, %v1027
    %1029 = vdwg.mxu0
    %1030 = vmatprep.subr.bf16.mxu0 %v652
    %1031 = vmatpush1.bf16.msra.mxu0 %v651
    %1032 = vmatprep.subr.bf16.mxu0 %v660
    %1033 = vmatpush1.bf16.msra.mxu0 %v659
    %1034 = vmatprep.subr.bf16.mxu0 %v668
    %1035 = vmatpush1.bf16.msra.mxu0 %v667
    %1036 = vmatprep.subr.bf16.mxu0 %v676
    %1037 = vmatpush1.bf16.msra.mxu0 %v675
    %1038 = vmatprep.subr.bf16.mxu0 %v684
    %1039 = vmatpush1.bf16.msra.mxu0 %v683
    %1040 = vmatprep.subr.bf16.mxu0 %v692
    %1041 = vmatpush1.bf16.msra.mxu0 %v691
    %1042 = vmatprep.subr.bf16.mxu0 %v700
    %1043 = vmatpush1.bf16.msra.mxu0 %v699
    %1044 = vmatprep.subr.bf16.mxu0 %v708
    %1045 = vmatpush1.bf16.msra.mxu0 %v707
    %1046 = vmatprep.subr.bf16.mxu0 %v716
    %1047 = vmatpush1.bf16.msra.mxu0 %v715
    %1048 = vmatprep.subr.bf16.mxu0 %v724
    %1049 = vmatpush1.bf16.msra.mxu0 %v723
    %1050 = vmatprep.subr.bf16.mxu0 %v732
    %1051 = vmatpush1.bf16.msra.mxu0 %v731
    %1052 = vmatprep.subr.bf16.mxu0 %v740
    %1053 = vmatpush1.bf16.msra.mxu0 %v739
    %1054 = vmatprep.subr.bf16.mxu0 %v748
    %1055 = vmatpush1.bf16.msra.mxu0 %v747
    %1056 = vmatprep.subr.bf16.mxu0 %v756
    %1057 = vmatpush1.bf16.msra.mxu0 %v755
    %1058 = vmatprep.subr.bf16.mxu0 %v764
    %1059 = vmatpush1.bf16.msra.mxu0 %v763
    %1060 = vmatprep.subr.bf16.mxu0 %v772
    %1061 = vmatpush1.bf16.msra.mxu0 %v771
    %1062 = vmatprep.mubr.bf16.mxu0 %v258
    %1063 = vmatmul.mubr.bf16.gmra.mrb[0].mxu0 %v257
    %v1064 = vpop.f32.mrb[0].mxu0
    %v1065 = vadd.f32 %v238, %v1064
    %v1066 = vpop.f32.mrb[0].mxu0
    %v1067 = vadd.f32 %v242, %v1066
    %v1068 = vpop.f32.mrb[0].mxu0
    %v1069 = vadd.f32 %v238, %v1068
    %v1070 = vpop.f32.mrb[0].mxu0
    %v1071 = vadd.f32 %v242, %v1070
    %1072 = vdwg.mxu0
    %v1073 = vmax.f32 %v936, 0.0
    %v1074 = vmax.f32 %v938, 0.0
    %v1075 = vmax.f32 %v979, 0.0
    %v1076 = vmax.f32 %v981, 0.0
    %v1077 = vmax.f32 %v1022, 0.0
    %v1078 = vmax.f32 %v1024, 0.0
    %v1079 = vmax.f32 %v1065, 0.0
    %v1080 = vmax.f32 %v1067, 0.0
    %v1081 = vmax.f32 %v940, 0.0
    %v1082 = vmax.f32 %v942, 0.0
    %v1083 = vmax.f32 %v983, 0.0
    %v1084 = vmax.f32 %v985, 0.0
    %v1085 = vmax.f32 %v1026, 0.0
    %v1086 = vmax.f32 %v1028, 0.0
    %v1087 = vmax.f32 %v1069, 0.0
    %v1088 = vmax.f32 %v1071, 0.0
    %v1089 = vpack.c.bf16 %v1081, %v1073
    %v1090 = vpack.c.bf16 %v1082, %v1074
    %v1091 = vpack.c.bf16 %v1083, %v1075
    %v1092 = vpack.c.bf16 %v1084, %v1076
    %v1093 = vpack.c.bf16 %v1085, %v1077
    %v1094 = vpack.c.bf16 %v1086, %v1078
    %v1095 = vpack.c.bf16 %v1087, %v1079
    %v1096 = vpack.c.bf16 %v1088, %v1080
    %v1097 = vld [vmem:[#allocation8] sm:$0xff]
    %v1098 = vld [vmem:[#allocation8 + $0x8] sm:$0xff]
    %v1099 = vld [vmem:[#allocation8 + $0x10] sm:$0xff]
    %v1100 = vld [vmem:[#allocation8 + $0x18] sm:$0xff]
    %v1101 = vld [vmem:[#allocation8 + $0x20] sm:$0xff]
    %v1102 = vld [vmem:[#allocation8 + $0x28] sm:$0xff]
    %v1103 = vld [vmem:[#allocation8 + $0x30] sm:$0xff]
    %v1104 = vld [vmem:[#allocation8 + $0x38] sm:$0xff]
    %v1105 = vld [vmem:[#allocation8 + $0x40] sm:$0xff]
    %v1106 = vld [vmem:[#allocation8 + $0x48] sm:$0xff]
    %v1107 = vld [vmem:[#allocation8 + $0x50] sm:$0xff]
    %v1108 = vld [vmem:[#allocation8 + $0x58] sm:$0xff]
    %v1109 = vld [vmem:[#allocation8 + $0x60] sm:$0xff]
    %v1110 = vld [vmem:[#allocation8 + $0x68] sm:$0xff]
    %v1111 = vld [vmem:[#allocation8 + $0x70] sm:$0xff]
    %v1112 = vld [vmem:[#allocation8 + $0x78] sm:$0xff]
    %v1113 = vld [vmem:[#allocation8 + $0x80] sm:$0xff]
    %v1114 = vld [vmem:[#allocation8 + $0x88] sm:$0xff]
    %v1115 = vld [vmem:[#allocation8 + $0x90] sm:$0xff]
    %v1116 = vld [vmem:[#allocation8 + $0x98] sm:$0xff]
    %v1117 = vld [vmem:[#allocation8 + $0xa0] sm:$0xff]
    %v1118 = vld [vmem:[#allocation8 + $0xa8] sm:$0xff]
    %v1119 = vld [vmem:[#allocation8 + $0xb0] sm:$0xff]
    %v1120 = vld [vmem:[#allocation8 + $0xb8] sm:$0xff]
    %v1121 = vld [vmem:[#allocation8 + $0xc0] sm:$0xff]
    %v1122 = vld [vmem:[#allocation8 + $0xc8] sm:$0xff]
    %v1123 = vld [vmem:[#allocation8 + $0xd0] sm:$0xff]
    %v1124 = vld [vmem:[#allocation8 + $0xd8] sm:$0xff]
    %v1125 = vld [vmem:[#allocation8 + $0xe0] sm:$0xff]
    %v1126 = vld [vmem:[#allocation8 + $0xe8] sm:$0xff]
    %v1127 = vld [vmem:[#allocation8 + $0xf0] sm:$0xff]
    %v1128 = vld [vmem:[#allocation8 + $0xf8] sm:$0xff]
    %v1129 = vld [vmem:[#allocation8 + $0x100] sm:$0xff]
    %v1130 = vld [vmem:[#allocation8 + $0x108] sm:$0xff]
    %v1131 = vld [vmem:[#allocation8 + $0x110] sm:$0xff]
    %v1132 = vld [vmem:[#allocation8 + $0x118] sm:$0xff]
    %v1133 = vld [vmem:[#allocation8 + $0x120] sm:$0xff]
    %v1134 = vld [vmem:[#allocation8 + $0x128] sm:$0xff]
    %v1135 = vld [vmem:[#allocation8 + $0x130] sm:$0xff]
    %v1136 = vld [vmem:[#allocation8 + $0x138] sm:$0xff]
    %v1137 = vld [vmem:[#allocation8 + $0x140] sm:$0xff]
    %v1138 = vld [vmem:[#allocation8 + $0x148] sm:$0xff]
    %v1139 = vld [vmem:[#allocation8 + $0x150] sm:$0xff]
    %v1140 = vld [vmem:[#allocation8 + $0x158] sm:$0xff]
    %v1141 = vld [vmem:[#allocation8 + $0x160] sm:$0xff]
    %v1142 = vld [vmem:[#allocation8 + $0x168] sm:$0xff]
    %v1143 = vld [vmem:[#allocation8 + $0x170] sm:$0xff]
    %v1144 = vld [vmem:[#allocation8 + $0x178] sm:$0xff]
    %v1145 = vld [vmem:[#allocation8 + $0x180] sm:$0xff]
    %v1146 = vld [vmem:[#allocation8 + $0x188] sm:$0xff]
    %v1147 = vld [vmem:[#allocation8 + $0x190] sm:$0xff]
    %v1148 = vld [vmem:[#allocation8 + $0x198] sm:$0xff]
    %v1149 = vld [vmem:[#allocation8 + $0x1a0] sm:$0xff]
    %v1150 = vld [vmem:[#allocation8 + $0x1a8] sm:$0xff]
    %v1151 = vld [vmem:[#allocation8 + $0x1b0] sm:$0xff]
    %v1152 = vld [vmem:[#allocation8 + $0x1b8] sm:$0xff]
    %v1153 = vld [vmem:[#allocation8 + $0x1c0] sm:$0xff]
    %v1154 = vld [vmem:[#allocation8 + $0x1c8] sm:$0xff]
    %v1155 = vld [vmem:[#allocation8 + $0x1d0] sm:$0xff]
    %v1156 = vld [vmem:[#allocation8 + $0x1d8] sm:$0xff]
    %v1157 = vld [vmem:[#allocation8 + $0x1e0] sm:$0xff]
    %v1158 = vld [vmem:[#allocation8 + $0x1e8] sm:$0xff]
    %v1159 = vld [vmem:[#allocation8 + $0x1f0] sm:$0xff]
    %v1160 = vld [vmem:[#allocation8 + $0x1f8] sm:$0xff]
    %v1161 = vld [vmem:[#allocation8 + $0x200] sm:$0xff]
    %v1162 = vld [vmem:[#allocation8 + $0x208] sm:$0xff]
    %v1163 = vld [vmem:[#allocation8 + $0x210] sm:$0xff]
    %v1164 = vld [vmem:[#allocation8 + $0x218] sm:$0xff]
    %v1165 = vld [vmem:[#allocation8 + $0x220] sm:$0xff]
    %v1166 = vld [vmem:[#allocation8 + $0x228] sm:$0xff]
    %v1167 = vld [vmem:[#allocation8 + $0x230] sm:$0xff]
    %v1168 = vld [vmem:[#allocation8 + $0x238] sm:$0xff]
    %v1169 = vld [vmem:[#allocation8 + $0x240] sm:$0xff]
    %v1170 = vld [vmem:[#allocation8 + $0x248] sm:$0xff]
    %v1171 = vld [vmem:[#allocation8 + $0x250] sm:$0xff]
    %v1172 = vld [vmem:[#allocation8 + $0x258] sm:$0xff]
    %v1173 = vld [vmem:[#allocation8 + $0x260] sm:$0xff]
    %v1174 = vld [vmem:[#allocation8 + $0x268] sm:$0xff]
    %v1175 = vld [vmem:[#allocation8 + $0x270] sm:$0xff]
    %v1176 = vld [vmem:[#allocation8 + $0x278] sm:$0xff]
    %v1177 = vld [vmem:[#allocation8 + $0x280] sm:$0xff]
    %v1178 = vld [vmem:[#allocation8 + $0x288] sm:$0xff]
    %v1179 = vld [vmem:[#allocation8 + $0x290] sm:$0xff]
    %v1180 = vld [vmem:[#allocation8 + $0x298] sm:$0xff]
    %v1181 = vld [vmem:[#allocation8 + $0x2a0] sm:$0xff]
    %v1182 = vld [vmem:[#allocation8 + $0x2a8] sm:$0xff]
    %v1183 = vld [vmem:[#allocation8 + $0x2b0] sm:$0xff]
    %v1184 = vld [vmem:[#allocation8 + $0x2b8] sm:$0xff]
    %v1185 = vld [vmem:[#allocation8 + $0x2c0] sm:$0xff]
    %v1186 = vld [vmem:[#allocation8 + $0x2c8] sm:$0xff]
    %v1187 = vld [vmem:[#allocation8 + $0x2d0] sm:$0xff]
    %v1188 = vld [vmem:[#allocation8 + $0x2d8] sm:$0xff]
    %v1189 = vld [vmem:[#allocation8 + $0x2e0] sm:$0xff]
    %v1190 = vld [vmem:[#allocation8 + $0x2e8] sm:$0xff]
    %v1191 = vld [vmem:[#allocation8 + $0x2f0] sm:$0xff]
    %v1192 = vld [vmem:[#allocation8 + $0x2f8] sm:$0xff]
    %v1193 = vld [vmem:[#allocation8 + $0x300] sm:$0xff]
    %v1194 = vld [vmem:[#allocation8 + $0x308] sm:$0xff]
    %v1195 = vld [vmem:[#allocation8 + $0x310] sm:$0xff]
    %v1196 = vld [vmem:[#allocation8 + $0x318] sm:$0xff]
    %v1197 = vld [vmem:[#allocation8 + $0x320] sm:$0xff]
    %v1198 = vld [vmem:[#allocation8 + $0x328] sm:$0xff]
    %v1199 = vld [vmem:[#allocation8 + $0x330] sm:$0xff]
    %v1200 = vld [vmem:[#allocation8 + $0x338] sm:$0xff]
    %v1201 = vld [vmem:[#allocation8 + $0x340] sm:$0xff]
    %v1202 = vld [vmem:[#allocation8 + $0x348] sm:$0xff]
    %v1203 = vld [vmem:[#allocation8 + $0x350] sm:$0xff]
    %v1204 = vld [vmem:[#allocation8 + $0x358] sm:$0xff]
    %v1205 = vld [vmem:[#allocation8 + $0x360] sm:$0xff]
    %v1206 = vld [vmem:[#allocation8 + $0x368] sm:$0xff]
    %v1207 = vld [vmem:[#allocation8 + $0x370] sm:$0xff]
    %v1208 = vld [vmem:[#allocation8 + $0x378] sm:$0xff]
    %v1209 = vld [vmem:[#allocation8 + $0x380] sm:$0xff]
    %v1210 = vld [vmem:[#allocation8 + $0x388] sm:$0xff]
    %v1211 = vld [vmem:[#allocation8 + $0x390] sm:$0xff]
    %v1212 = vld [vmem:[#allocation8 + $0x398] sm:$0xff]
    %v1213 = vld [vmem:[#allocation8 + $0x3a0] sm:$0xff]
    %v1214 = vld [vmem:[#allocation8 + $0x3a8] sm:$0xff]
    %v1215 = vld [vmem:[#allocation8 + $0x3b0] sm:$0xff]
    %v1216 = vld [vmem:[#allocation8 + $0x3b8] sm:$0xff]
    %v1217 = vld [vmem:[#allocation8 + $0x3c0] sm:$0xff]
    %v1218 = vld [vmem:[#allocation8 + $0x3c8] sm:$0xff]
    %v1219 = vld [vmem:[#allocation8 + $0x3d0] sm:$0xff]
    %v1220 = vld [vmem:[#allocation8 + $0x3d8] sm:$0xff]
    %v1221 = vld [vmem:[#allocation8 + $0x3e0] sm:$0xff]
    %v1222 = vld [vmem:[#allocation8 + $0x3e8] sm:$0xff]
    %v1223 = vld [vmem:[#allocation8 + $0x3f0] sm:$0xff]
    %v1224 = vld [vmem:[#allocation8 + $0x3f8] sm:$0xff]
    %v1225 = vld [vmem:[%s5] sm:$0x3]
    %v1227 = vlaneseq
    %v1228 = vshrl.u32 %v1227, 7
    %v1229 = vsub.s32 0, %v1228
    %v1230 = vrot.slane %v1225, %v1229
    %v1231 = vlaneseq
    %v1232 = vshrl.u32 %v1231, 7
    %v1233 = vsub.s32 1, %v1232
    %v1234 = vrot.slane %v1225, %v1233
    %v1365 = vunpack.c.l.b16 %v1097
    %v1366 = vunpack.c.h.b16 %v1097
    %v1367 = vunpack.c.l.b16 %v1098
    %v1368 = vunpack.c.h.b16 %v1098
    %v1369 = vunpack.c.l.b16 %v1099
    %v1370 = vunpack.c.h.b16 %v1099
    %v1371 = vunpack.c.l.b16 %v1100
    %v1372 = vunpack.c.h.b16 %v1100
    %v1373 = vunpack.c.l.b16 %v1101
    %v1374 = vunpack.c.h.b16 %v1101
    %v1375 = vunpack.c.l.b16 %v1102
    %v1376 = vunpack.c.h.b16 %v1102
    %v1377 = vunpack.c.l.b16 %v1103
    %v1378 = vunpack.c.h.b16 %v1103
    %v1379 = vunpack.c.l.b16 %v1104
    %v1380 = vunpack.c.h.b16 %v1104
    %v1381 = vunpack.c.l.b16 %v1105
    %v1382 = vunpack.c.h.b16 %v1105
    %v1383 = vunpack.c.l.b16 %v1106
    %v1384 = vunpack.c.h.b16 %v1106
    %v1385 = vunpack.c.l.b16 %v1107
    %v1386 = vunpack.c.h.b16 %v1107
    %v1387 = vunpack.c.l.b16 %v1108
    %v1388 = vunpack.c.h.b16 %v1108
    %v1389 = vunpack.c.l.b16 %v1109
    %v1390 = vunpack.c.h.b16 %v1109
    %v1391 = vunpack.c.l.b16 %v1110
    %v1392 = vunpack.c.h.b16 %v1110
    %v1393 = vunpack.c.l.b16 %v1111
    %v1394 = vunpack.c.h.b16 %v1111
    %v1395 = vunpack.c.l.b16 %v1112
    %v1396 = vunpack.c.h.b16 %v1112
    %v1397 = vunpack.c.l.b16 %v1113
    %v1398 = vunpack.c.h.b16 %v1113
    %v1399 = vunpack.c.l.b16 %v1114
    %v1400 = vunpack.c.h.b16 %v1114
    %v1401 = vunpack.c.l.b16 %v1115
    %v1402 = vunpack.c.h.b16 %v1115
    %v1403 = vunpack.c.l.b16 %v1116
    %v1404 = vunpack.c.h.b16 %v1116
    %v1405 = vunpack.c.l.b16 %v1117
    %v1406 = vunpack.c.h.b16 %v1117
    %v1407 = vunpack.c.l.b16 %v1118
    %v1408 = vunpack.c.h.b16 %v1118
    %v1409 = vunpack.c.l.b16 %v1119
    %v1410 = vunpack.c.h.b16 %v1119
    %v1411 = vunpack.c.l.b16 %v1120
    %v1412 = vunpack.c.h.b16 %v1120
    %v1413 = vunpack.c.l.b16 %v1121
    %v1414 = vunpack.c.h.b16 %v1121
    %v1415 = vunpack.c.l.b16 %v1122
    %v1416 = vunpack.c.h.b16 %v1122
    %v1417 = vunpack.c.l.b16 %v1123
    %v1418 = vunpack.c.h.b16 %v1123
    %v1419 = vunpack.c.l.b16 %v1124
    %v1420 = vunpack.c.h.b16 %v1124
    %v1421 = vunpack.c.l.b16 %v1125
    %v1422 = vunpack.c.h.b16 %v1125
    %v1423 = vunpack.c.l.b16 %v1126
    %v1424 = vunpack.c.h.b16 %v1126
    %v1425 = vunpack.c.l.b16 %v1127
    %v1426 = vunpack.c.h.b16 %v1127
    %v1427 = vunpack.c.l.b16 %v1128
    %v1428 = vunpack.c.h.b16 %v1128
    %v1429 = vunpack.c.l.b16 %v1129
    %v1430 = vunpack.c.h.b16 %v1129
    %v1431 = vunpack.c.l.b16 %v1130
    %v1432 = vunpack.c.h.b16 %v1130
    %v1433 = vunpack.c.l.b16 %v1131
    %v1434 = vunpack.c.h.b16 %v1131
    %v1435 = vunpack.c.l.b16 %v1132
    %v1436 = vunpack.c.h.b16 %v1132
    %v1437 = vunpack.c.l.b16 %v1133
    %v1438 = vunpack.c.h.b16 %v1133
    %v1439 = vunpack.c.l.b16 %v1134
    %v1440 = vunpack.c.h.b16 %v1134
    %v1441 = vunpack.c.l.b16 %v1135
    %v1442 = vunpack.c.h.b16 %v1135
    %v1443 = vunpack.c.l.b16 %v1136
    %v1444 = vunpack.c.h.b16 %v1136
    %v1445 = vunpack.c.l.b16 %v1137
    %v1446 = vunpack.c.h.b16 %v1137
    %v1447 = vunpack.c.l.b16 %v1138
    %v1448 = vunpack.c.h.b16 %v1138
    %v1449 = vunpack.c.l.b16 %v1139
    %v1450 = vunpack.c.h.b16 %v1139
    %v1451 = vunpack.c.l.b16 %v1140
    %v1452 = vunpack.c.h.b16 %v1140
    %v1453 = vunpack.c.l.b16 %v1141
    %v1454 = vunpack.c.h.b16 %v1141
    %v1455 = vunpack.c.l.b16 %v1142
    %v1456 = vunpack.c.h.b16 %v1142
    %v1457 = vunpack.c.l.b16 %v1143
    %v1458 = vunpack.c.h.b16 %v1143
    %v1459 = vunpack.c.l.b16 %v1144
    %v1460 = vunpack.c.h.b16 %v1144
    %v1461 = vunpack.c.l.b16 %v1145
    %v1462 = vunpack.c.h.b16 %v1145
    %v1463 = vunpack.c.l.b16 %v1146
    %v1464 = vunpack.c.h.b16 %v1146
    %v1465 = vunpack.c.l.b16 %v1147
    %v1466 = vunpack.c.h.b16 %v1147
    %v1467 = vunpack.c.l.b16 %v1148
    %v1468 = vunpack.c.h.b16 %v1148
    %v1469 = vunpack.c.l.b16 %v1149
    %v1470 = vunpack.c.h.b16 %v1149
    %v1471 = vunpack.c.l.b16 %v1150
    %v1472 = vunpack.c.h.b16 %v1150
    %v1473 = vunpack.c.l.b16 %v1151
    %v1474 = vunpack.c.h.b16 %v1151
    %v1475 = vunpack.c.l.b16 %v1152
    %v1476 = vunpack.c.h.b16 %v1152
    %v1477 = vunpack.c.l.b16 %v1153
    %v1478 = vunpack.c.h.b16 %v1153
    %v1479 = vunpack.c.l.b16 %v1154
    %v1480 = vunpack.c.h.b16 %v1154
    %v1481 = vunpack.c.l.b16 %v1155
    %v1482 = vunpack.c.h.b16 %v1155
    %v1483 = vunpack.c.l.b16 %v1156
    %v1484 = vunpack.c.h.b16 %v1156
    %v1485 = vunpack.c.l.b16 %v1157
    %v1486 = vunpack.c.h.b16 %v1157
    %v1487 = vunpack.c.l.b16 %v1158
    %v1488 = vunpack.c.h.b16 %v1158
    %v1489 = vunpack.c.l.b16 %v1159
    %v1490 = vunpack.c.h.b16 %v1159
    %v1491 = vunpack.c.l.b16 %v1160
    %v1492 = vunpack.c.h.b16 %v1160
    %v1493 = vunpack.c.l.b16 %v1161
    %v1494 = vunpack.c.h.b16 %v1161
    %v1495 = vunpack.c.l.b16 %v1162
    %v1496 = vunpack.c.h.b16 %v1162
    %v1497 = vunpack.c.l.b16 %v1163
    %v1498 = vunpack.c.h.b16 %v1163
    %v1499 = vunpack.c.l.b16 %v1164
    %v1500 = vunpack.c.h.b16 %v1164
    %v1501 = vunpack.c.l.b16 %v1165
    %v1502 = vunpack.c.h.b16 %v1165
    %v1503 = vunpack.c.l.b16 %v1166
    %v1504 = vunpack.c.h.b16 %v1166
    %v1505 = vunpack.c.l.b16 %v1167
    %v1506 = vunpack.c.h.b16 %v1167
    %v1507 = vunpack.c.l.b16 %v1168
    %v1508 = vunpack.c.h.b16 %v1168
    %v1509 = vunpack.c.l.b16 %v1169
    %v1510 = vunpack.c.h.b16 %v1169
    %v1511 = vunpack.c.l.b16 %v1170
    %v1512 = vunpack.c.h.b16 %v1170
    %v1513 = vunpack.c.l.b16 %v1171
    %v1514 = vunpack.c.h.b16 %v1171
    %v1515 = vunpack.c.l.b16 %v1172
    %v1516 = vunpack.c.h.b16 %v1172
    %v1517 = vunpack.c.l.b16 %v1173
    %v1518 = vunpack.c.h.b16 %v1173
    %v1519 = vunpack.c.l.b16 %v1174
    %v1520 = vunpack.c.h.b16 %v1174
    %v1521 = vunpack.c.l.b16 %v1175
    %v1522 = vunpack.c.h.b16 %v1175
    %v1523 = vunpack.c.l.b16 %v1176
    %v1524 = vunpack.c.h.b16 %v1176
    %v1525 = vunpack.c.l.b16 %v1177
    %v1526 = vunpack.c.h.b16 %v1177
    %v1527 = vunpack.c.l.b16 %v1178
    %v1528 = vunpack.c.h.b16 %v1178
    %v1529 = vunpack.c.l.b16 %v1179
    %v1530 = vunpack.c.h.b16 %v1179
    %v1531 = vunpack.c.l.b16 %v1180
    %v1532 = vunpack.c.h.b16 %v1180
    %v1533 = vunpack.c.l.b16 %v1181
    %v1534 = vunpack.c.h.b16 %v1181
    %v1535 = vunpack.c.l.b16 %v1182
    %v1536 = vunpack.c.h.b16 %v1182
    %v1537 = vunpack.c.l.b16 %v1183
    %v1538 = vunpack.c.h.b16 %v1183
    %v1539 = vunpack.c.l.b16 %v1184
    %v1540 = vunpack.c.h.b16 %v1184
    %v1541 = vunpack.c.l.b16 %v1185
    %v1542 = vunpack.c.h.b16 %v1185
    %v1543 = vunpack.c.l.b16 %v1186
    %v1544 = vunpack.c.h.b16 %v1186
    %v1545 = vunpack.c.l.b16 %v1187
    %v1546 = vunpack.c.h.b16 %v1187
    %v1547 = vunpack.c.l.b16 %v1188
    %v1548 = vunpack.c.h.b16 %v1188
    %v1549 = vunpack.c.l.b16 %v1189
    %v1550 = vunpack.c.h.b16 %v1189
    %v1551 = vunpack.c.l.b16 %v1190
    %v1552 = vunpack.c.h.b16 %v1190
    %v1553 = vunpack.c.l.b16 %v1191
    %v1554 = vunpack.c.h.b16 %v1191
    %v1555 = vunpack.c.l.b16 %v1192
    %v1556 = vunpack.c.h.b16 %v1192
    %v1557 = vunpack.c.l.b16 %v1193
    %v1558 = vunpack.c.h.b16 %v1193
    %v1559 = vunpack.c.l.b16 %v1194
    %v1560 = vunpack.c.h.b16 %v1194
    %v1561 = vunpack.c.l.b16 %v1195
    %v1562 = vunpack.c.h.b16 %v1195
    %v1563 = vunpack.c.l.b16 %v1196
    %v1564 = vunpack.c.h.b16 %v1196
    %v1565 = vunpack.c.l.b16 %v1197
    %v1566 = vunpack.c.h.b16 %v1197
    %v1567 = vunpack.c.l.b16 %v1198
    %v1568 = vunpack.c.h.b16 %v1198
    %v1569 = vunpack.c.l.b16 %v1199
    %v1570 = vunpack.c.h.b16 %v1199
    %v1571 = vunpack.c.l.b16 %v1200
    %v1572 = vunpack.c.h.b16 %v1200
    %v1573 = vunpack.c.l.b16 %v1201
    %v1574 = vunpack.c.h.b16 %v1201
    %v1575 = vunpack.c.l.b16 %v1202
    %v1576 = vunpack.c.h.b16 %v1202
    %v1577 = vunpack.c.l.b16 %v1203
    %v1578 = vunpack.c.h.b16 %v1203
    %v1579 = vunpack.c.l.b16 %v1204
    %v1580 = vunpack.c.h.b16 %v1204
    %v1581 = vunpack.c.l.b16 %v1205
    %v1582 = vunpack.c.h.b16 %v1205
    %v1583 = vunpack.c.l.b16 %v1206
    %v1584 = vunpack.c.h.b16 %v1206
    %v1585 = vunpack.c.l.b16 %v1207
    %v1586 = vunpack.c.h.b16 %v1207
    %v1587 = vunpack.c.l.b16 %v1208
    %v1588 = vunpack.c.h.b16 %v1208
    %v1589 = vunpack.c.l.b16 %v1209
    %v1590 = vunpack.c.h.b16 %v1209
    %v1591 = vunpack.c.l.b16 %v1210
    %v1592 = vunpack.c.h.b16 %v1210
    %v1593 = vunpack.c.l.b16 %v1211
    %v1594 = vunpack.c.h.b16 %v1211
    %v1595 = vunpack.c.l.b16 %v1212
    %v1596 = vunpack.c.h.b16 %v1212
    %v1597 = vunpack.c.l.b16 %v1213
    %v1598 = vunpack.c.h.b16 %v1213
    %v1599 = vunpack.c.l.b16 %v1214
    %v1600 = vunpack.c.h.b16 %v1214
    %v1601 = vunpack.c.l.b16 %v1215
    %v1602 = vunpack.c.h.b16 %v1215
    %v1603 = vunpack.c.l.b16 %v1216
    %v1604 = vunpack.c.h.b16 %v1216
    %v1605 = vunpack.c.l.b16 %v1217
    %v1606 = vunpack.c.h.b16 %v1217
    %v1607 = vunpack.c.l.b16 %v1218
    %v1608 = vunpack.c.h.b16 %v1218
    %v1609 = vunpack.c.l.b16 %v1219
    %v1610 = vunpack.c.h.b16 %v1219
    %v1611 = vunpack.c.l.b16 %v1220
    %v1612 = vunpack.c.h.b16 %v1220
    %v1613 = vunpack.c.l.b16 %v1221
    %v1614 = vunpack.c.h.b16 %v1221
    %v1615 = vunpack.c.l.b16 %v1222
    %v1616 = vunpack.c.h.b16 %v1222
    %v1617 = vunpack.c.l.b16 %v1223
    %v1618 = vunpack.c.h.b16 %v1223
    %v1619 = vunpack.c.l.b16 %v1224
    %v1620 = vunpack.c.h.b16 %v1224
    %v1621 = vpack.c.b16 %v1367, %v1365
    %v1622 = vpack.c.b16 %v1368, %v1366
    %v1623 = vpack.c.b16 %v1371, %v1369
    %v1624 = vpack.c.b16 %v1372, %v1370
    %v1625 = vpack.c.b16 %v1375, %v1373
    %v1626 = vpack.c.b16 %v1376, %v1374
    %v1627 = vpack.c.b16 %v1379, %v1377
    %v1628 = vpack.c.b16 %v1380, %v1378
    %v1629 = vpack.c.b16 %v1383, %v1381
    %v1630 = vpack.c.b16 %v1384, %v1382
    %v1631 = vpack.c.b16 %v1387, %v1385
    %v1632 = vpack.c.b16 %v1388, %v1386
    %v1633 = vpack.c.b16 %v1391, %v1389
    %v1634 = vpack.c.b16 %v1392, %v1390
    %v1635 = vpack.c.b16 %v1395, %v1393
    %v1636 = vpack.c.b16 %v1396, %v1394
    %v1637 = vpack.c.b16 %v1399, %v1397
    %v1638 = vpack.c.b16 %v1400, %v1398
    %v1639 = vpack.c.b16 %v1403, %v1401
    %v1640 = vpack.c.b16 %v1404, %v1402
    %v1641 = vpack.c.b16 %v1407, %v1405
    %v1642 = vpack.c.b16 %v1408, %v1406
    %v1643 = vpack.c.b16 %v1411, %v1409
    %v1644 = vpack.c.b16 %v1412, %v1410
    %v1645 = vpack.c.b16 %v1415, %v1413
    %v1646 = vpack.c.b16 %v1416, %v1414
    %v1647 = vpack.c.b16 %v1419, %v1417
    %v1648 = vpack.c.b16 %v1420, %v1418
    %v1649 = vpack.c.b16 %v1423, %v1421
    %v1650 = vpack.c.b16 %v1424, %v1422
    %v1651 = vpack.c.b16 %v1427, %v1425
    %v1652 = vpack.c.b16 %v1428, %v1426
    %v1653 = vpack.c.b16 %v1431, %v1429
    %v1654 = vpack.c.b16 %v1432, %v1430
    %v1655 = vpack.c.b16 %v1435, %v1433
    %v1656 = vpack.c.b16 %v1436, %v1434
    %v1657 = vpack.c.b16 %v1439, %v1437
    %v1658 = vpack.c.b16 %v1440, %v1438
    %v1659 = vpack.c.b16 %v1443, %v1441
    %v1660 = vpack.c.b16 %v1444, %v1442
    %v1661 = vpack.c.b16 %v1447, %v1445
    %v1662 = vpack.c.b16 %v1448, %v1446
    %v1663 = vpack.c.b16 %v1451, %v1449
    %v1664 = vpack.c.b16 %v1452, %v1450
    %v1665 = vpack.c.b16 %v1455, %v1453
    %v1666 = vpack.c.b16 %v1456, %v1454
    %v1667 = vpack.c.b16 %v1459, %v1457
    %v1668 = vpack.c.b16 %v1460, %v1458
    %v1669 = vpack.c.b16 %v1463, %v1461
    %v1670 = vpack.c.b16 %v1464, %v1462
    %v1671 = vpack.c.b16 %v1467, %v1465
    %v1672 = vpack.c.b16 %v1468, %v1466
    %v1673 = vpack.c.b16 %v1471, %v1469
    %v1674 = vpack.c.b16 %v1472, %v1470
    %v1675 = vpack.c.b16 %v1475, %v1473
    %v1676 = vpack.c.b16 %v1476, %v1474
    %v1677 = vpack.c.b16 %v1479, %v1477
    %v1678 = vpack.c.b16 %v1480, %v1478
    %v1679 = vpack.c.b16 %v1483, %v1481
    %v1680 = vpack.c.b16 %v1484, %v1482
    %v1681 = vpack.c.b16 %v1487, %v1485
    %v1682 = vpack.c.b16 %v1488, %v1486
    %v1683 = vpack.c.b16 %v1491, %v1489
    %v1684 = vpack.c.b16 %v1492, %v1490
    %v1685 = vpack.c.b16 %v1495, %v1493
    %v1686 = vpack.c.b16 %v1496, %v1494
    %v1687 = vpack.c.b16 %v1499, %v1497
    %v1688 = vpack.c.b16 %v1500, %v1498
    %v1689 = vpack.c.b16 %v1503, %v1501
    %v1690 = vpack.c.b16 %v1504, %v1502
    %v1691 = vpack.c.b16 %v1507, %v1505
    %v1692 = vpack.c.b16 %v1508, %v1506
    %v1693 = vpack.c.b16 %v1511, %v1509
    %v1694 = vpack.c.b16 %v1512, %v1510
    %v1695 = vpack.c.b16 %v1515, %v1513
    %v1696 = vpack.c.b16 %v1516, %v1514
    %v1697 = vpack.c.b16 %v1519, %v1517
    %v1698 = vpack.c.b16 %v1520, %v1518
    %v1699 = vpack.c.b16 %v1523, %v1521
    %v1700 = vpack.c.b16 %v1524, %v1522
    %v1701 = vpack.c.b16 %v1527, %v1525
    %v1702 = vpack.c.b16 %v1528, %v1526
    %v1703 = vpack.c.b16 %v1531, %v1529
    %v1704 = vpack.c.b16 %v1532, %v1530
    %v1705 = vpack.c.b16 %v1535, %v1533
    %v1706 = vpack.c.b16 %v1536, %v1534
    %v1707 = vpack.c.b16 %v1539, %v1537
    %v1708 = vpack.c.b16 %v1540, %v1538
    %v1709 = vpack.c.b16 %v1543, %v1541
    %v1710 = vpack.c.b16 %v1544, %v1542
    %v1711 = vpack.c.b16 %v1547, %v1545
    %v1712 = vpack.c.b16 %v1548, %v1546
    %v1713 = vpack.c.b16 %v1551, %v1549
    %v1714 = vpack.c.b16 %v1552, %v1550
    %v1715 = vpack.c.b16 %v1555, %v1553
    %v1716 = vpack.c.b16 %v1556, %v1554
    %v1717 = vpack.c.b16 %v1559, %v1557
    %v1718 = vpack.c.b16 %v1560, %v1558
    %v1719 = vpack.c.b16 %v1563, %v1561
    %v1720 = vpack.c.b16 %v1564, %v1562
    %v1721 = vpack.c.b16 %v1567, %v1565
    %v1722 = vpack.c.b16 %v1568, %v1566
    %v1723 = vpack.c.b16 %v1571, %v1569
    %v1724 = vpack.c.b16 %v1572, %v1570
    %v1725 = vpack.c.b16 %v1575, %v1573
    %v1726 = vpack.c.b16 %v1576, %v1574
    %v1727 = vpack.c.b16 %v1579, %v1577
    %v1728 = vpack.c.b16 %v1580, %v1578
    %v1729 = vpack.c.b16 %v1583, %v1581
    %v1730 = vpack.c.b16 %v1584, %v1582
    %v1731 = vpack.c.b16 %v1587, %v1585
    %v1732 = vpack.c.b16 %v1588, %v1586
    %v1733 = vpack.c.b16 %v1591, %v1589
    %v1734 = vpack.c.b16 %v1592, %v1590
    %v1735 = vpack.c.b16 %v1595, %v1593
    %v1736 = vpack.c.b16 %v1596, %v1594
    %v1737 = vpack.c.b16 %v1599, %v1597
    %v1738 = vpack.c.b16 %v1600, %v1598
    %v1739 = vpack.c.b16 %v1603, %v1601
    %v1740 = vpack.c.b16 %v1604, %v1602
    %v1741 = vpack.c.b16 %v1607, %v1605
    %v1742 = vpack.c.b16 %v1608, %v1606
    %v1743 = vpack.c.b16 %v1611, %v1609
    %v1744 = vpack.c.b16 %v1612, %v1610
    %v1745 = vpack.c.b16 %v1615, %v1613
    %v1746 = vpack.c.b16 %v1616, %v1614
    %v1747 = vpack.c.b16 %v1619, %v1617
    %v1748 = vpack.c.b16 %v1620, %v1618
    %1877 = vmatprep.subr.bf16.mxu0 %v1622
    %1878 = vmatpush1.bf16.msra.mxu0 %v1621
    %1879 = vmatprep.subr.bf16.mxu0 %v1624
    %1880 = vmatpush1.bf16.msra.mxu0 %v1623
    %1881 = vmatprep.subr.bf16.mxu0 %v1626
    %1882 = vmatpush1.bf16.msra.mxu0 %v1625
    %1883 = vmatprep.subr.bf16.mxu0 %v1628
    %1884 = vmatpush1.bf16.msra.mxu0 %v1627
    %1885 = vmatprep.subr.bf16.mxu0 %v1630
    %1886 = vmatpush1.bf16.msra.mxu0 %v1629
    %1887 = vmatprep.subr.bf16.mxu0 %v1632
    %1888 = vmatpush1.bf16.msra.mxu0 %v1631
    %1889 = vmatprep.subr.bf16.mxu0 %v1634
    %1890 = vmatpush1.bf16.msra.mxu0 %v1633
    %1891 = vmatprep.subr.bf16.mxu0 %v1636
    %1892 = vmatpush1.bf16.msra.mxu0 %v1635
    %1893 = vmatprep.subr.bf16.mxu0 %v1638
    %1894 = vmatpush1.bf16.msra.mxu0 %v1637
    %1895 = vmatprep.subr.bf16.mxu0 %v1640
    %1896 = vmatpush1.bf16.msra.mxu0 %v1639
    %1897 = vmatprep.subr.bf16.mxu0 %v1642
    %1898 = vmatpush1.bf16.msra.mxu0 %v1641
    %1899 = vmatprep.subr.bf16.mxu0 %v1644
    %1900 = vmatpush1.bf16.msra.mxu0 %v1643
    %1901 = vmatprep.subr.bf16.mxu0 %v1646
    %1902 = vmatpush1.bf16.msra.mxu0 %v1645
    %1903 = vmatprep.subr.bf16.mxu0 %v1648
    %1904 = vmatpush1.bf16.msra.mxu0 %v1647
    %1905 = vmatprep.subr.bf16.mxu0 %v1650
    %1906 = vmatpush1.bf16.msra.mxu0 %v1649
    %1907 = vmatprep.subr.bf16.mxu0 %v1652
    %1908 = vmatpush1.bf16.msra.mxu0 %v1651
    %1909 = vmatprep.mubr.bf16.mxu0 %v1090
    %1910 = vmatmul.mubr.bf16.gmra.mrb[0].mxu0 %v1089
    %v1911 = vpop.f32.mrb[0].mxu0
    %v1912 = vadd.f32 %v1230, %v1911
    %v1913 = vpop.f32.mrb[0].mxu0
    %v1914 = vadd.f32 %v1234, %v1913
    %v1915 = vpop.f32.mrb[0].mxu0
    %v1916 = vadd.f32 %v1230, %v1915
    %v1917 = vpop.f32.mrb[0].mxu0
    %v1918 = vadd.f32 %v1234, %v1917
    %1919 = vdwg.mxu0
    %1920 = vmatprep.subr.bf16.mxu0 %v1654
    %1921 = vmatpush1.bf16.msra.mxu0 %v1653
    %1922 = vmatprep.subr.bf16.mxu0 %v1656
    %1923 = vmatpush1.bf16.msra.mxu0 %v1655
    %1924 = vmatprep.subr.bf16.mxu0 %v1658
    %1925 = vmatpush1.bf16.msra.mxu0 %v1657
    %1926 = vmatprep.subr.bf16.mxu0 %v1660
    %1927 = vmatpush1.bf16.msra.mxu0 %v1659
    %1928 = vmatprep.subr.bf16.mxu0 %v1662
    %1929 = vmatpush1.bf16.msra.mxu0 %v1661
    %1930 = vmatprep.subr.bf16.mxu0 %v1664
    %1931 = vmatpush1.bf16.msra.mxu0 %v1663
    %1932 = vmatprep.subr.bf16.mxu0 %v1666
    %1933 = vmatpush1.bf16.msra.mxu0 %v1665
    %1934 = vmatprep.subr.bf16.mxu0 %v1668
    %1935 = vmatpush1.bf16.msra.mxu0 %v1667
    %1936 = vmatprep.subr.bf16.mxu0 %v1670
    %1937 = vmatpush1.bf16.msra.mxu0 %v1669
    %1938 = vmatprep.subr.bf16.mxu0 %v1672
    %1939 = vmatpush1.bf16.msra.mxu0 %v1671
    %1940 = vmatprep.subr.bf16.mxu0 %v1674
    %1941 = vmatpush1.bf16.msra.mxu0 %v1673
    %1942 = vmatprep.subr.bf16.mxu0 %v1676
    %1943 = vmatpush1.bf16.msra.mxu0 %v1675
    %1944 = vmatprep.subr.bf16.mxu0 %v1678
    %1945 = vmatpush1.bf16.msra.mxu0 %v1677
    %1946 = vmatprep.subr.bf16.mxu0 %v1680
    %1947 = vmatpush1.bf16.msra.mxu0 %v1679
    %1948 = vmatprep.subr.bf16.mxu0 %v1682
    %1949 = vmatpush1.bf16.msra.mxu0 %v1681
    %1950 = vmatprep.subr.bf16.mxu0 %v1684
    %1951 = vmatpush1.bf16.msra.mxu0 %v1683
    %1952 = vmatprep.mubr.bf16.mxu0 %v1092
    %1953 = vmatmul.mubr.bf16.gmra.mrb[0].mxu0 %v1091
    %v1954 = vpop.f32.mrb[0].mxu0
    %v1955 = vadd.f32 %v1912, %v1954
    %v1956 = vpop.f32.mrb[0].mxu0
    %v1957 = vadd.f32 %v1914, %v1956
    %v1958 = vpop.f32.mrb[0].mxu0
    %v1959 = vadd.f32 %v1916, %v1958
    %v1960 = vpop.f32.mrb[0].mxu0
    %v1961 = vadd.f32 %v1918, %v1960
    %1962 = vdwg.mxu0
    %1963 = vmatprep.subr.bf16.mxu0 %v1686
    %1964 = vmatpush1.bf16.msra.mxu0 %v1685
    %1965 = vmatprep.subr.bf16.mxu0 %v1688
    %1966 = vmatpush1.bf16.msra.mxu0 %v1687
    %1967 = vmatprep.subr.bf16.mxu0 %v1690
    %1968 = vmatpush1.bf16.msra.mxu0 %v1689
    %1969 = vmatprep.subr.bf16.mxu0 %v1692
    %1970 = vmatpush1.bf16.msra.mxu0 %v1691
    %1971 = vmatprep.subr.bf16.mxu0 %v1694
    %1972 = vmatpush1.bf16.msra.mxu0 %v1693
    %1973 = vmatprep.subr.bf16.mxu0 %v1696
    %1974 = vmatpush1.bf16.msra.mxu0 %v1695
    %1975 = vmatprep.subr.bf16.mxu0 %v1698
    %1976 = vmatpush1.bf16.msra.mxu0 %v1697
    %1977 = vmatprep.subr.bf16.mxu0 %v1700
    %1978 = vmatpush1.bf16.msra.mxu0 %v1699
    %1979 = vmatprep.subr.bf16.mxu0 %v1702
    %1980 = vmatpush1.bf16.msra.mxu0 %v1701
    %1981 = vmatprep.subr.bf16.mxu0 %v1704
    %1982 = vmatpush1.bf16.msra.mxu0 %v1703
    %1983 = vmatprep.subr.bf16.mxu0 %v1706
    %1984 = vmatpush1.bf16.msra.mxu0 %v1705
    %1985 = vmatprep.subr.bf16.mxu0 %v1708
    %1986 = vmatpush1.bf16.msra.mxu0 %v1707
    %1987 = vmatprep.subr.bf16.mxu0 %v1710
    %1988 = vmatpush1.bf16.msra.mxu0 %v1709
    %1989 = vmatprep.subr.bf16.mxu0 %v1712
    %1990 = vmatpush1.bf16.msra.mxu0 %v1711
    %1991 = vmatprep.subr.bf16.mxu0 %v1714
    %1992 = vmatpush1.bf16.msra.mxu0 %v1713
    %1993 = vmatprep.subr.bf16.mxu0 %v1716
    %1994 = vmatpush1.bf16.msra.mxu0 %v1715
    %1995 = vmatprep.mubr.bf16.mxu0 %v1094
    %1996 = vmatmul.mubr.bf16.gmra.mrb[0].mxu0 %v1093
    %v1997 = vpop.f32.mrb[0].mxu0
    %v1998 = vadd.f32 %v1955, %v1997
    %v1999 = vpop.f32.mrb[0].mxu0
    %v2000 = vadd.f32 %v1957, %v1999
    %v2001 = vpop.f32.mrb[0].mxu0
    %v2002 = vadd.f32 %v1959, %v2001
    %v2003 = vpop.f32.mrb[0].mxu0
    %v2004 = vadd.f32 %v1961, %v2003
    %2005 = vdwg.mxu0
    %2006 = vmatprep.subr.bf16.mxu0 %v1718
    %2007 = vmatpush1.bf16.msra.mxu0 %v1717
    %2008 = vmatprep.subr.bf16.mxu0 %v1720
    %2009 = vmatpush1.bf16.msra.mxu0 %v1719
    %2010 = vmatprep.subr.bf16.mxu0 %v1722
    %2011 = vmatpush1.bf16.msra.mxu0 %v1721
    %2012 = vmatprep.subr.bf16.mxu0 %v1724
    %2013 = vmatpush1.bf16.msra.mxu0 %v1723
    %2014 = vmatprep.subr.bf16.mxu0 %v1726
    %2015 = vmatpush1.bf16.msra.mxu0 %v1725
    %2016 = vmatprep.subr.bf16.mxu0 %v1728
    %2017 = vmatpush1.bf16.msra.mxu0 %v1727
    %2018 = vmatprep.subr.bf16.mxu0 %v1730
    %2019 = vmatpush1.bf16.msra.mxu0 %v1729
    %2020 = vmatprep.subr.bf16.mxu0 %v1732
    %2021 = vmatpush1.bf16.msra.mxu0 %v1731
    %2022 = vmatprep.subr.bf16.mxu0 %v1734
    %2023 = vmatpush1.bf16.msra.mxu0 %v1733
    %2024 = vmatprep.subr.bf16.mxu0 %v1736
    %2025 = vmatpush1.bf16.msra.mxu0 %v1735
    %2026 = vmatprep.subr.bf16.mxu0 %v1738
    %2027 = vmatpush1.bf16.msra.mxu0 %v1737
    %2028 = vmatprep.subr.bf16.mxu0 %v1740
    %2029 = vmatpush1.bf16.msra.mxu0 %v1739
    %2030 = vmatprep.subr.bf16.mxu0 %v1742
    %2031 = vmatpush1.bf16.msra.mxu0 %v1741
    %2032 = vmatprep.subr.bf16.mxu0 %v1744
    %2033 = vmatpush1.bf16.msra.mxu0 %v1743
    %2034 = vmatprep.subr.bf16.mxu0 %v1746
    %2035 = vmatpush1.bf16.msra.mxu0 %v1745
    %2036 = vmatprep.subr.bf16.mxu0 %v1748
    %2037 = vmatpush1.bf16.msra.mxu0 %v1747
    %2038 = vmatprep.mubr.bf16.mxu0 %v1096
    %2039 = vmatmul.mubr.bf16.gmra.mrb[0].mxu0 %v1095
    %v2040 = vpop.f32.mrb[0].mxu0
    %v2041 = vadd.f32 %v1998, %v2040
    %v2042 = vpop.f32.mrb[0].mxu0
    %v2043 = vadd.f32 %v2000, %v2042
    %v2044 = vpop.f32.mrb[0].mxu0
    %v2045 = vadd.f32 %v2002, %v2044
    %v2046 = vpop.f32.mrb[0].mxu0
    %v2047 = vadd.f32 %v2004, %v2046
    %2048 = vdwg.mxu0
    %v2049 = vld [vmem:[#allocation2] sm:$0xff]
    %v2050 = vld [vmem:[#allocation2 + $0x8] sm:$0xff]
    %v2051 = vld [vmem:[#allocation2 + $0x10] sm:$0xff]
    %v2052 = vld [vmem:[#allocation2 + $0x18] sm:$0xff]
    %vm2053 = vcmp.ge.u32.totalorder %v2049, 1503238554
    %vm2054 = vcmp.ge.u32.totalorder %v2050, 1503238554
    %vm2055 = vcmp.ge.u32.totalorder %v2051, 1503238554
    %vm2056 = vcmp.ge.u32.totalorder %v2052, 1503238554
    %v2057 = vsel %vm2053, %v2041, 0.0
    %v2058 = vsel %vm2054, %v2043, 0.0
    %v2059 = vsel %vm2055, %v2045, 0.0
    %v2060 = vsel %vm2056, %v2047, 0.0
    %v2061 = vmul.f32 %v2057, 1.5384616
    %v2062 = vmul.f32 %v2058, 1.5384616
    %v2063 = vmul.f32 %v2059, 1.5384616
    %v2064 = vmul.f32 %v2060, 1.5384616
    %2065 = vst [vmem:[#allocation10] sm:$0xff] %v2061
    %2066 = vst [vmem:[#allocation10 + $0x8] sm:$0xff] %v2062
    %2067 = vst [vmem:[#allocation10 + $0x10] sm:$0xff] %v2063
    %2068 = vst [vmem:[#allocation10 + $0x18] sm:$0xff] %v2064
    // Predicated region
    $region42: #{tpu_custom_call.1} parent=1 // pred_check
      _
    $region43: #{tpu_custom_call.1} parent=1 // pred_check_branch
      %2070 = sbr.rel (0) target = $region45
    $region44: #{tpu_custom_call.1} parent=1 // pred_region
      %s2072 = ssub.s32 512, 512
      %2073 = vsyncadd [#allocation4], %s2072
      %s2074 = sshll.u32 [#allocation10], 4
      %s2075 = int_to_ptr.vmem [resolvable:$true] %s2074
      %2080 = dma.vmem_to_hbm [thread:$0]  %s2075, 512, %s6, [#allocation4], 256, 256, 16
    $region45: #{tpu_custom_call.1} parent=1 // pred_fallthru
      _
    // Predicated region
    $region46: #{tpu_custom_call.1} parent=1 // pred_check
      _
    $region47: #{tpu_custom_call.1} parent=1 // pred_check_branch
      %2082 = sbr.rel (0) target = $region49
    $region48: #{tpu_custom_call.1} parent=1 // pred_region
      %2083 = dma.done [#allocation4], 512
    $region49: #{tpu_custom_call.1} parent=1 // pred_fallthru
      _
    %2084 = vsyncpa [#allocation3], 1
    %2085 = vsyncpa [#allocation6], 1
    %2086 = vsyncpa [#allocation9], 1
    %2087 = vsyncpa [#allocation4], 1

// kernel: tpu_custom_call.1
$region0: #{tpu_custom_call.1}
  #allocation0 [shape = 'u32[]', space=smem, size = 0x4, offset = 0x4, fixed_abs, tag = 'smem constant byte address 0x4 - core index']
  #allocation1 [shape = 'u32[144,128]{1,0:T(1,128)}', space=vmem, size = 0x12000, scoped, tag = 'internal scratch']
  %s0 = inlined_call_operand.hbm [shape: u32[16,256], index: 0, kind: input, shape index: {}]
  %s1 = inlined_call_operand.hbm [shape: bf16[16,256], index: 1, kind: input, shape index: {}]
  %s2 = inlined_call_operand.hbm [shape: bf16[256,1024], index: 2, kind: input, shape index: {}]
  %s3 = inlined_call_operand.vmem [shape: f32[1,1024], index: 3, kind: input, shape index: {}]
  %s4 = inlined_call_operand.hbm [shape: bf16[1024,256], index: 4, kind: input, shape index: {}]
  %s5 = inlined_call_operand.vmem [shape: f32[1,256], index: 5, kind: input, shape index: {}]
  %s6 = inlined_call_operand.hbm [shape: f32[16,256], index: 6, kind: output, shape index: {}]
  %s7 = sld [smem:[#allocation0]]
  $region50: #{tpu_custom_call.1} parent=0
    _
  %s9 = ssub.s32 1, %s7
  %s10 = scalar_select 0, %s9, %s7
  $region1: #{tpu_custom_call.1} parent=0
    #allocation2 [shape = 'u8[16384]{0}', space=vmem, size = 0x4000, scoped, tag = 'input window, operand 0, single buffered']
    #allocation3 [shape = 's32[1]{0}', space=sflag, size = 0x4, scoped, tag = 'scoped memory for tpu_custom_call.1']
    #allocation4 [shape = 's32[1]{0}', space=sflag, size = 0x4, scoped, tag = 'scoped memory for tpu_custom_call.1']
    #allocation5 [shape = 'u8[8192]{0}', space=vmem, size = 0x2000, scoped, tag = 'input window, operand 1, single buffered']
    #allocation6 [shape = 's32[1]{0}', space=sflag, size = 0x4, scoped, tag = 'scoped memory for tpu_custom_call.1']
    #allocation7 [shape = 'u8[524288]{0}', space=vmem, size = 0x80000, scoped, tag = 'input window, operand 2, single buffered']
    #allocation8 [shape = 'u8[524288]{0}', space=vmem, size = 0x80000, scoped, tag = 'input window, operand 4, single buffered']
    #allocation9 [shape = 's32[1]{0}', space=sflag, size = 0x4, scoped, tag = 'scoped memory for tpu_custom_call.1']
    #allocation10 [shape = 'u8[16384]{0}', space=vmem, size = 0x4000, scoped, tag = 'output window, operand 0, single buffered']
    %11 = vsyncpa [#allocation3], 0
    %12 = vsyncpa [#allocation6], 0
    %13 = vsyncpa [#allocation9], 0
    %14 = vsyncpa [#allocation4], 0
    // Predicated region
    $region2: #{tpu_custom_call.1} parent=1 // pred_check
      _
    $region3: #{tpu_custom_call.1} parent=1 // pred_check_branch
      %16 = sbr.rel (0) target = $region5
    $region4: #{tpu_custom_call.1} parent=1 // pred_region
      %s18 = ssub.s32 512, 512
      %19 = vsyncadd [#allocation3], %s18
      %s20 = sshll.u32 [#allocation2], 4
      %s21 = int_to_ptr.vmem [resolvable:$true] %s20
      %26 = dma.hbm_to_vmem [thread:$0]  %s0, 512, %s21, [#allocation3], 256, 256, 16
    $region5: #{tpu_custom_call.1} parent=1 // pred_fallthru
      _
    // Predicated region
    $region6: #{tpu_custom_call.1} parent=1 // pred_check
      _
    $region7: #{tpu_custom_call.1} parent=1 // pred_check_branch
      %28 = sbr.rel (0) target = $region9
    $region8: #{tpu_custom_call.1} parent=1 // pred_region
      %s30 = ssub.s32 256, 256
      %31 = vsyncadd [#allocation6], %s30
      %s32 = sshll.u32 [#allocation5], 4
      %s33 = int_to_ptr.vmem [resolvable:$true] %s32
      %38 = dma.hbm_to_vmem [thread:$0]  %s1, 256, %s33, [#allocation6], 128, 128, 8
    $region9: #{tpu_custom_call.1} parent=1 // pred_fallthru
      _
    // Predicated region
    $region10: #{tpu_custom_call.1} parent=1 // pred_check
      _
    $region11: #{tpu_custom_call.1} parent=1 // pred_check_branch
      %40 = sbr.rel (0) target = $region13
    $region12: #{tpu_custom_call.1} parent=1 // pred_region
      %s42 = ssub.s32 16384, 16384
      %43 = vsyncadd [#allocation6], %s42
      %s44 = sshll.u32 [#allocation7], 4
      %s45 = int_to_ptr.vmem [resolvable:$true] %s44
      %50 = dma.hbm_to_vmem [thread:$0]  %s2, 16384, %s45, [#allocation6], 512, 512, 32
    $region13: #{tpu_custom_call.1} parent=1 // pred_fallthru
      _
    // Predicated region
    $region14: #{tpu_custom_call.1} parent=1 // pred_check
      _
    $region15: #{tpu_custom_call.1} parent=1 // pred_check_branch
      %52 = sbr.rel (0) target = $region17
    $region16: #{tpu_custom_call.1} parent=1 // pred_region
      _
    $region17: #{tpu_custom_call.1} parent=1 // pred_fallthru
      _
    // Predicated region
    $region18: #{tpu_custom_call.1} parent=1 // pred_check
      _
    $region19: #{tpu_custom_call.1} parent=1 // pred_check_branch
      %54 = sbr.rel (0) target = $region21
    $region20: #{tpu_custom_call.1} parent=1 // pred_region
      %s56 = ssub.s32 16384, 16384
      %57 = vsyncadd [#allocation9], %s56
      %s58 = sshll.u32 [#allocation8], 4
      %s59 = int_to_ptr.vmem [resolvable:$true] %s58
      %64 = dma.hbm_to_vmem [thread:$0]  %s4, 16384, %s59, [#allocation9], 128, 128, 8
    $region21: #{tpu_custom_call.1} parent=1 // pred_fallthru
      _
    // Predicated region
    $region22: #{tpu_custom_call.1} parent=1 // pred_check
      _
    $region23: #{tpu_custom_call.1} parent=1 // pred_check_branch
      %66 = sbr.rel (0) target = $region25
    $region24: #{tpu_custom_call.1} parent=1 // pred_region
      _
    $region25: #{tpu_custom_call.1} parent=1 // pred_fallthru
      _
    // Predicated region
    $region26: #{tpu_custom_call.1} parent=1 // pred_check
      _
    $region27: #{tpu_custom_call.1} parent=1 // pred_check_branch
      %68 = sbr.rel (0) target = $region29
    $region28: #{tpu_custom_call.1} parent=1 // pred_region
      %69 = dma.done [#allocation3], 512
    $region29: #{tpu_custom_call.1} parent=1 // pred_fallthru
      _
    // Predicated region
    $region30: #{tpu_custom_call.1} parent=1 // pred_check
      _
    $region31: #{tpu_custom_call.1} parent=1 // pred_check_branch
      %71 = sbr.rel (0) target = $region33
    $region32: #{tpu_custom_call.1} parent=1 // pred_region
      %72 = dma.done [#allocation6], 256
    $region33: #{tpu_custom_call.1} parent=1 // pred_fallthru
      _
    // Predicated region
    $region34: #{tpu_custom_call.1} parent=1 // pred_check
      _
    $region35: #{tpu_custom_call.1} parent=1 // pred_check_branch
      %74 = sbr.rel (0) target = $region37
    $region36: #{tpu_custom_call.1} parent=1 // pred_region
      %75 = dma.done [#allocation6], 16384
    $region37: #{tpu_custom_call.1} parent=1 // pred_fallthru
      _
    // Predicated region
    $region38: #{tpu_custom_call.1} parent=1 // pred_check
      _
    $region39: #{tpu_custom_call.1} parent=1 // pred_check_branch
      %77 = sbr.rel (0) target = $region41
    $region40: #{tpu_custom_call.1} parent=1 // pred_region
      %78 = dma.done [#allocation9], 16384
    $region41: #{tpu_custom_call.1} parent=1 // pred_fallthru
      _
    %v79 = vld [vmem:[#allocation5] sm:$0xff]
    %v80 = vld [vmem:[#allocation5 + $0x8] sm:$0xff]
    %v81 = vld [vmem:[#allocation7] sm:$0xff]
    %v82 = vld [vmem:[#allocation7 + $0x8] sm:$0xff]
    %v83 = vld [vmem:[#allocation7 + $0x10] sm:$0xff]
    %v84 = vld [vmem:[#allocation7 + $0x18] sm:$0xff]
    %v85 = vld [vmem:[#allocation7 + $0x20] sm:$0xff]
    %v86 = vld [vmem:[#allocation7 + $0x28] sm:$0xff]
    %v87 = vld [vmem:[#allocation7 + $0x30] sm:$0xff]
    %v88 = vld [vmem:[#allocation7 + $0x38] sm:$0xff]
    %v89 = vld [vmem:[#allocation7 + $0x40] sm:$0xff]
    %v90 = vld [vmem:[#allocation7 + $0x48] sm:$0xff]
    %v91 = vld [vmem:[#allocation7 + $0x50] sm:$0xff]
    %v92 = vld [vmem:[#allocation7 + $0x58] sm:$0xff]
    %v93 = vld [vmem:[#allocation7 + $0x60] sm:$0xff]
    %v94 = vld [vmem:[#allocation7 + $0x68] sm:$0xff]
    %v95 = vld [vmem:[#allocation7 + $0x70] sm:$0xff]
    %v96 = vld [vmem:[#allocation7 + $0x78] sm:$0xff]
    %v97 = vld [vmem:[#allocation7 + $0x80] sm:$0xff]
    %v98 = vld [vmem:[#allocation7 + $0x88] sm:$0xff]
    %v99 = vld [vmem:[#allocation7 + $0x90] sm:$0xff]
    %v100 = vld [vmem:[#allocation7 + $0x98] sm:$0xff]
    %v101 = vld [vmem:[#allocation7 + $0xa0] sm:$0xff]
    %v102 = vld [vmem:[#allocation7 + $0xa8] sm:$0xff]
    %v103 = vld [vmem:[#allocation7 + $0xb0] sm:$0xff]
    %v104 = vld [vmem:[#allocation7 + $0xb8] sm:$0xff]
    %v105 = vld [vmem:[#allocation7 + $0xc0] sm:$0xff]
    %v106 = vld [vmem:[#allocation7 + $0xc8] sm:$0xff]
    %v107 = vld [vmem:[#allocation7 + $0xd0] sm:$0xff]
    %v108 = vld [vmem:[#allocation7 + $0xd8] sm:$0xff]
    %v109 = vld [vmem:[#allocation7 + $0xe0] sm:$0xff]
    %v110 = vld [vmem:[#allocation7 + $0xe8] sm:$0xff]
    %v111 = vld [vmem:[#allocation7 + $0xf0] sm:$0xff]
    %v112 = vld [vmem:[#allocation7 + $0xf8] sm:$0xff]
    %v113 = vld [vmem:[#allocation7 + $0x100] sm:$0xff]
    %v114 = vld [vmem:[#allocation7 + $0x108] sm:$0xff]
    %v115 = vld [vmem:[#allocation7 + $0x110] sm:$0xff]
    %v116 = vld [vmem:[#allocation7 + $0x118] sm:$0xff]
    %v117 = vld [vmem:[#allocation7 + $0x120] sm:$0xff]
    %v118 = vld [vmem:[#allocation7 + $0x128] sm:$0xff]
    %v119 = vld [vmem:[#allocation7 + $0x130] sm:$0xff]
    %v120 = vld [vmem:[#allocation7 + $0x138] sm:$0xff]
    %v121 = vld [vmem:[#allocation7 + $0x140] sm:$0xff]
    %v122 = vld [vmem:[#allocation7 + $0x148] sm:$0xff]
    %v123 = vld [vmem:[#allocation7 + $0x150] sm:$0xff]
    %v124 = vld [vmem:[#allocation7 + $0x158] sm:$0xff]
    %v125 = vld [vmem:[#allocation7 + $0x160] sm:$0xff]
    %v126 = vld [vmem:[#allocation7 + $0x168] sm:$0xff]
    %v127 = vld [vmem:[#allocation7 + $0x170] sm:$0xff]
    %v128 = vld [vmem:[#allocation7 + $0x178] sm:$0xff]
    %v129 = vld [vmem:[#allocation7 + $0x180] sm:$0xff]
    %v130 = vld [vmem:[#allocation7 + $0x188] sm:$0xff]
    %v131 = vld [vmem:[#allocation7 + $0x190] sm:$0xff]
    %v132 = vld [vmem:[#allocation7 + $0x198] sm:$0xff]
    %v133 = vld [vmem:[#allocation7 + $0x1a0] sm:$0xff]
    %v134 = vld [vmem:[#allocation7 + $0x1a8] sm:$0xff]
    %v135 = vld [vmem:[#allocation7 + $0x1b0] sm:$0xff]
    %v136 = vld [vmem:[#allocation7 + $0x1b8] sm:$0xff]
    %v137 = vld [vmem:[#allocation7 + $0x1c0] sm:$0xff]
    %v138 = vld [vmem:[#allocation7 + $0x1c8] sm:$0xff]
    %v139 = vld [vmem:[#allocation7 + $0x1d0] sm:$0xff]
    %v140 = vld [vmem:[#allocation7 + $0x1d8] sm:$0xff]
    %v141 = vld [vmem:[#allocation7 + $0x1e0] sm:$0xff]
    %v142 = vld [vmem:[#allocation7 + $0x1e8] sm:$0xff]
    %v143 = vld [vmem:[#allocation7 + $0x1f0] sm:$0xff]
    %v144 = vld [vmem:[#allocation7 + $0x1f8] sm:$0xff]
    %v145 = vld [vmem:[#allocation7 + $0x200] sm:$0xff]
    %v146 = vld [vmem:[#allocation7 + $0x208] sm:$0xff]
    %v147 = vld [vmem:[#allocation7 + $0x210] sm:$0xff]
    %v148 = vld [vmem:[#allocation7 + $0x218] sm:$0xff]
    %v149 = vld [vmem:[#allocation7 + $0x220] sm:$0xff]
    %v150 = vld [vmem:[#allocation7 + $0x228] sm:$0xff]
    %v151 = vld [vmem:[#allocation7 + $0x230] sm:$0xff]
    %v152 = vld [vmem:[#allocation7 + $0x238] sm:$0xff]
    %v153 = vld [vmem:[#allocation7 + $0x240] sm:$0xff]
    %v154 = vld [vmem:[#allocation7 + $0x248] sm:$0xff]
    %v155 = vld [vmem:[#allocation7 + $0x250] sm:$0xff]
    %v156 = vld [vmem:[#allocation7 + $0x258] sm:$0xff]
    %v157 = vld [vmem:[#allocation7 + $0x260] sm:$0xff]
    %v158 = vld [vmem:[#allocation7 + $0x268] sm:$0xff]
    %v159 = vld [vmem:[#allocation7 + $0x270] sm:$0xff]
    %v160 = vld [vmem:[#allocation7 + $0x278] sm:$0xff]
    %v161 = vld [vmem:[#allocation7 + $0x280] sm:$0xff]
    %v162 = vld [vmem:[#allocation7 + $0x288] sm:$0xff]
    %v163 = vld [vmem:[#allocation7 + $0x290] sm:$0xff]
    %v164 = vld [vmem:[#allocation7 + $0x298] sm:$0xff]
    %v165 = vld [vmem:[#allocation7 + $0x2a0] sm:$0xff]
    %v166 = vld [vmem:[#allocation7 + $0x2a8] sm:$0xff]
    %v167 = vld [vmem:[#allocation7 + $0x2b0] sm:$0xff]
    %v168 = vld [vmem:[#allocation7 + $0x2b8] sm:$0xff]
    %v169 = vld [vmem:[#allocation7 + $0x2c0] sm:$0xff]
    %v170 = vld [vmem:[#allocation7 + $0x2c8] sm:$0xff]
    %v171 = vld [vmem:[#allocation7 + $0x2d0] sm:$0xff]
    %v172 = vld [vmem:[#allocation7 + $0x2d8] sm:$0xff]
    %v173 = vld [vmem:[#allocation7 + $0x2e0] sm:$0xff]
    %v174 = vld [vmem:[#allocation7 + $0x2e8] sm:$0xff]
    %v175 = vld [vmem:[#allocation7 + $0x2f0] sm:$0xff]
    %v176 = vld [vmem:[#allocation7 + $0x2f8] sm:$0xff]
    %v177 = vld [vmem:[#allocation7 + $0x300] sm:$0xff]
    %v178 = vld [vmem:[#allocation7 + $0x308] sm:$0xff]
    %v179 = vld [vmem:[#allocation7 + $0x310] sm:$0xff]
    %v180 = vld [vmem:[#allocation7 + $0x318] sm:$0xff]
    %v181 = vld [vmem:[#allocation7 + $0x320] sm:$0xff]
    %v182 = vld [vmem:[#allocation7 + $0x328] sm:$0xff]
    %v183 = vld [vmem:[#allocation7 + $0x330] sm:$0xff]
    %v184 = vld [vmem:[#allocation7 + $0x338] sm:$0xff]
    %v185 = vld [vmem:[#allocation7 + $0x340] sm:$0xff]
    %v186 = vld [vmem:[#allocation7 + $0x348] sm:$0xff]
    %v187 = vld [vmem:[#allocation7 + $0x350] sm:$0xff]
    %v188 = vld [vmem:[#allocation7 + $0x358] sm:$0xff]
    %v189 = vld [vmem:[#allocation7 + $0x360] sm:$0xff]
    %v190 = vld [vmem:[#allocation7 + $0x368] sm:$0xff]
    %v191 = vld [vmem:[#allocation7 + $0x370] sm:$0xff]
    %v192 = vld [vmem:[#allocation7 + $0x378] sm:$0xff]
    %v193 = vld [vmem:[#allocation7 + $0x380] sm:$0xff]
    %v194 = vld [vmem:[#allocation7 + $0x388] sm:$0xff]
    %v195 = vld [vmem:[#allocation7 + $0x390] sm:$0xff]
    %v196 = vld [vmem:[#allocation7 + $0x398] sm:$0xff]
    %v197 = vld [vmem:[#allocation7 + $0x3a0] sm:$0xff]
    %v198 = vld [vmem:[#allocation7 + $0x3a8] sm:$0xff]
    %v199 = vld [vmem:[#allocation7 + $0x3b0] sm:$0xff]
    %v200 = vld [vmem:[#allocation7 + $0x3b8] sm:$0xff]
    %v201 = vld [vmem:[#allocation7 + $0x3c0] sm:$0xff]
    %v202 = vld [vmem:[#allocation7 + $0x3c8] sm:$0xff]
    %v203 = vld [vmem:[#allocation7 + $0x3d0] sm:$0xff]
    %v204 = vld [vmem:[#allocation7 + $0x3d8] sm:$0xff]
    %v205 = vld [vmem:[#allocation7 + $0x3e0] sm:$0xff]
    %v206 = vld [vmem:[#allocation7 + $0x3e8] sm:$0xff]
    %v207 = vld [vmem:[#allocation7 + $0x3f0] sm:$0xff]
    %v208 = vld [vmem:[#allocation7 + $0x3f8] sm:$0xff]
    %v209 = vld [vmem:[%s3] sm:$0xff]
    %v211 = vlaneseq
    %v212 = vshrl.u32 %v211, 7
    %v213 = vsub.s32 0, %v212
    %v214 = vrot.slane %v209, %v213
    %v215 = vlaneseq
    %v216 = vshrl.u32 %v215, 7
    %v217 = vsub.s32 1, %v216
    %v218 = vrot.slane %v209, %v217
    %v219 = vlaneseq
    %v220 = vshrl.u32 %v219, 7
    %v221 = vsub.s32 2, %v220
    %v222 = vrot.slane %v209, %v221
    %v223 = vlaneseq
    %v224 = vshrl.u32 %v223, 7
    %v225 = vsub.s32 3, %v224
    %v226 = vrot.slane %v209, %v225
    %v227 = vlaneseq
    %v228 = vshrl.u32 %v227, 7
    %v229 = vsub.s32 4, %v228
    %v230 = vrot.slane %v209, %v229
    %v231 = vlaneseq
    %v232 = vshrl.u32 %v231, 7
    %v233 = vsub.s32 5, %v232
    %v234 = vrot.slane %v209, %v233
    %v235 = vlaneseq
    %v236 = vshrl.u32 %v235, 7
    %v237 = vsub.s32 6, %v236
    %v238 = vrot.slane %v209, %v237
    %v239 = vlaneseq
    %v240 = vshrl.u32 %v239, 7
    %v241 = vsub.s32 7, %v240
    %v242 = vrot.slane %v209, %v241
    %v253 = vunpack.c.l.b16 %v79
    %v254 = vunpack.c.h.b16 %v79
    %v255 = vunpack.c.l.b16 %v80
    %v256 = vunpack.c.h.b16 %v80
    %v257 = vpack.c.b16 %v255, %v253
    %v258 = vpack.c.b16 %v256, %v254
    %v389 = vunpack.c.l.b16 %v81
    %v390 = vunpack.c.h.b16 %v81
    %v391 = vunpack.c.l.b16 %v82
    %v392 = vunpack.c.h.b16 %v82
    %v393 = vunpack.c.l.b16 %v83
    %v394 = vunpack.c.h.b16 %v83
    %v395 = vunpack.c.l.b16 %v84
    %v396 = vunpack.c.h.b16 %v84
    %v397 = vunpack.c.l.b16 %v85
    %v398 = vunpack.c.h.b16 %v85
    %v399 = vunpack.c.l.b16 %v86
    %v400 = vunpack.c.h.b16 %v86
    %v401 = vunpack.c.l.b16 %v87
    %v402 = vunpack.c.h.b16 %v87
    %v403 = vunpack.c.l.b16 %v88
    %v404 = vunpack.c.h.b16 %v88
    %v405 = vunpack.c.l.b16 %v89
    %v406 = vunpack.c.h.b16 %v89
    %v407 = vunpack.c.l.b16 %v90
    %v408 = vunpack.c.h.b16 %v90
    %v409 = vunpack.c.l.b16 %v91
    %v410 = vunpack.c.h.b16 %v91
    %v411 = vunpack.c.l.b16 %v92
    %v412 = vunpack.c.h.b16 %v92
    %v413 = vunpack.c.l.b16 %v93
    %v414 = vunpack.c.h.b16 %v93
    %v415 = vunpack.c.l.b16 %v94
    %v416 = vunpack.c.h.b16 %v94
    %v417 = vunpack.c.l.b16 %v95
    %v418 = vunpack.c.h.b16 %v95
    %v419 = vunpack.c.l.b16 %v96
    %v420 = vunpack.c.h.b16 %v96
    %v421 = vunpack.c.l.b16 %v97
    %v422 = vunpack.c.h.b16 %v97
    %v423 = vunpack.c.l.b16 %v98
    %v424 = vunpack.c.h.b16 %v98
    %v425 = vunpack.c.l.b16 %v99
    %v426 = vunpack.c.h.b16 %v99
    %v427 = vunpack.c.l.b16 %v100
    %v428 = vunpack.c.h.b16 %v100
    %v429 = vunpack.c.l.b16 %v101
    %v430 = vunpack.c.h.b16 %v101
    %v431 = vunpack.c.l.b16 %v102
    %v432 = vunpack.c.h.b16 %v102
    %v433 = vunpack.c.l.b16 %v103
    %v434 = vunpack.c.h.b16 %v103
    %v435 = vunpack.c.l.b16 %v104
    %v436 = vunpack.c.h.b16 %v104
    %v437 = vunpack.c.l.b16 %v105
    %v438 = vunpack.c.h.b16 %v105
    %v439 = vunpack.c.l.b16 %v106
    %v440 = vunpack.c.h.b16 %v106
    %v441 = vunpack.c.l.b16 %v107
    %v442 = vunpack.c.h.b16 %v107
    %v443 = vunpack.c.l.b16 %v108
    %v444 = vunpack.c.h.b16 %v108
    %v445 = vunpack.c.l.b16 %v109
    %v446 = vunpack.c.h.b16 %v109
    %v447 = vunpack.c.l.b16 %v110
    %v448 = vunpack.c.h.b16 %v110
    %v449 = vunpack.c.l.b16 %v111
    %v450 = vunpack.c.h.b16 %v111
    %v451 = vunpack.c.l.b16 %v112
    %v452 = vunpack.c.h.b16 %v112
    %v453 = vunpack.c.l.b16 %v113
    %v454 = vunpack.c.h.b16 %v113
    %v455 = vunpack.c.l.b16 %v114
    %v456 = vunpack.c.h.b16 %v114
    %v457 = vunpack.c.l.b16 %v115
    %v458 = vunpack.c.h.b16 %v115
    %v459 = vunpack.c.l.b16 %v116
    %v460 = vunpack.c.h.b16 %v116
    %v461 = vunpack.c.l.b16 %v117
    %v462 = vunpack.c.h.b16 %v117
    %v463 = vunpack.c.l.b16 %v118
    %v464 = vunpack.c.h.b16 %v118
    %v465 = vunpack.c.l.b16 %v119
    %v466 = vunpack.c.h.b16 %v119
    %v467 = vunpack.c.l.b16 %v120
    %v468 = vunpack.c.h.b16 %v120
    %v469 = vunpack.c.l.b16 %v121
    %v470 = vunpack.c.h.b16 %v121
    %v471 = vunpack.c.l.b16 %v122
    %v472 = vunpack.c.h.b16 %v122
    %v473 = vunpack.c.l.b16 %v123
    %v474 = vunpack.c.h.b16 %v123
    %v475 = vunpack.c.l.b16 %v124
    %v476 = vunpack.c.h.b16 %v124
    %v477 = vunpack.c.l.b16 %v125
    %v478 = vunpack.c.h.b16 %v125
    %v479 = vunpack.c.l.b16 %v126
    %v480 = vunpack.c.h.b16 %v126
    %v481 = vunpack.c.l.b16 %v127
    %v482 = vunpack.c.h.b16 %v127
    %v483 = vunpack.c.l.b16 %v128
    %v484 = vunpack.c.h.b16 %v128
    %v485 = vunpack.c.l.b16 %v129
    %v486 = vunpack.c.h.b16 %v129
    %v487 = vunpack.c.l.b16 %v130
    %v488 = vunpack.c.h.b16 %v130
    %v489 = vunpack.c.l.b16 %v131
    %v490 = vunpack.c.h.b16 %v131
    %v491 = vunpack.c.l.b16 %v132
    %v492 = vunpack.c.h.b16 %v132
    %v493 = vunpack.c.l.b16 %v133
    %v494 = vunpack.c.h.b16 %v133
    %v495 = vunpack.c.l.b16 %v134
    %v496 = vunpack.c.h.b16 %v134
    %v497 = vunpack.c.l.b16 %v135
    %v498 = vunpack.c.h.b16 %v135
    %v499 = vunpack.c.l.b16 %v136
    %v500 = vunpack.c.h.b16 %v136
    %v501 = vunpack.c.l.b16 %v137
    %v502 = vunpack.c.h.b16 %v137
    %v503 = vunpack.c.l.b16 %v138
    %v504 = vunpack.c.h.b16 %v138
    %v505 = vunpack.c.l.b16 %v139
    %v506 = vunpack.c.h.b16 %v139
    %v507 = vunpack.c.l.b16 %v140
    %v508 = vunpack.c.h.b16 %v140
    %v509 = vunpack.c.l.b16 %v141
    %v510 = vunpack.c.h.b16 %v141
    %v511 = vunpack.c.l.b16 %v142
    %v512 = vunpack.c.h.b16 %v142
    %v513 = vunpack.c.l.b16 %v143
    %v514 = vunpack.c.h.b16 %v143
    %v515 = vunpack.c.l.b16 %v144
    %v516 = vunpack.c.h.b16 %v144
    %v517 = vunpack.c.l.b16 %v145
    %v518 = vunpack.c.h.b16 %v145
    %v519 = vunpack.c.l.b16 %v146
    %v520 = vunpack.c.h.b16 %v146
    %v521 = vunpack.c.l.b16 %v147
    %v522 = vunpack.c.h.b16 %v147
    %v523 = vunpack.c.l.b16 %v148
    %v524 = vunpack.c.h.b16 %v148
    %v525 = vunpack.c.l.b16 %v149
    %v526 = vunpack.c.h.b16 %v149
    %v527 = vunpack.c.l.b16 %v150
    %v528 = vunpack.c.h.b16 %v150
    %v529 = vunpack.c.l.b16 %v151
    %v530 = vunpack.c.h.b16 %v151
    %v531 = vunpack.c.l.b16 %v152
    %v532 = vunpack.c.h.b16 %v152
    %v533 = vunpack.c.l.b16 %v153
    %v534 = vunpack.c.h.b16 %v153
    %v535 = vunpack.c.l.b16 %v154
    %v536 = vunpack.c.h.b16 %v154
    %v537 = vunpack.c.l.b16 %v155
    %v538 = vunpack.c.h.b16 %v155
    %v539 = vunpack.c.l.b16 %v156
    %v540 = vunpack.c.h.b16 %v156
    %v541 = vunpack.c.l.b16 %v157
    %v542 = vunpack.c.h.b16 %v157
    %v543 = vunpack.c.l.b16 %v158
    %v544 = vunpack.c.h.b16 %v158
    %v545 = vunpack.c.l.b16 %v159
    %v546 = vunpack.c.h.b16 %v159
    %v547 = vunpack.c.l.b16 %v160
    %v548 = vunpack.c.h.b16 %v160
    %v549 = vunpack.c.l.b16 %v161
    %v550 = vunpack.c.h.b16 %v161
    %v551 = vunpack.c.l.b16 %v162
    %v552 = vunpack.c.h.b16 %v162
    %v553 = vunpack.c.l.b16 %v163
    %v554 = vunpack.c.h.b16 %v163
    %v555 = vunpack.c.l.b16 %v164
    %v556 = vunpack.c.h.b16 %v164
    %v557 = vunpack.c.l.b16 %v165
    %v558 = vunpack.c.h.b16 %v165
    %v559 = vunpack.c.l.b16 %v166
    %v560 = vunpack.c.h.b16 %v166
    %v561 = vunpack.c.l.b16 %v167
    %v562 = vunpack.c.h.b16 %v167
    %v563 = vunpack.c.l.b16 %v168
    %v564 = vunpack.c.h.b16 %v168
    %v565 = vunpack.c.l.b16 %v169
    %v566 = vunpack.c.h.b16 %v169
    %v567 = vunpack.c.l.b16 %v170
    %v568 = vunpack.c.h.b16 %v170
    %v569 = vunpack.c.l.b16 %v171
    %v570 = vunpack.c.h.b16 %v171
    %v571 = vunpack.c.l.b16 %v172
    %v572 = vunpack.c.h.b16 %v172
    %v573 = vunpack.c.l.b16 %v173
    %v574 = vunpack.c.h.b16 %v173
    %v575 = vunpack.c.l.b16 %v174
    %v576 = vunpack.c.h.b16 %v174
    %v577 = vunpack.c.l.b16 %v175
    %v578 = vunpack.c.h.b16 %v175
    %v579 = vunpack.c.l.b16 %v176
    %v580 = vunpack.c.h.b16 %v176
    %v581 = vunpack.c.l.b16 %v177
    %v582 = vunpack.c.h.b16 %v177
    %v583 = vunpack.c.l.b16 %v178
    %v584 = vunpack.c.h.b16 %v178
    %v585 = vunpack.c.l.b16 %v179
    %v586 = vunpack.c.h.b16 %v179
    %v587 = vunpack.c.l.b16 %v180
    %v588 = vunpack.c.h.b16 %v180
    %v589 = vunpack.c.l.b16 %v181
    %v590 = vunpack.c.h.b16 %v181
    %v591 = vunpack.c.l.b16 %v182
    %v592 = vunpack.c.h.b16 %v182
    %v593 = vunpack.c.l.b16 %v183
    %v594 = vunpack.c.h.b16 %v183
    %v595 = vunpack.c.l.b16 %v184
    %v596 = vunpack.c.h.b16 %v184
    %v597 = vunpack.c.l.b16 %v185
    %v598 = vunpack.c.h.b16 %v185
    %v599 = vunpack.c.l.b16 %v186
    %v600 = vunpack.c.h.b16 %v186
    %v601 = vunpack.c.l.b16 %v187
    %v602 = vunpack.c.h.b16 %v187
    %v603 = vunpack.c.l.b16 %v188
    %v604 = vunpack.c.h.b16 %v188
    %v605 = vunpack.c.l.b16 %v189
    %v606 = vunpack.c.h.b16 %v189
    %v607 = vunpack.c.l.b16 %v190
    %v608 = vunpack.c.h.b16 %v190
    %v609 = vunpack.c.l.b16 %v191
    %v610 = vunpack.c.h.b16 %v191
    %v611 = vunpack.c.l.b16 %v192
    %v612 = vunpack.c.h.b16 %v192
    %v613 = vunpack.c.l.b16 %v193
    %v614 = vunpack.c.h.b16 %v193
    %v615 = vunpack.c.l.b16 %v194
    %v616 = vunpack.c.h.b16 %v194
    %v617 = vunpack.c.l.b16 %v195
    %v618 = vunpack.c.h.b16 %v195
    %v619 = vunpack.c.l.b16 %v196
    %v620 = vunpack.c.h.b16 %v196
    %v621 = vunpack.c.l.b16 %v197
    %v622 = vunpack.c.h.b16 %v197
    %v623 = vunpack.c.l.b16 %v198
    %v624 = vunpack.c.h.b16 %v198
    %v625 = vunpack.c.l.b16 %v199
    %v626 = vunpack.c.h.b16 %v199
    %v627 = vunpack.c.l.b16 %v200
    %v628 = vunpack.c.h.b16 %v200
    %v629 = vunpack.c.l.b16 %v201
    %v630 = vunpack.c.h.b16 %v201
    %v631 = vunpack.c.l.b16 %v202
    %v632 = vunpack.c.h.b16 %v202
    %v633 = vunpack.c.l.b16 %v203
    %v634 = vunpack.c.h.b16 %v203
    %v635 = vunpack.c.l.b16 %v204
    %v636 = vunpack.c.h.b16 %v204
    %v637 = vunpack.c.l.b16 %v205
    %v638 = vunpack.c.h.b16 %v205
    %v639 = vunpack.c.l.b16 %v206
    %v640 = vunpack.c.h.b16 %v206
    %v641 = vunpack.c.l.b16 %v207
    %v642 = vunpack.c.h.b16 %v207
    %v643 = vunpack.c.l.b16 %v208
    %v644 = vunpack.c.h.b16 %v208
    %v645 = vpack.c.b16 %v397, %v389
    %v646 = vpack.c.b16 %v398, %v390
    %v647 = vpack.c.b16 %v399, %v391
    %v648 = vpack.c.b16 %v400, %v392
    %v649 = vpack.c.b16 %v401, %v393
    %v650 = vpack.c.b16 %v402, %v394
    %v651 = vpack.c.b16 %v403, %v395
    %v652 = vpack.c.b16 %v404, %v396
    %v653 = vpack.c.b16 %v413, %v405
    %v654 = vpack.c.b16 %v414, %v406
    %v655 = vpack.c.b16 %v415, %v407
    %v656 = vpack.c.b16 %v416, %v408
    %v657 = vpack.c.b16 %v417, %v409
    %v658 = vpack.c.b16 %v418, %v410
    %v659 = vpack.c.b16 %v419, %v411
    %v660 = vpack.c.b16 %v420, %v412
    %v661 = vpack.c.b16 %v429, %v421
    %v662 = vpack.c.b16 %v430, %v422
    %v663 = vpack.c.b16 %v431, %v423
    %v664 = vpack.c.b16 %v432, %v424
    %v665 = vpack.c.b16 %v433, %v425
    %v666 = vpack.c.b16 %v434, %v426
    %v667 = vpack.c.b16 %v435, %v427
    %v668 = vpack.c.b16 %v436, %v428
    %v669 = vpack.c.b16 %v445, %v437
    %v670 = vpack.c.b16 %v446, %v438
    %v671 = vpack.c.b16 %v447, %v439
    %v672 = vpack.c.b16 %v448, %v440
    %v673 = vpack.c.b16 %v449, %v441
    %v674 = vpack.c.b16 %v450, %v442
    %v675 = vpack.c.b16 %v451, %v443
    %v676 = vpack.c.b16 %v452, %v444
    %v677 = vpack.c.b16 %v461, %v453
    %v678 = vpack.c.b16 %v462, %v454
    %v679 = vpack.c.b16 %v463, %v455
    %v680 = vpack.c.b16 %v464, %v456
    %v681 = vpack.c.b16 %v465, %v457
    %v682 = vpack.c.b16 %v466, %v458
    %v683 = vpack.c.b16 %v467, %v459
    %v684 = vpack.c.b16 %v468, %v460
    %v685 = vpack.c.b16 %v477, %v469
    %v686 = vpack.c.b16 %v478, %v470
    %v687 = vpack.c.b16 %v479, %v471
    %v688 = vpack.c.b16 %v480, %v472
    %v689 = vpack.c.b16 %v481, %v473
    %v690 = vpack.c.b16 %v482, %v474
    %v691 = vpack.c.b16 %v483, %v475
    %v692 = vpack.c.b16 %v484, %v476
    %v693 = vpack.c.b16 %v493, %v485
    %v694 = vpack.c.b16 %v494, %v486
    %v695 = vpack.c.b16 %v495, %v487
    %v696 = vpack.c.b16 %v496, %v488
    %v697 = vpack.c.b16 %v497, %v489
    %v698 = vpack.c.b16 %v498, %v490
    %v699 = vpack.c.b16 %v499, %v491
    %v700 = vpack.c.b16 %v500, %v492
    %v701 = vpack.c.b16 %v509, %v501
    %v702 = vpack.c.b16 %v510, %v502
    %v703 = vpack.c.b16 %v511, %v503
    %v704 = vpack.c.b16 %v512, %v504
    %v705 = vpack.c.b16 %v513, %v505
    %v706 = vpack.c.b16 %v514, %v506
    %v707 = vpack.c.b16 %v515, %v507
    %v708 = vpack.c.b16 %v516, %v508
    %v709 = vpack.c.b16 %v525, %v517
    %v710 = vpack.c.b16 %v526, %v518
    %v711 = vpack.c.b16 %v527, %v519
    %v712 = vpack.c.b16 %v528, %v520
    %v713 = vpack.c.b16 %v529, %v521
    %v714 = vpack.c.b16 %v530, %v522
    %v715 = vpack.c.b16 %v531, %v523
    %v716 = vpack.c.b16 %v532, %v524
    %v717 = vpack.c.b16 %v541, %v533
    %v718 = vpack.c.b16 %v542, %v534
    %v719 = vpack.c.b16 %v543, %v535
    %v720 = vpack.c.b16 %v544, %v536
    %v721 = vpack.c.b16 %v545, %v537
    %v722 = vpack.c.b16 %v546, %v538
    %v723 = vpack.c.b16 %v547, %v539
    %v724 = vpack.c.b16 %v548, %v540
    %v725 = vpack.c.b16 %v557, %v549
    %v726 = vpack.c.b16 %v558, %v550
    %v727 = vpack.c.b16 %v559, %v551
    %v728 = vpack.c.b16 %v560, %v552
    %v729 = vpack.c.b16 %v561, %v553
    %v730 = vpack.c.b16 %v562, %v554
    %v731 = vpack.c.b16 %v563, %v555
    %v732 = vpack.c.b16 %v564, %v556
    %v733 = vpack.c.b16 %v573, %v565
    %v734 = vpack.c.b16 %v574, %v566
    %v735 = vpack.c.b16 %v575, %v567
    %v736 = vpack.c.b16 %v576, %v568
    %v737 = vpack.c.b16 %v577, %v569
    %v738 = vpack.c.b16 %v578, %v570
    %v739 = vpack.c.b16 %v579, %v571
    %v740 = vpack.c.b16 %v580, %v572
    %v741 = vpack.c.b16 %v589, %v581
    %v742 = vpack.c.b16 %v590, %v582
    %v743 = vpack.c.b16 %v591, %v583
    %v744 = vpack.c.b16 %v592, %v584
    %v745 = vpack.c.b16 %v593, %v585
    %v746 = vpack.c.b16 %v594, %v586
    %v747 = vpack.c.b16 %v595, %v587
    %v748 = vpack.c.b16 %v596, %v588
    %v749 = vpack.c.b16 %v605, %v597
    %v750 = vpack.c.b16 %v606, %v598
    %v751 = vpack.c.b16 %v607, %v599
    %v752 = vpack.c.b16 %v608, %v600
    %v753 = vpack.c.b16 %v609, %v601
    %v754 = vpack.c.b16 %v610, %v602
    %v755 = vpack.c.b16 %v611, %v603
    %v756 = vpack.c.b16 %v612, %v604
    %v757 = vpack.c.b16 %v621, %v613
    %v758 = vpack.c.b16 %v622, %v614
    %v759 = vpack.c.b16 %v623, %v615
    %v760 = vpack.c.b16 %v624, %v616
    %v761 = vpack.c.b16 %v625, %v617
    %v762 = vpack.c.b16 %v626, %v618
    %v763 = vpack.c.b16 %v627, %v619
    %v764 = vpack.c.b16 %v628, %v620
    %v765 = vpack.c.b16 %v637, %v629
    %v766 = vpack.c.b16 %v638, %v630
    %v767 = vpack.c.b16 %v639, %v631
    %v768 = vpack.c.b16 %v640, %v632
    %v769 = vpack.c.b16 %v641, %v633
    %v770 = vpack.c.b16 %v642, %v634
    %v771 = vpack.c.b16 %v643, %v635
    %v772 = vpack.c.b16 %v644, %v636
    %901 = vmatprep.subr.bf16.mxu0 %v646
    %902 = vmatpush1.bf16.msra.mxu0 %v645
    %903 = vmatprep.subr.bf16.mxu0 %v654
    %904 = vmatpush1.bf16.msra.mxu0 %v653
    %905 = vmatprep.subr.bf16.mxu0 %v662
    %906 = vmatpush1.bf16.msra.mxu0 %v661
    %907 = vmatprep.subr.bf16.mxu0 %v670
    %908 = vmatpush1.bf16.msra.mxu0 %v669
    %909 = vmatprep.subr.bf16.mxu0 %v678
    %910 = vmatpush1.bf16.msra.mxu0 %v677
    %911 = vmatprep.subr.bf16.mxu0 %v686
    %912 = vmatpush1.bf16.msra.mxu0 %v685
    %913 = vmatprep.subr.bf16.mxu0 %v694
    %914 = vmatpush1.bf16.msra.mxu0 %v693
    %915 = vmatprep.subr.bf16.mxu0 %v702
    %916 = vmatpush1.bf16.msra.mxu0 %v701
    %917 = vmatprep.subr.bf16.mxu0 %v710
    %918 = vmatpush1.bf16.msra.mxu0 %v709
    %919 = vmatprep.subr.bf16.mxu0 %v718
    %920 = vmatpush1.bf16.msra.mxu0 %v717
    %921 = vmatprep.subr.bf16.mxu0 %v726
    %922 = vmatpush1.bf16.msra.mxu0 %v725
    %923 = vmatprep.subr.bf16.mxu0 %v734
    %924 = vmatpush1.bf16.msra.mxu0 %v733
    %925 = vmatprep.subr.bf16.mxu0 %v742
    %926 = vmatpush1.bf16.msra.mxu0 %v741
    %927 = vmatprep.subr.bf16.mxu0 %v750
    %928 = vmatpush1.bf16.msra.mxu0 %v749
    %929 = vmatprep.subr.bf16.mxu0 %v758
    %930 = vmatpush1.bf16.msra.mxu0 %v757
    %931 = vmatprep.subr.bf16.mxu0 %v766
    %932 = vmatpush1.bf16.msra.mxu0 %v765
    %933 = vmatprep.mubr.bf16.mxu0 %v258
    %934 = vmatmul.mubr.bf16.gmra.mrb[0].mxu0 %v257
    %v935 = vpop.f32.mrb[0].mxu0
    %v936 = vadd.f32 %v214, %v935
    %v937 = vpop.f32.mrb[0].mxu0
    %v938 = vadd.f32 %v218, %v937
    %v939 = vpop.f32.mrb[0].mxu0
    %v940 = vadd.f32 %v214, %v939
    %v941 = vpop.f32.mrb[0].mxu0
    %v942 = vadd.f32 %v218, %v941
    %943 = vdwg.mxu0
    %944 = vmatprep.subr.bf16.mxu0 %v648
    %945 = vmatpush1.bf16.msra.mxu0 %v647
    %946 = vmatprep.subr.bf16.mxu0 %v656
    %947 = vmatpush1.bf16.msra.mxu0 %v655
    %948 = vmatprep.subr.bf16.mxu0 %v664
    %949 = vmatpush1.bf16.msra.mxu0 %v663
    %950 = vmatprep.subr.bf16.mxu0 %v672
    %951 = vmatpush1.bf16.msra.mxu0 %v671
    %952 = vmatprep.subr.bf16.mxu0 %v680
    %953 = vmatpush1.bf16.msra.mxu0 %v679
    %954 = vmatprep.subr.bf16.mxu0 %v688
    %955 = vmatpush1.bf16.msra.mxu0 %v687
    %956 = vmatprep.subr.bf16.mxu0 %v696
    %957 = vmatpush1.bf16.msra.mxu0 %v695
    %958 = vmatprep.subr.bf16.mxu0 %v704
    %959 = vmatpush1.bf16.msra.mxu0 %v703
    %960 = vmatprep.subr.bf16.mxu0 %v712
    %961 = vmatpush1.bf16.msra.mxu0 %v711
    %962 = vmatprep.subr.bf16.mxu0 %v720
    %963 = vmatpush1.bf16.msra.mxu0 %v719
    %964 = vmatprep.subr.bf16.mxu0 %v728
    %965 = vmatpush1.bf16.msra.mxu0 %v727
    %966 = vmatprep.subr.bf16.mxu0 %v736
    %967 = vmatpush1.bf16.msra.mxu0 %v735
    %968 = vmatprep.subr.bf16.mxu0 %v744
    %969 = vmatpush1.bf16.msra.mxu0 %v743
    %970 = vmatprep.subr.bf16.mxu0 %v752
    %971 = vmatpush1.bf16.msra.mxu0 %v751
    %972 = vmatprep.subr.bf16.mxu0 %v760
    %973 = vmatpush1.bf16.msra.mxu0 %v759
    %974 = vmatprep.subr.bf16.mxu0 %v768
    %975 = vmatpush1.bf16.msra.mxu0 %v767
    %976 = vmatprep.mubr.bf16.mxu0 %v258
    %977 = vmatmul.mubr.bf16.gmra.mrb[0].mxu0 %v257
    %v978 = vpop.f32.mrb[0].mxu0
    %v979 = vadd.f32 %v222, %v978
    %v980 = vpop.f32.mrb[0].mxu0
    %v981 = vadd.f32 %v226, %v980
    %v982 = vpop.f32.mrb[0].mxu0
    %v983 = vadd.f32 %v222, %v982
    %v984 = vpop.f32.mrb[0].mxu0
    %v985 = vadd.f32 %v226, %v984
    %986 = vdwg.mxu0
    %987 = vmatprep.subr.bf16.mxu0 %v650
    %988 = vmatpush1.bf16.msra.mxu0 %v649
    %989 = vmatprep.subr.bf16.mxu0 %v658
    %990 = vmatpush1.bf16.msra.mxu0 %v657
    %991 = vmatprep.subr.bf16.mxu0 %v666
    %992 = vmatpush1.bf16.msra.mxu0 %v665
    %993 = vmatprep.subr.bf16.mxu0 %v674
    %994 = vmatpush1.bf16.msra.mxu0 %v673
    %995 = vmatprep.subr.bf16.mxu0 %v682
    %996 = vmatpush1.bf16.msra.mxu0 %v681
    %997 = vmatprep.subr.bf16.mxu0 %v690
    %998 = vmatpush1.bf16.msra.mxu0 %v689
    %999 = vmatprep.subr.bf16.mxu0 %v698
    %1000 = vmatpush1.bf16.msra.mxu0 %v697
    %1001 = vmatprep.subr.bf16.mxu0 %v706
    %1002 = vmatpush1.bf16.msra.mxu0 %v705
    %1003 = vmatprep.subr.bf16.mxu0 %v714
    %1004 = vmatpush1.bf16.msra.mxu0 %v713
    %1005 = vmatprep.subr.bf16.mxu0 %v722
    %1006 = vmatpush1.bf16.msra.mxu0 %v721
    %1007 = vmatprep.subr.bf16.mxu0 %v730
    %1008 = vmatpush1.bf16.msra.mxu0 %v729
    %1009 = vmatprep.subr.bf16.mxu0 %v738
    %1010 = vmatpush1.bf16.msra.mxu0 %v737
    %1011 = vmatprep.subr.bf16.mxu0 %v746
    %1012 = vmatpush1.bf16.msra.mxu0 %v745
    %1013 = vmatprep.subr.bf16.mxu0 %v754
    %1014 = vmatpush1.bf16.msra.mxu0 %v753
    %1015 = vmatprep.subr.bf16.mxu0 %v762
    %1016 = vmatpush1.bf16.msra.mxu0 %v761
    %1017 = vmatprep.subr.bf16.mxu0 %v770
    %1018 = vmatpush1.bf16.msra.mxu0 %v769
    %1019 = vmatprep.mubr.bf16.mxu0 %v258
    %1020 = vmatmul.mubr.bf16.gmra.mrb[0].mxu0 %v257
    %v1021 = vpop.f32.mrb[0].mxu0
    %v1022 = vadd.f32 %v230, %v1021
    %v1023 = vpop.f32.mrb[0].mxu0
    %v1024 = vadd.f32 %v234, %v1023
    %v1025 = vpop.f32.mrb[0].mxu0
    %v1026 = vadd.f32 %v230, %v1025
    %v1027 = vpop.f32.mrb[0].mxu0
    %v1028 = vadd.f32 %v234, %v1027
    %1029 = vdwg.mxu0
    %1030 = vmatprep.subr.bf16.mxu0 %v652
    %1031 = vmatpush1.bf16.msra.mxu0 %v651
    %1032 = vmatprep.subr.bf16.mxu0 %v660
    %1033 = vmatpush1.bf16.msra.mxu0 %v659
    %1034 = vmatprep.subr.bf16.mxu0 %v668
    %1035 = vmatpush1.bf16.msra.mxu0 %v667
    %1036 = vmatprep.subr.bf16.mxu0 %v676
    %1037 = vmatpush1.bf16.msra.mxu0 %v675
    %1038 = vmatprep.subr.bf16.mxu0 %v684
    %1039 = vmatpush1.bf16.msra.mxu0 %v683
    %1040 = vmatprep.subr.bf16.mxu0 %v692
    %1041 = vmatpush1.bf16.msra.mxu0 %v691
    %1042 = vmatprep.subr.bf16.mxu0 %v700
    %1043 = vmatpush1.bf16.msra.mxu0 %v699
    %1044 = vmatprep.subr.bf16.mxu0 %v708
    %1045 = vmatpush1.bf16.msra.mxu0 %v707
    %1046 = vmatprep.subr.bf16.mxu0 %v716
    %1047 = vmatpush1.bf16.msra.mxu0 %v715
    %1048 = vmatprep.subr.bf16.mxu0 %v724
    %1049 = vmatpush1.bf16.msra.mxu0 %v723
    %1050 = vmatprep.subr.bf16.mxu0 %v732
    %1051 = vmatpush1.bf16.msra.mxu0 %v731
    %1052 = vmatprep.subr.bf16.mxu0 %v740
    %1053 = vmatpush1.bf16.msra.mxu0 %v739
    %1054 = vmatprep.subr.bf16.mxu0 %v748
    %1055 = vmatpush1.bf16.msra.mxu0 %v747
    %1056 = vmatprep.subr.bf16.mxu0 %v756
    %1057 = vmatpush1.bf16.msra.mxu0 %v755
    %1058 = vmatprep.subr.bf16.mxu0 %v764
    %1059 = vmatpush1.bf16.msra.mxu0 %v763
    %1060 = vmatprep.subr.bf16.mxu0 %v772
    %1061 = vmatpush1.bf16.msra.mxu0 %v771
    %1062 = vmatprep.mubr.bf16.mxu0 %v258
    %1063 = vmatmul.mubr.bf16.gmra.mrb[0].mxu0 %v257
    %v1064 = vpop.f32.mrb[0].mxu0
    %v1065 = vadd.f32 %v238, %v1064
    %v1066 = vpop.f32.mrb[0].mxu0
    %v1067 = vadd.f32 %v242, %v1066
    %v1068 = vpop.f32.mrb[0].mxu0
    %v1069 = vadd.f32 %v238, %v1068
    %v1070 = vpop.f32.mrb[0].mxu0
    %v1071 = vadd.f32 %v242, %v1070
    %1072 = vdwg.mxu0
    %v1073 = vmax.f32 %v936, 0.0
    %v1074 = vmax.f32 %v938, 0.0
    %v1075 = vmax.f32 %v979, 0.0
    %v1076 = vmax.f32 %v981, 0.0
    %v1077 = vmax.f32 %v1022, 0.0
    %v1078 = vmax.f32 %v1024, 0.0
    %v1079 = vmax.f32 %v1065, 0.0
    %v1080 = vmax.f32 %v1067, 0.0
    %v1081 = vmax.f32 %v940, 0.0
    %v1082 = vmax.f32 %v942, 0.0
    %v1083 = vmax.f32 %v983, 0.0
    %v1084 = vmax.f32 %v985, 0.0
    %v1085 = vmax.f32 %v1026, 0.0
    %v1086 = vmax.f32 %v1028, 0.0
    %v1087 = vmax.f32 %v1069, 0.0
    %v1088 = vmax.f32 %v1071, 0.0
    %v1089 = vpack.c.bf16 %v1081, %v1073
    %v1090 = vpack.c.bf16 %v1082, %v1074
    %v1091 = vpack.c.bf16 %v1083, %v1075
    %v1092 = vpack.c.bf16 %v1084, %v1076
    %v1093 = vpack.c.bf16 %v1085, %v1077
    %v1094 = vpack.c.bf16 %v1086, %v1078
    %v1095 = vpack.c.bf16 %v1087, %v1079
    %v1096 = vpack.c.bf16 %v1088, %v1080
    %v1097 = vld [vmem:[#allocation8] sm:$0xff]
    %v1098 = vld [vmem:[#allocation8 + $0x8] sm:$0xff]
    %v1099 = vld [vmem:[#allocation8 + $0x10] sm:$0xff]
    %v1100 = vld [vmem:[#allocation8 + $0x18] sm:$0xff]
    %v1101 = vld [vmem:[#allocation8 + $0x20] sm:$0xff]
    %v1102 = vld [vmem:[#allocation8 + $0x28] sm:$0xff]
    %v1103 = vld [vmem:[#allocation8 + $0x30] sm:$0xff]
    %v1104 = vld [vmem:[#allocation8 + $0x38] sm:$0xff]
    %v1105 = vld [vmem:[#allocation8 + $0x40] sm:$0xff]
    %v1106 = vld [vmem:[#allocation8 + $0x48] sm:$0xff]
    %v1107 = vld [vmem:[#allocation8 + $0x50] sm:$0xff]
    %v1108 = vld [vmem:[#allocation8 + $0x58] sm:$0xff]
    %v1109 = vld [vmem:[#allocation8 + $0x60] sm:$0xff]
    %v1110 = vld [vmem:[#allocation8 + $0x68] sm:$0xff]
    %v1111 = vld [vmem:[#allocation8 + $0x70] sm:$0xff]
    %v1112 = vld [vmem:[#allocation8 + $0x78] sm:$0xff]
    %v1113 = vld [vmem:[#allocation8 + $0x80] sm:$0xff]
    %v1114 = vld [vmem:[#allocation8 + $0x88] sm:$0xff]
    %v1115 = vld [vmem:[#allocation8 + $0x90] sm:$0xff]
    %v1116 = vld [vmem:[#allocation8 + $0x98] sm:$0xff]
    %v1117 = vld [vmem:[#allocation8 + $0xa0] sm:$0xff]
    %v1118 = vld [vmem:[#allocation8 + $0xa8] sm:$0xff]
    %v1119 = vld [vmem:[#allocation8 + $0xb0] sm:$0xff]
    %v1120 = vld [vmem:[#allocation8 + $0xb8] sm:$0xff]
    %v1121 = vld [vmem:[#allocation8 + $0xc0] sm:$0xff]
    %v1122 = vld [vmem:[#allocation8 + $0xc8] sm:$0xff]
    %v1123 = vld [vmem:[#allocation8 + $0xd0] sm:$0xff]
    %v1124 = vld [vmem:[#allocation8 + $0xd8] sm:$0xff]
    %v1125 = vld [vmem:[#allocation8 + $0xe0] sm:$0xff]
    %v1126 = vld [vmem:[#allocation8 + $0xe8] sm:$0xff]
    %v1127 = vld [vmem:[#allocation8 + $0xf0] sm:$0xff]
    %v1128 = vld [vmem:[#allocation8 + $0xf8] sm:$0xff]
    %v1129 = vld [vmem:[#allocation8 + $0x100] sm:$0xff]
    %v1130 = vld [vmem:[#allocation8 + $0x108] sm:$0xff]
    %v1131 = vld [vmem:[#allocation8 + $0x110] sm:$0xff]
    %v1132 = vld [vmem:[#allocation8 + $0x118] sm:$0xff]
    %v1133 = vld [vmem:[#allocation8 + $0x120] sm:$0xff]
    %v1134 = vld [vmem:[#allocation8 + $0x128] sm:$0xff]
    %v1135 = vld [vmem:[#allocation8 + $0x130] sm:$0xff]
    %v1136 = vld [vmem:[#allocation8 + $0x138] sm:$0xff]
    %v1137 = vld [vmem:[#allocation8 + $0x140] sm:$0xff]
    %v1138 = vld [vmem:[#allocation8 + $0x148] sm:$0xff]
    %v1139 = vld [vmem:[#allocation8 + $0x150] sm:$0xff]
    %v1140 = vld [vmem:[#allocation8 + $0x158] sm:$0xff]
    %v1141 = vld [vmem:[#allocation8 + $0x160] sm:$0xff]
    %v1142 = vld [vmem:[#allocation8 + $0x168] sm:$0xff]
    %v1143 = vld [vmem:[#allocation8 + $0x170] sm:$0xff]
    %v1144 = vld [vmem:[#allocation8 + $0x178] sm:$0xff]
    %v1145 = vld [vmem:[#allocation8 + $0x180] sm:$0xff]
    %v1146 = vld [vmem:[#allocation8 + $0x188] sm:$0xff]
    %v1147 = vld [vmem:[#allocation8 + $0x190] sm:$0xff]
    %v1148 = vld [vmem:[#allocation8 + $0x198] sm:$0xff]
    %v1149 = vld [vmem:[#allocation8 + $0x1a0] sm:$0xff]
    %v1150 = vld [vmem:[#allocation8 + $0x1a8] sm:$0xff]
    %v1151 = vld [vmem:[#allocation8 + $0x1b0] sm:$0xff]
    %v1152 = vld [vmem:[#allocation8 + $0x1b8] sm:$0xff]
    %v1153 = vld [vmem:[#allocation8 + $0x1c0] sm:$0xff]
    %v1154 = vld [vmem:[#allocation8 + $0x1c8] sm:$0xff]
    %v1155 = vld [vmem:[#allocation8 + $0x1d0] sm:$0xff]
    %v1156 = vld [vmem:[#allocation8 + $0x1d8] sm:$0xff]
    %v1157 = vld [vmem:[#allocation8 + $0x1e0] sm:$0xff]
    %v1158 = vld [vmem:[#allocation8 + $0x1e8] sm:$0xff]
    %v1159 = vld [vmem:[#allocation8 + $0x1f0] sm:$0xff]
    %v1160 = vld [vmem:[#allocation8 + $0x1f8] sm:$0xff]
    %v1161 = vld [vmem:[#allocation8 + $0x200] sm:$0xff]
    %v1162 = vld [vmem:[#allocation8 + $0x208] sm:$0xff]
    %v1163 = vld [vmem:[#allocation8 + $0x210] sm:$0xff]
    %v1164 = vld [vmem:[#allocation8 + $0x218] sm:$0xff]
    %v1165 = vld [vmem:[#allocation8 + $0x220] sm:$0xff]
    %v1166 = vld [vmem:[#allocation8 + $0x228] sm:$0xff]
    %v1167 = vld [vmem:[#allocation8 + $0x230] sm:$0xff]
    %v1168 = vld [vmem:[#allocation8 + $0x238] sm:$0xff]
    %v1169 = vld [vmem:[#allocation8 + $0x240] sm:$0xff]
    %v1170 = vld [vmem:[#allocation8 + $0x248] sm:$0xff]
    %v1171 = vld [vmem:[#allocation8 + $0x250] sm:$0xff]
    %v1172 = vld [vmem:[#allocation8 + $0x258] sm:$0xff]
    %v1173 = vld [vmem:[#allocation8 + $0x260] sm:$0xff]
    %v1174 = vld [vmem:[#allocation8 + $0x268] sm:$0xff]
    %v1175 = vld [vmem:[#allocation8 + $0x270] sm:$0xff]
    %v1176 = vld [vmem:[#allocation8 + $0x278] sm:$0xff]
    %v1177 = vld [vmem:[#allocation8 + $0x280] sm:$0xff]
    %v1178 = vld [vmem:[#allocation8 + $0x288] sm:$0xff]
    %v1179 = vld [vmem:[#allocation8 + $0x290] sm:$0xff]
    %v1180 = vld [vmem:[#allocation8 + $0x298] sm:$0xff]
    %v1181 = vld [vmem:[#allocation8 + $0x2a0] sm:$0xff]
    %v1182 = vld [vmem:[#allocation8 + $0x2a8] sm:$0xff]
    %v1183 = vld [vmem:[#allocation8 + $0x2b0] sm:$0xff]
    %v1184 = vld [vmem:[#allocation8 + $0x2b8] sm:$0xff]
    %v1185 = vld [vmem:[#allocation8 + $0x2c0] sm:$0xff]
    %v1186 = vld [vmem:[#allocation8 + $0x2c8] sm:$0xff]
    %v1187 = vld [vmem:[#allocation8 + $0x2d0] sm:$0xff]
    %v1188 = vld [vmem:[#allocation8 + $0x2d8] sm:$0xff]
    %v1189 = vld [vmem:[#allocation8 + $0x2e0] sm:$0xff]
    %v1190 = vld [vmem:[#allocation8 + $0x2e8] sm:$0xff]
    %v1191 = vld [vmem:[#allocation8 + $0x2f0] sm:$0xff]
    %v1192 = vld [vmem:[#allocation8 + $0x2f8] sm:$0xff]
    %v1193 = vld [vmem:[#allocation8 + $0x300] sm:$0xff]
    %v1194 = vld [vmem:[#allocation8 + $0x308] sm:$0xff]
    %v1195 = vld [vmem:[#allocation8 + $0x310] sm:$0xff]
    %v1196 = vld [vmem:[#allocation8 + $0x318] sm:$0xff]
    %v1197 = vld [vmem:[#allocation8 + $0x320] sm:$0xff]
    %v1198 = vld [vmem:[#allocation8 + $0x328] sm:$0xff]
    %v1199 = vld [vmem:[#allocation8 + $0x330] sm:$0xff]
    %v1200 = vld [vmem:[#allocation8 + $0x338] sm:$0xff]
    %v1201 = vld [vmem:[#allocation8 + $0x340] sm:$0xff]
    %v1202 = vld [vmem:[#allocation8 + $0x348] sm:$0xff]
    %v1203 = vld [vmem:[#allocation8 + $0x350] sm:$0xff]
    %v1204 = vld [vmem:[#allocation8 + $0x358] sm:$0xff]
    %v1205 = vld [vmem:[#allocation8 + $0x360] sm:$0xff]
    %v1206 = vld [vmem:[#allocation8 + $0x368] sm:$0xff]
    %v1207 = vld [vmem:[#allocation8 + $0x370] sm:$0xff]
    %v1208 = vld [vmem:[#allocation8 + $0x378] sm:$0xff]
    %v1209 = vld [vmem:[#allocation8 + $0x380] sm:$0xff]
    %v1210 = vld [vmem:[#allocation8 + $0x388] sm:$0xff]
    %v1211 = vld [vmem:[#allocation8 + $0x390] sm:$0xff]
    %v1212 = vld [vmem:[#allocation8 + $0x398] sm:$0xff]
    %v1213 = vld [vmem:[#allocation8 + $0x3a0] sm:$0xff]
    %v1214 = vld [vmem:[#allocation8 + $0x3a8] sm:$0xff]
    %v1215 = vld [vmem:[#allocation8 + $0x3b0] sm:$0xff]
    %v1216 = vld [vmem:[#allocation8 + $0x3b8] sm:$0xff]
    %v1217 = vld [vmem:[#allocation8 + $0x3c0] sm:$0xff]
    %v1218 = vld [vmem:[#allocation8 + $0x3c8] sm:$0xff]
    %v1219 = vld [vmem:[#allocation8 + $0x3d0] sm:$0xff]
    %v1220 = vld [vmem:[#allocation8 + $0x3d8] sm:$0xff]
    %v1221 = vld [vmem:[#allocation8 + $0x3e0] sm:$0xff]
    %v1222 = vld [vmem:[#allocation8 + $0x3e8] sm:$0xff]
    %v1223 = vld [vmem:[#allocation8 + $0x3f0] sm:$0xff]
    %v1224 = vld [vmem:[#allocation8 + $0x3f8] sm:$0xff]
    %v1225 = vld [vmem:[%s5] sm:$0x3]
    %v1227 = vlaneseq
    %v1228 = vshrl.u32 %v1227, 7
    %v1229 = vsub.s32 0, %v1228
    %v1230 = vrot.slane %v1225, %v1229
    %v1231 = vlaneseq
    %v1232 = vshrl.u32 %v1231, 7
    %v1233 = vsub.s32 1, %v1232
    %v1234 = vrot.slane %v1225, %v1233
    %v1365 = vunpack.c.l.b16 %v1097
    %v1366 = vunpack.c.h.b16 %v1097
    %v1367 = vunpack.c.l.b16 %v1098
    %v1368 = vunpack.c.h.b16 %v1098
    %v1369 = vunpack.c.l.b16 %v1099
    %v1370 = vunpack.c.h.b16 %v1099
    %v1371 = vunpack.c.l.b16 %v1100
    %v1372 = vunpack.c.h.b16 %v1100
    %v1373 = vunpack.c.l.b16 %v1101
    %v1374 = vunpack.c.h.b16 %v1101
    %v1375 = vunpack.c.l.b16 %v1102
    %v1376 = vunpack.c.h.b16 %v1102
    %v1377 = vunpack.c.l.b16 %v1103
    %v1378 = vunpack.c.h.b16 %v1103
    %v1379 = vunpack.c.l.b16 %v1104
    %v1380 = vunpack.c.h.b16 %v1104
    %v1381 = vunpack.c.l.b16 %v1105
    %v1382 = vunpack.c.h.b16 %v1105
    %v1383 = vunpack.c.l.b16 %v1106
    %v1384 = vunpack.c.h.b16 %v1106
    %v1385 = vunpack.c.l.b16 %v1107
    %v1386 = vunpack.c.h.b16 %v1107
    %v1387 = vunpack.c.l.b16 %v1108
    %v1388 = vunpack.c.h.b16 %v1108
    %v1389 = vunpack.c.l.b16 %v1109
    %v1390 = vunpack.c.h.b16 %v1109
    %v1391 = vunpack.c.l.b16 %v1110
    %v1392 = vunpack.c.h.b16 %v1110
    %v1393 = vunpack.c.l.b16 %v1111
    %v1394 = vunpack.c.h.b16 %v1111
    %v1395 = vunpack.c.l.b16 %v1112
    %v1396 = vunpack.c.h.b16 %v1112
    %v1397 = vunpack.c.l.b16 %v1113
    %v1398 = vunpack.c.h.b16 %v1113
    %v1399 = vunpack.c.l.b16 %v1114
    %v1400 = vunpack.c.h.b16 %v1114
    %v1401 = vunpack.c.l.b16 %v1115
    %v1402 = vunpack.c.h.b16 %v1115
    %v1403 = vunpack.c.l.b16 %v1116
    %v1404 = vunpack.c.h.b16 %v1116
    %v1405 = vunpack.c.l.b16 %v1117
    %v1406 = vunpack.c.h.b16 %v1117
    %v1407 = vunpack.c.l.b16 %v1118
    %v1408 = vunpack.c.h.b16 %v1118
    %v1409 = vunpack.c.l.b16 %v1119
    %v1410 = vunpack.c.h.b16 %v1119
    %v1411 = vunpack.c.l.b16 %v1120
    %v1412 = vunpack.c.h.b16 %v1120
    %v1413 = vunpack.c.l.b16 %v1121
    %v1414 = vunpack.c.h.b16 %v1121
    %v1415 = vunpack.c.l.b16 %v1122
    %v1416 = vunpack.c.h.b16 %v1122
    %v1417 = vunpack.c.l.b16 %v1123
    %v1418 = vunpack.c.h.b16 %v1123
    %v1419 = vunpack.c.l.b16 %v1124
    %v1420 = vunpack.c.h.b16 %v1124
    %v1421 = vunpack.c.l.b16 %v1125
    %v1422 = vunpack.c.h.b16 %v1125
    %v1423 = vunpack.c.l.b16 %v1126
    %v1424 = vunpack.c.h.b16 %v1126
    %v1425 = vunpack.c.l.b16 %v1127
    %v1426 = vunpack.c.h.b16 %v1127
    %v1427 = vunpack.c.l.b16 %v1128
    %v1428 = vunpack.c.h.b16 %v1128
    %v1429 = vunpack.c.l.b16 %v1129
    %v1430 = vunpack.c.h.b16 %v1129
    %v1431 = vunpack.c.l.b16 %v1130
    %v1432 = vunpack.c.h.b16 %v1130
    %v1433 = vunpack.c.l.b16 %v1131
    %v1434 = vunpack.c.h.b16 %v1131
    %v1435 = vunpack.c.l.b16 %v1132
    %v1436 = vunpack.c.h.b16 %v1132
    %v1437 = vunpack.c.l.b16 %v1133
    %v1438 = vunpack.c.h.b16 %v1133
    %v1439 = vunpack.c.l.b16 %v1134
    %v1440 = vunpack.c.h.b16 %v1134
    %v1441 = vunpack.c.l.b16 %v1135
    %v1442 = vunpack.c.h.b16 %v1135
    %v1443 = vunpack.c.l.b16 %v1136
    %v1444 = vunpack.c.h.b16 %v1136
    %v1445 = vunpack.c.l.b16 %v1137
    %v1446 = vunpack.c.h.b16 %v1137
    %v1447 = vunpack.c.l.b16 %v1138
    %v1448 = vunpack.c.h.b16 %v1138
    %v1449 = vunpack.c.l.b16 %v1139
    %v1450 = vunpack.c.h.b16 %v1139
    %v1451 = vunpack.c.l.b16 %v1140
    %v1452 = vunpack.c.h.b16 %v1140
    %v1453 = vunpack.c.l.b16 %v1141
    %v1454 = vunpack.c.h.b16 %v1141
    %v1455 = vunpack.c.l.b16 %v1142
    %v1456 = vunpack.c.h.b16 %v1142
    %v1457 = vunpack.c.l.b16 %v1143
    %v1458 = vunpack.c.h.b16 %v1143
    %v1459 = vunpack.c.l.b16 %v1144
    %v1460 = vunpack.c.h.b16 %v1144
    %v1461 = vunpack.c.l.b16 %v1145
    %v1462 = vunpack.c.h.b16 %v1145
    %v1463 = vunpack.c.l.b16 %v1146
    %v1464 = vunpack.c.h.b16 %v1146
    %v1465 = vunpack.c.l.b16 %v1147
    %v1466 = vunpack.c.h.b16 %v1147
    %v1467 = vunpack.c.l.b16 %v1148
    %v1468 = vunpack.c.h.b16 %v1148
    %v1469 = vunpack.c.l.b16 %v1149
    %v1470 = vunpack.c.h.b16 %v1149
    %v1471 = vunpack.c.l.b16 %v1150
    %v1472 = vunpack.c.h.b16 %v1150
    %v1473 = vunpack.c.l.b16 %v1151
    %v1474 = vunpack.c.h.b16 %v1151
    %v1475 = vunpack.c.l.b16 %v1152
    %v1476 = vunpack.c.h.b16 %v1152
    %v1477 = vunpack.c.l.b16 %v1153
    %v1478 = vunpack.c.h.b16 %v1153
    %v1479 = vunpack.c.l.b16 %v1154
    %v1480 = vunpack.c.h.b16 %v1154
    %v1481 = vunpack.c.l.b16 %v1155
    %v1482 = vunpack.c.h.b16 %v1155
    %v1483 = vunpack.c.l.b16 %v1156
    %v1484 = vunpack.c.h.b16 %v1156
    %v1485 = vunpack.c.l.b16 %v1157
    %v1486 = vunpack.c.h.b16 %v1157
    %v1487 = vunpack.c.l.b16 %v1158
    %v1488 = vunpack.c.h.b16 %v1158
    %v1489 = vunpack.c.l.b16 %v1159
    %v1490 = vunpack.c.h.b16 %v1159
    %v1491 = vunpack.c.l.b16 %v1160
    %v1492 = vunpack.c.h.b16 %v1160
    %v1493 = vunpack.c.l.b16 %v1161
    %v1494 = vunpack.c.h.b16 %v1161
    %v1495 = vunpack.c.l.b16 %v1162
    %v1496 = vunpack.c.h.b16 %v1162
    %v1497 = vunpack.c.l.b16 %v1163
    %v1498 = vunpack.c.h.b16 %v1163
    %v1499 = vunpack.c.l.b16 %v1164
    %v1500 = vunpack.c.h.b16 %v1164
    %v1501 = vunpack.c.l.b16 %v1165
    %v1502 = vunpack.c.h.b16 %v1165
    %v1503 = vunpack.c.l.b16 %v1166
    %v1504 = vunpack.c.h.b16 %v1166
    %v1505 = vunpack.c.l.b16 %v1167
    %v1506 = vunpack.c.h.b16 %v1167
    %v1507 = vunpack.c.l.b16 %v1168
    %v1508 = vunpack.c.h.b16 %v1168
    %v1509 = vunpack.c.l.b16 %v1169
    %v1510 = vunpack.c.h.b16 %v1169
    %v1511 = vunpack.c.l.b16 %v1170
    %v1512 = vunpack.c.h.b16 %v1170
    %v1513 = vunpack.c.l.b16 %v1171
    %v1514 = vunpack.c.h.b16 %v1171
    %v1515 = vunpack.c.l.b16 %v1172
    %v1516 = vunpack.c.h.b16 %v1172
    %v1517 = vunpack.c.l.b16 %v1173
    %v1518 = vunpack.c.h.b16 %v1173
    %v1519 = vunpack.c.l.b16 %v1174
    %v1520 = vunpack.c.h.b16 %v1174
    %v1521 = vunpack.c.l.b16 %v1175
    %v1522 = vunpack.c.h.b16 %v1175
    %v1523 = vunpack.c.l.b16 %v1176
    %v1524 = vunpack.c.h.b16 %v1176
    %v1525 = vunpack.c.l.b16 %v1177
    %v1526 = vunpack.c.h.b16 %v1177
    %v1527 = vunpack.c.l.b16 %v1178
    %v1528 = vunpack.c.h.b16 %v1178
    %v1529 = vunpack.c.l.b16 %v1179
    %v1530 = vunpack.c.h.b16 %v1179
    %v1531 = vunpack.c.l.b16 %v1180
    %v1532 = vunpack.c.h.b16 %v1180
    %v1533 = vunpack.c.l.b16 %v1181
    %v1534 = vunpack.c.h.b16 %v1181
    %v1535 = vunpack.c.l.b16 %v1182
    %v1536 = vunpack.c.h.b16 %v1182
    %v1537 = vunpack.c.l.b16 %v1183
    %v1538 = vunpack.c.h.b16 %v1183
    %v1539 = vunpack.c.l.b16 %v1184
    %v1540 = vunpack.c.h.b16 %v1184
    %v1541 = vunpack.c.l.b16 %v1185
    %v1542 = vunpack.c.h.b16 %v1185
    %v1543 = vunpack.c.l.b16 %v1186
    %v1544 = vunpack.c.h.b16 %v1186
    %v1545 = vunpack.c.l.b16 %v1187
    %v1546 = vunpack.c.h.b16 %v1187
    %v1547 = vunpack.c.l.b16 %v1188
    %v1548 = vunpack.c.h.b16 %v1188
    %v1549 = vunpack.c.l.b16 %v1189
    %v1550 = vunpack.c.h.b16 %v1189
    %v1551 = vunpack.c.l.b16 %v1190
    %v1552 = vunpack.c.h.b16 %v1190
    %v1553 = vunpack.c.l.b16 %v1191
    %v1554 = vunpack.c.h.b16 %v1191
    %v1555 = vunpack.c.l.b16 %v1192
    %v1556 = vunpack.c.h.b16 %v1192
    %v1557 = vunpack.c.l.b16 %v1193
    %v1558 = vunpack.c.h.b16 %v1193
    %v1559 = vunpack.c.l.b16 %v1194
    %v1560 = vunpack.c.h.b16 %v1194
    %v1561 = vunpack.c.l.b16 %v1195
    %v1562 = vunpack.c.h.b16 %v1195
    %v1563 = vunpack.c.l.b16 %v1196
    %v1564 = vunpack.c.h.b16 %v1196
    %v1565 = vunpack.c.l.b16 %v1197
    %v1566 = vunpack.c.h.b16 %v1197
    %v1567 = vunpack.c.l.b16 %v1198
    %v1568 = vunpack.c.h.b16 %v1198
    %v1569 = vunpack.c.l.b16 %v1199
    %v1570 = vunpack.c.h.b16 %v1199
    %v1571 = vunpack.c.l.b16 %v1200
    %v1572 = vunpack.c.h.b16 %v1200
    %v1573 = vunpack.c.l.b16 %v1201
    %v1574 = vunpack.c.h.b16 %v1201
    %v1575 = vunpack.c.l.b16 %v1202
    %v1576 = vunpack.c.h.b16 %v1202
    %v1577 = vunpack.c.l.b16 %v1203
    %v1578 = vunpack.c.h.b16 %v1203
    %v1579 = vunpack.c.l.b16 %v1204
    %v1580 = vunpack.c.h.b16 %v1204
    %v1581 = vunpack.c.l.b16 %v1205
    %v1582 = vunpack.c.h.b16 %v1205
    %v1583 = vunpack.c.l.b16 %v1206
    %v1584 = vunpack.c.h.b16 %v1206
    %v1585 = vunpack.c.l.b16 %v1207
    %v1586 = vunpack.c.h.b16 %v1207
    %v1587 = vunpack.c.l.b16 %v1208
    %v1588 = vunpack.c.h.b16 %v1208
    %v1589 = vunpack.c.l.b16 %v1209
    %v1590 = vunpack.c.h.b16 %v1209
    %v1591 = vunpack.c.l.b16 %v1210
    %v1592 = vunpack.c.h.b16 %v1210
    %v1593 = vunpack.c.l.b16 %v1211
    %v1594 = vunpack.c.h.b16 %v1211
    %v1595 = vunpack.c.l.b16 %v1212
    %v1596 = vunpack.c.h.b16 %v1212
    %v1597 = vunpack.c.l.b16 %v1213
    %v1598 = vunpack.c.h.b16 %v1213
    %v1599 = vunpack.c.l.b16 %v1214
    %v1600 = vunpack.c.h.b16 %v1214
    %v1601 = vunpack.c.l.b16 %v1215
    %v1602 = vunpack.c.h.b16 %v1215
    %v1603 = vunpack.c.l.b16 %v1216
    %v1604 = vunpack.c.h.b16 %v1216
    %v1605 = vunpack.c.l.b16 %v1217
    %v1606 = vunpack.c.h.b16 %v1217
    %v1607 = vunpack.c.l.b16 %v1218
    %v1608 = vunpack.c.h.b16 %v1218
    %v1609 = vunpack.c.l.b16 %v1219
    %v1610 = vunpack.c.h.b16 %v1219
    %v1611 = vunpack.c.l.b16 %v1220
    %v1612 = vunpack.c.h.b16 %v1220
    %v1613 = vunpack.c.l.b16 %v1221
    %v1614 = vunpack.c.h.b16 %v1221
    %v1615 = vunpack.c.l.b16 %v1222
    %v1616 = vunpack.c.h.b16 %v1222
    %v1617 = vunpack.c.l.b16 %v1223
    %v1618 = vunpack.c.h.b16 %v1223
    %v1619 = vunpack.c.l.b16 %v1224
    %v1620 = vunpack.c.h.b16 %v1224
    %v1621 = vpack.c.b16 %v1367, %v1365
    %v1622 = vpack.c.b16 %v1368, %v1366
    %v1623 = vpack.c.b16 %v1371, %v1369
    %v1624 = vpack.c.b16 %v1372, %v1370
    %v1625 = vpack.c.b16 %v1375, %v1373
    %v1626 = vpack.c.b16 %v1376, %v1374
    %v1627 = vpack.c.b16 %v1379, %v1377
    %v1628 = vpack.c.b16 %v1380, %v1378
    %v1629 = vpack.c.b16 %v1383, %v1381
    %v1630 = vpack.c.b16 %v1384, %v1382
    %v1631 = vpack.c.b16 %v1387, %v1385
    %v1632 = vpack.c.b16 %v1388, %v1386
    %v1633 = vpack.c.b16 %v1391, %v1389
    %v1634 = vpack.c.b16 %v1392, %v1390
    %v1635 = vpack.c.b16 %v1395, %v1393
    %v1636 = vpack.c.b16 %v1396, %v1394
    %v1637 = vpack.c.b16 %v1399, %v1397
    %v1638 = vpack.c.b16 %v1400, %v1398
    %v1639 = vpack.c.b16 %v1403, %v1401
    %v1640 = vpack.c.b16 %v1404, %v1402
    %v1641 = vpack.c.b16 %v1407, %v1405
    %v1642 = vpack.c.b16 %v1408, %v1406
    %v1643 = vpack.c.b16 %v1411, %v1409
    %v1644 = vpack.c.b16 %v1412, %v1410
    %v1645 = vpack.c.b16 %v1415, %v1413
    %v1646 = vpack.c.b16 %v1416, %v1414
    %v1647 = vpack.c.b16 %v1419, %v1417
    %v1648 = vpack.c.b16 %v1420, %v1418
    %v1649 = vpack.c.b16 %v1423, %v1421
    %v1650 = vpack.c.b16 %v1424, %v1422
    %v1651 = vpack.c.b16 %v1427, %v1425
    %v1652 = vpack.c.b16 %v1428, %v1426
    %v1653 = vpack.c.b16 %v1431, %v1429
    %v1654 = vpack.c.b16 %v1432, %v1430
    %v1655 = vpack.c.b16 %v1435, %v1433
    %v1656 = vpack.c.b16 %v1436, %v1434
    %v1657 = vpack.c.b16 %v1439, %v1437
    %v1658 = vpack.c.b16 %v1440, %v1438
    %v1659 = vpack.c.b16 %v1443, %v1441
    %v1660 = vpack.c.b16 %v1444, %v1442
    %v1661 = vpack.c.b16 %v1447, %v1445
    %v1662 = vpack.c.b16 %v1448, %v1446
    %v1663 = vpack.c.b16 %v1451, %v1449
    %v1664 = vpack.c.b16 %v1452, %v1450
    %v1665 = vpack.c.b16 %v1455, %v1453
    %v1666 = vpack.c.b16 %v1456, %v1454
    %v1667 = vpack.c.b16 %v1459, %v1457
    %v1668 = vpack.c.b16 %v1460, %v1458
    %v1669 = vpack.c.b16 %v1463, %v1461
    %v1670 = vpack.c.b16 %v1464, %v1462
    %v1671 = vpack.c.b16 %v1467, %v1465
    %v1672 = vpack.c.b16 %v1468, %v1466
    %v1673 = vpack.c.b16 %v1471, %v1469
    %v1674 = vpack.c.b16 %v1472, %v1470
    %v1675 = vpack.c.b16 %v1475, %v1473
    %v1676 = vpack.c.b16 %v1476, %v1474
    %v1677 = vpack.c.b16 %v1479, %v1477
    %v1678 = vpack.c.b16 %v1480, %v1478
    %v1679 = vpack.c.b16 %v1483, %v1481
    %v1680 = vpack.c.b16 %v1484, %v1482
    %v1681 = vpack.c.b16 %v1487, %v1485
    %v1682 = vpack.c.b16 %v1488, %v1486
    %v1683 = vpack.c.b16 %v1491, %v1489
    %v1684 = vpack.c.b16 %v1492, %v1490
    %v1685 = vpack.c.b16 %v1495, %v1493
    %v1686 = vpack.c.b16 %v1496, %v1494
    %v1687 = vpack.c.b16 %v1499, %v1497
    %v1688 = vpack.c.b16 %v1500, %v1498
    %v1689 = vpack.c.b16 %v1503, %v1501
    %v1690 = vpack.c.b16 %v1504, %v1502
    %v1691 = vpack.c.b16 %v1507, %v1505
    %v1692 = vpack.c.b16 %v1508, %v1506
    %v1693 = vpack.c.b16 %v1511, %v1509
    %v1694 = vpack.c.b16 %v1512, %v1510
    %v1695 = vpack.c.b16 %v1515, %v1513
    %v1696 = vpack.c.b16 %v1516, %v1514
    %v1697 = vpack.c.b16 %v1519, %v1517
    %v1698 = vpack.c.b16 %v1520, %v1518
    %v1699 = vpack.c.b16 %v1523, %v1521
    %v1700 = vpack.c.b16 %v1524, %v1522
    %v1701 = vpack.c.b16 %v1527, %v1525
    %v1702 = vpack.c.b16 %v1528, %v1526
    %v1703 = vpack.c.b16 %v1531, %v1529
    %v1704 = vpack.c.b16 %v1532, %v1530
    %v1705 = vpack.c.b16 %v1535, %v1533
    %v1706 = vpack.c.b16 %v1536, %v1534
    %v1707 = vpack.c.b16 %v1539, %v1537
    %v1708 = vpack.c.b16 %v1540, %v1538
    %v1709 = vpack.c.b16 %v1543, %v1541
    %v1710 = vpack.c.b16 %v1544, %v1542
    %v1711 = vpack.c.b16 %v1547, %v1545
    %v1712 = vpack.c.b16 %v1548, %v1546
    %v1713 = vpack.c.b16 %v1551, %v1549
    %v1714 = vpack.c.b16 %v1552, %v1550
    %v1715 = vpack.c.b16 %v1555, %v1553
    %v1716 = vpack.c.b16 %v1556, %v1554
    %v1717 = vpack.c.b16 %v1559, %v1557
    %v1718 = vpack.c.b16 %v1560, %v1558
    %v1719 = vpack.c.b16 %v1563, %v1561
    %v1720 = vpack.c.b16 %v1564, %v1562
    %v1721 = vpack.c.b16 %v1567, %v1565
    %v1722 = vpack.c.b16 %v1568, %v1566
    %v1723 = vpack.c.b16 %v1571, %v1569
    %v1724 = vpack.c.b16 %v1572, %v1570
    %v1725 = vpack.c.b16 %v1575, %v1573
    %v1726 = vpack.c.b16 %v1576, %v1574
    %v1727 = vpack.c.b16 %v1579, %v1577
    %v1728 = vpack.c.b16 %v1580, %v1578
    %v1729 = vpack.c.b16 %v1583, %v1581
    %v1730 = vpack.c.b16 %v1584, %v1582
    %v1731 = vpack.c.b16 %v1587, %v1585
    %v1732 = vpack.c.b16 %v1588, %v1586
    %v1733 = vpack.c.b16 %v1591, %v1589
    %v1734 = vpack.c.b16 %v1592, %v1590
    %v1735 = vpack.c.b16 %v1595, %v1593
    %v1736 = vpack.c.b16 %v1596, %v1594
    %v1737 = vpack.c.b16 %v1599, %v1597
    %v1738 = vpack.c.b16 %v1600, %v1598
    %v1739 = vpack.c.b16 %v1603, %v1601
    %v1740 = vpack.c.b16 %v1604, %v1602
    %v1741 = vpack.c.b16 %v1607, %v1605
    %v1742 = vpack.c.b16 %v1608, %v1606
    %v1743 = vpack.c.b16 %v1611, %v1609
    %v1744 = vpack.c.b16 %v1612, %v1610
    %v1745 = vpack.c.b16 %v1615, %v1613
    %v1746 = vpack.c.b16 %v1616, %v1614
    %v1747 = vpack.c.b16 %v1619, %v1617
    %v1748 = vpack.c.b16 %v1620, %v1618
    %1877 = vmatprep.subr.bf16.mxu0 %v1622
    %1878 = vmatpush1.bf16.msra.mxu0 %v1621
    %1879 = vmatprep.subr.bf16.mxu0 %v1624
    %1880 = vmatpush1.bf16.msra.mxu0 %v1623
    %1881 = vmatprep.subr.bf16.mxu0 %v1626
    %1882 = vmatpush1.bf16.msra.mxu0 %v1625
    %1883 = vmatprep.subr.bf16.mxu0 %v1628
    %1884 = vmatpush1.bf16.msra.mxu0 %v1627
    %1885 = vmatprep.subr.bf16.mxu0 %v1630
    %1886 = vmatpush1.bf16.msra.mxu0 %v1629
    %1887 = vmatprep.subr.bf16.mxu0 %v1632
    %1888 = vmatpush1.bf16.msra.mxu0 %v1631
    %1889 = vmatprep.subr.bf16.mxu0 %v1634
    %1890 = vmatpush1.bf16.msra.mxu0 %v1633
    %1891 = vmatprep.subr.bf16.mxu0 %v1636
    %1892 = vmatpush1.bf16.msra.mxu0 %v1635
    %1893 = vmatprep.subr.bf16.mxu0 %v1638
    %1894 = vmatpush1.bf16.msra.mxu0 %v1637
    %1895 = vmatprep.subr.bf16.mxu0 %v1640
    %1896 = vmatpush1.bf16.msra.mxu0 %v1639
    %1897 = vmatprep.subr.bf16.mxu0 %v1642
    %1898 = vmatpush1.bf16.msra.mxu0 %v1641
    %1899 = vmatprep.subr.bf16.mxu0 %v1644
    %1900 = vmatpush1.bf16.msra.mxu0 %v1643
    %1901 = vmatprep.subr.bf16.mxu0 %v1646
    %1902 = vmatpush1.bf16.msra.mxu0 %v1645
    %1903 = vmatprep.subr.bf16.mxu0 %v1648
    %1904 = vmatpush1.bf16.msra.mxu0 %v1647
    %1905 = vmatprep.subr.bf16.mxu0 %v1650
    %1906 = vmatpush1.bf16.msra.mxu0 %v1649
    %1907 = vmatprep.subr.bf16.mxu0 %v1652
    %1908 = vmatpush1.bf16.msra.mxu0 %v1651
    %1909 = vmatprep.mubr.bf16.mxu0 %v1090
    %1910 = vmatmul.mubr.bf16.gmra.mrb[0].mxu0 %v1089
    %v1911 = vpop.f32.mrb[0].mxu0
    %v1912 = vadd.f32 %v1230, %v1911
    %v1913 = vpop.f32.mrb[0].mxu0
    %v1914 = vadd.f32 %v1234, %v1913
    %v1915 = vpop.f32.mrb[0].mxu0
    %v1916 = vadd.f32 %v1230, %v1915
    %v1917 = vpop.f32.mrb[0].mxu0
    %v1918 = vadd.f32 %v1234, %v1917
    %1919 = vdwg.mxu0
    %1920 = vmatprep.subr.bf16.mxu0 %v1654
    %1921 = vmatpush1.bf16.msra.mxu0 %v1653
    %1922 = vmatprep.subr.bf16.mxu0 %v1656
    %1923 = vmatpush1.bf16.msra.mxu0 %v1655
    %1924 = vmatprep.subr.bf16.mxu0 %v1658
    %1925 = vmatpush1.bf16.msra.mxu0 %v1657
    %1926 = vmatprep.subr.bf16.mxu0 %v1660
    %1927 = vmatpush1.bf16.msra.mxu0 %v1659
    %1928 = vmatprep.subr.bf16.mxu0 %v1662
    %1929 = vmatpush1.bf16.msra.mxu0 %v1661
    %1930 = vmatprep.subr.bf16.mxu0 %v1664
    %1931 = vmatpush1.bf16.msra.mxu0 %v1663
    %1932 = vmatprep.subr.bf16.mxu0 %v1666
    %1933 = vmatpush1.bf16.msra.mxu0 %v1665
    %1934 = vmatprep.subr.bf16.mxu0 %v1668
    %1935 = vmatpush1.bf16.msra.mxu0 %v1667
    %1936 = vmatprep.subr.bf16.mxu0 %v1670
    %1937 = vmatpush1.bf16.msra.mxu0 %v1669
    %1938 = vmatprep.subr.bf16.mxu0 %v1672
    %1939 = vmatpush1.bf16.msra.mxu0 %v1671
    %1940 = vmatprep.subr.bf16.mxu0 %v1674
    %1941 = vmatpush1.bf16.msra.mxu0 %v1673
    %1942 = vmatprep.subr.bf16.mxu0 %v1676
    %1943 = vmatpush1.bf16.msra.mxu0 %v1675
    %1944 = vmatprep.subr.bf16.mxu0 %v1678
    %1945 = vmatpush1.bf16.msra.mxu0 %v1677
    %1946 = vmatprep.subr.bf16.mxu0 %v1680
    %1947 = vmatpush1.bf16.msra.mxu0 %v1679
    %1948 = vmatprep.subr.bf16.mxu0 %v1682
    %1949 = vmatpush1.bf16.msra.mxu0 %v1681
    %1950 = vmatprep.subr.bf16.mxu0 %v1684
    %1951 = vmatpush1.bf16.msra.mxu0 %v1683
    %1952 = vmatprep.mubr.bf16.mxu0 %v1092
    %1953 = vmatmul.mubr.bf16.gmra.mrb[0].mxu0 %v1091
    %v1954 = vpop.f32.mrb[0].mxu0
    %v1955 = vadd.f32 %v1912, %v1954
    %v1956 = vpop.f32.mrb[0].mxu0
    %v1957 = vadd.f32 %v1914, %v1956
    %v1958 = vpop.f32.mrb[0].mxu0
    %v1959 = vadd.f32 %v1916, %v1958
    %v1960 = vpop.f32.mrb[0].mxu0
    %v1961 = vadd.f32 %v1918, %v1960
    %1962 = vdwg.mxu0
    %1963 = vmatprep.subr.bf16.mxu0 %v1686
    %1964 = vmatpush1.bf16.msra.mxu0 %v1685
    %1965 = vmatprep.subr.bf16.mxu0 %v1688
    %1966 = vmatpush1.bf16.msra.mxu0 %v1687
    %1967 = vmatprep.subr.bf16.mxu0 %v1690
    %1968 = vmatpush1.bf16.msra.mxu0 %v1689
    %1969 = vmatprep.subr.bf16.mxu0 %v1692
    %1970 = vmatpush1.bf16.msra.mxu0 %v1691
    %1971 = vmatprep.subr.bf16.mxu0 %v1694
    %1972 = vmatpush1.bf16.msra.mxu0 %v1693
    %1973 = vmatprep.subr.bf16.mxu0 %v1696
    %1974 = vmatpush1.bf16.msra.mxu0 %v1695
    %1975 = vmatprep.subr.bf16.mxu0 %v1698
    %1976 = vmatpush1.bf16.msra.mxu0 %v1697
    %1977 = vmatprep.subr.bf16.mxu0 %v1700
    %1978 = vmatpush1.bf16.msra.mxu0 %v1699
    %1979 = vmatprep.subr.bf16.mxu0 %v1702
    %1980 = vmatpush1.bf16.msra.mxu0 %v1701
    %1981 = vmatprep.subr.bf16.mxu0 %v1704
    %1982 = vmatpush1.bf16.msra.mxu0 %v1703
    %1983 = vmatprep.subr.bf16.mxu0 %v1706
    %1984 = vmatpush1.bf16.msra.mxu0 %v1705
    %1985 = vmatprep.subr.bf16.mxu0 %v1708
    %1986 = vmatpush1.bf16.msra.mxu0 %v1707
    %1987 = vmatprep.subr.bf16.mxu0 %v1710
    %1988 = vmatpush1.bf16.msra.mxu0 %v1709
    %1989 = vmatprep.subr.bf16.mxu0 %v1712
    %1990 = vmatpush1.bf16.msra.mxu0 %v1711
    %1991 = vmatprep.subr.bf16.mxu0 %v1714
    %1992 = vmatpush1.bf16.msra.mxu0 %v1713
    %1993 = vmatprep.subr.bf16.mxu0 %v1716
    %1994 = vmatpush1.bf16.msra.mxu0 %v1715
    %1995 = vmatprep.mubr.bf16.mxu0 %v1094
    %1996 = vmatmul.mubr.bf16.gmra.mrb[0].mxu0 %v1093
    %v1997 = vpop.f32.mrb[0].mxu0
    %v1998 = vadd.f32 %v1955, %v1997
    %v1999 = vpop.f32.mrb[0].mxu0
    %v2000 = vadd.f32 %v1957, %v1999
    %v2001 = vpop.f32.mrb[0].mxu0
    %v2002 = vadd.f32 %v1959, %v2001
    %v2003 = vpop.f32.mrb[0].mxu0
    %v2004 = vadd.f32 %v1961, %v2003
    %2005 = vdwg.mxu0
    %2006 = vmatprep.subr.bf16.mxu0 %v1718
    %2007 = vmatpush1.bf16.msra.mxu0 %v1717
    %2008 = vmatprep.subr.bf16.mxu0 %v1720
    %2009 = vmatpush1.bf16.msra.mxu0 %v1719
    %2010 = vmatprep.subr.bf16.mxu0 %v1722
    %2011 = vmatpush1.bf16.msra.mxu0 %v1721
    %2012 = vmatprep.subr.bf16.mxu0 %v1724
    %2013 = vmatpush1.bf16.msra.mxu0 %v1723
    %2014 = vmatprep.subr.bf16.mxu0 %v1726
    %2015 = vmatpush1.bf16.msra.mxu0 %v1725
    %2016 = vmatprep.subr.bf16.mxu0 %v1728
    %2017 = vmatpush1.bf16.msra.mxu0 %v1727
    %2018 = vmatprep.subr.bf16.mxu0 %v1730
    %2019 = vmatpush1.bf16.msra.mxu0 %v1729
    %2020 = vmatprep.subr.bf16.mxu0 %v1732
    %2021 = vmatpush1.bf16.msra.mxu0 %v1731
    %2022 = vmatprep.subr.bf16.mxu0 %v1734
    %2023 = vmatpush1.bf16.msra.mxu0 %v1733
    %2024 = vmatprep.subr.bf16.mxu0 %v1736
    %2025 = vmatpush1.bf16.msra.mxu0 %v1735
    %2026 = vmatprep.subr.bf16.mxu0 %v1738
    %2027 = vmatpush1.bf16.msra.mxu0 %v1737
    %2028 = vmatprep.subr.bf16.mxu0 %v1740
    %2029 = vmatpush1.bf16.msra.mxu0 %v1739
    %2030 = vmatprep.subr.bf16.mxu0 %v1742
    %2031 = vmatpush1.bf16.msra.mxu0 %v1741
    %2032 = vmatprep.subr.bf16.mxu0 %v1744
    %2033 = vmatpush1.bf16.msra.mxu0 %v1743
    %2034 = vmatprep.subr.bf16.mxu0 %v1746
    %2035 = vmatpush1.bf16.msra.mxu0 %v1745
    %2036 = vmatprep.subr.bf16.mxu0 %v1748
    %2037 = vmatpush1.bf16.msra.mxu0 %v1747
    %2038 = vmatprep.mubr.bf16.mxu0 %v1096
    %2039 = vmatmul.mubr.bf16.gmra.mrb[0].mxu0 %v1095
    %v2040 = vpop.f32.mrb[0].mxu0
    %v2041 = vadd.f32 %v1998, %v2040
    %v2042 = vpop.f32.mrb[0].mxu0
    %v2043 = vadd.f32 %v2000, %v2042
    %v2044 = vpop.f32.mrb[0].mxu0
    %v2045 = vadd.f32 %v2002, %v2044
    %v2046 = vpop.f32.mrb[0].mxu0
    %v2047 = vadd.f32 %v2004, %v2046
    %2048 = vdwg.mxu0
    %v2049 = vld [vmem:[#allocation2] sm:$0xff]
    %v2050 = vld [vmem:[#allocation2 + $0x8] sm:$0xff]
    %v2051 = vld [vmem:[#allocation2 + $0x10] sm:$0xff]
    %v2052 = vld [vmem:[#allocation2 + $0x18] sm:$0xff]
    %vm2053 = vcmp.ge.u32.totalorder %v2049, 1503238554
    %vm2054 = vcmp.ge.u32.totalorder %v2050, 1503238554
    %vm2055 = vcmp.ge.u32.totalorder %v2051, 1503238554
    %vm2056 = vcmp.ge.u32.totalorder %v2052, 1503238554
    %v2057 = vsel %vm2053, %v2041, 0.0
    %v2058 = vsel %vm2054, %v2043, 0.0
    %v2059 = vsel %vm2055, %v2045, 0.0
    %v2060 = vsel %vm2056, %v2047, 0.0
    %v2061 = vmul.f32 %v2057, 1.5384616
    %v2062 = vmul.f32 %v2058, 1.5384616
    %v2063 = vmul.f32 %v2059, 1.5384616
    %v2064 = vmul.f32 %v2060, 1.5384616
    %2065 = vst [vmem:[#allocation10] sm:$0xff] %v2061
    %2066 = vst [vmem:[#allocation10 + $0x8] sm:$0xff] %v2062
    %2067 = vst [vmem:[#allocation10 + $0x10] sm:$0xff] %v2063
    %2068 = vst [vmem:[#allocation10 + $0x18] sm:$0xff] %v2064
    // Predicated region
    $region42: #{tpu_custom_call.1} parent=1 // pred_check
      _
    $region43: #{tpu_custom_call.1} parent=1 // pred_check_branch
      %2070 = sbr.rel (0) target = $region45
    $region44: #{tpu_custom_call.1} parent=1 // pred_region
      %s2072 = ssub.s32 512, 512
      %2073 = vsyncadd [#allocation4], %s2072
      %s2074 = sshll.u32 [#allocation10], 4
      %s2075 = int_to_ptr.vmem [resolvable:$true] %s2074
      %2080 = dma.vmem_to_hbm [thread:$0]  %s2075, 512, %s6, [#allocation4], 256, 256, 16
    $region45: #{tpu_custom_call.1} parent=1 // pred_fallthru
      _
    // Predicated region
    $region46: #{tpu_custom_call.1} parent=1 // pred_check
      _
    $region47: #{tpu_custom_call.1} parent=1 // pred_check_branch
      %2082 = sbr.rel (0) target = $region49
    $region48: #{tpu_custom_call.1} parent=1 // pred_region
      %2083 = dma.done [#allocation4], 512
    $region49: #{tpu_custom_call.1} parent=1 // pred_fallthru
      _
    %2084 = vsyncpa [#allocation3], 1
    %2085 = vsyncpa [#allocation6], 1
    %2086 = vsyncpa [#allocation9], 1
    %2087 = vsyncpa [#allocation4], 1

</llo_original>
